<compile_context>
chip_gen: v6e
topology: v6e:2x2x1
jax: 0.10.0
libtpu: 0.0.40
codegen_flags: <defaults>
</compile_context>

<pallas_src>
import jax
import jax.numpy as jnp
from jax import lax
from jax.experimental import pallas as pl
from jax.experimental.pallas import tpu as pltpu


_EPS = 1e-5  # torch BatchNorm1d default eps


def _make_unet1d_kernel(N, L0):
    """Builds the fused 12-layer kernel for static batch N and base length L0."""

    def kernel(x_ref, w0_ref, wr_ref, gamma_ref, beta_ref,
               s0_ref, s1_ref, s2_ref, s3_ref, s4_ref, o_ref):
        # x_ref     : (Cin, N*L0)  f32, lane-dense flattened NCW input
        # w0_ref    : (3, Cout, Cin)   bf16, layer-0 tap-major conv weights
        # wr_ref    : (33, Cout, Cout) bf16, layers 1..11 tap-major weights
        # gamma_ref : (12, Cout, 1) f32 ; beta_ref : (12, Cout, 1) f32
        # s*_ref    : bf16 0/1 even-column pool-compaction selectors (host-built)
        # o_ref     : (Cout, N*L0) f32, lane-dense output
        pool_sel = (s0_ref, s1_ref, s2_ref, s3_ref, s4_ref)
        f32, bf16 = jnp.float32, jnp.bfloat16

        # O(F) per-column "position within batch segment" vectors: one per
        # resolution (6 total), built once and reused — NOT O(F^2) selectors.
        pos_cache = {}

        def seg_pos(L):
            if L not in pos_cache:
                j = lax.broadcasted_iota(jnp.int32, (1, N * L), 1)
                pos_cache[L] = j & (L - 1)          # L is a power of two
            return pos_cache[L]

        def shift_left(v):
            # column j <- v[:, j+1]; last column becomes 0
            z = jnp.zeros((v.shape[0], 1), v.dtype)
            return jnp.concatenate([v[:, 1:], z], axis=1)

        def shift_right(v):
            # column j <- v[:, j-1]; first column becomes 0
            z = jnp.zeros((v.shape[0], 1), v.dtype)
            return jnp.concatenate([z, v[:, :-1]], axis=1)

        def conv_bn_relu(act, L, w_taps, gamma, beta):
            # Conv1d(k=3, s=1, 'same') as three bf16 tap-matmuls, f32 accum.
            # Conv bias omitted: train-mode BatchNorm cancels it exactly.
            pos = seg_pos(L)
            a = act.astype(bf16)
            a_prev = jnp.where(pos == 0, 0.0, shift_right(a))      # reads t-1
            a_next = jnp.where(pos == L - 1, 0.0, shift_left(a))   # reads t+1
            acc = (jnp.dot(w_taps[0], a_prev, preferred_element_type=f32)
                   + jnp.dot(w_taps[1], a, preferred_element_type=f32)
                   + jnp.dot(w_taps[2], a_next, preferred_element_type=f32))
            # BatchNorm1d train-mode stats (biased variance), centered two-pass
            # form in f32 to avoid E[x^2]-E[x]^2 cancellation.
            inv_n = 1.0 / acc.shape[1]
            mu = jnp.sum(acc, axis=1, keepdims=True) * inv_n
            d = acc - mu
            var = jnp.sum(d * d, axis=1, keepdims=True) * inv_n
            y = d * (lax.rsqrt(var + _EPS) * gamma) + beta
            return jnp.maximum(y, 0.0)                              # ReLU

        def maxpool2(act, sel_ref):
            # Pairwise max on the VPU, then ONE compaction matmul with a
            # host-precomputed bf16 0/1 selector (half the old pool MXU work).
            pairmax = jnp.maximum(act, shift_left(act))
            return jnp.dot(pairmax.astype(bf16), sel_ref[...],
                           preferred_element_type=f32)

        def upsample2(act, L):
            # torch .repeat along time == whole-segment tiling; implemented as
            # lane-slice copies instead of an (F x 2F) selector matmul.
            parts = []
            for n in range(N):
                seg = act[:, n * L:(n + 1) * L]
                parts.append(seg)
                parts.append(seg)
            return jnp.concatenate(parts, axis=1)

        def layer(idx, act, L):
            if idx == 0:
                taps = (w0_ref[0], w0_ref[1], w0_ref[2])
            else:
                b = 3 * (idx - 1)
                taps = (wr_ref[b], wr_ref[b + 1], wr_ref[b + 2])
            return conv_bn_relu(act, L, taps, gamma_ref[idx], beta_ref[idx])

        x = x_ref[...]
        x1 = layer(0, x, L0)
        x1 = layer(1, x1, L0)
        x2 = maxpool2(x1, pool_sel[0])
        x2 = layer(2, x2, L0 // 2)
        x3 = maxpool2(x2, pool_sel[1])
        x3 = layer(3, x3, L0 // 4)
        x4 = maxpool2(x3, pool_sel[2])
        x4 = layer(4, x4, L0 // 8)
        x5 = maxpool2(x4, pool_sel[3])
        x5 = layer(5, x5, L0 // 16)
        x6 = maxpool2(x5, pool_sel[4])
        x6 = layer(6, x6, L0 // 32)
        x5 = upsample2(x6, L0 // 32) + x5
        x5 = layer(7, x5, L0 // 16)
        x4 = upsample2(x5, L0 // 16) + x4
        x4 = layer(8, x4, L0 // 8)
        x3 = upsample2(x4, L0 // 8) + x3
        x3 = layer(9, x3, L0 // 4)
        x2 = upsample2(x3, L0 // 4) + x2
        x2 = layer(10, x2, L0 // 2)
        x1 = upsample2(x2, L0 // 2) + x1
        x1 = layer(11, x1, L0)

        o_ref[...] = x1                      # lane-dense (Cout, N*L0) store

    return kernel


# ---- parameters --------------------------------------------------------------

def init_unet1d_params(key, in_channels, out_channels, k=3):
    """Per-layer parameters with PyTorch shapes / init.

    Conv weight (Cout, Cin, k) and bias (Cout,): U(-1/sqrt(fan_in), 1/sqrt(fan_in))
    (torch Conv1d default).  BN: gamma=1, beta=0 (torch default).  The conv bias
    is generated for fidelity but is a mathematical no-op under the train-mode
    BatchNorm that follows, so the Pallas kernel never reads it."""
    layers = []
    cin = in_channels
    for _ in range(12):
        key, kw, kb = jax.random.split(key, 3)
        bound = 1.0 / ((cin * k) ** 0.5)
        w = jax.random.uniform(kw, (out_channels, cin, k), jnp.float32,
                               -bound, bound)
        b = jax.random.uniform(kb, (out_channels,), jnp.float32, -bound, bound)
        gamma = jnp.ones((out_channels,), jnp.float32)
        beta = jnp.zeros((out_channels,), jnp.float32)
        layers.append((w, b, gamma, beta))
        cin = out_channels
    return layers


def pack_unet1d_params(layers):
    """Pack torch-shaped params into the kernel operand layout.

    Conv weights become tap-major: layer 0 -> (3, Cout, Cin0), layers 1..11
    stacked as (33, Cout, Cout); both pre-cast to bf16 (MXU operand dtype).
    BN gamma/beta stay f32.  The conv bias is dropped (cancelled by BN)."""
    def taps(w):                       # (Cout, Cin, 3) -> (3, Cout, Cin)
        return jnp.transpose(w, (2, 0, 1))

    w0 = taps(layers[0][0]).astype(jnp.bfloat16)
    wr = jnp.concatenate([taps(w) for (w, _, _, _) in layers[1:]], axis=0)
    wr = wr.astype(jnp.bfloat16)
    gamma = jnp.stack([g for (_, _, g, _) in layers], axis=0)[:, :, None]
    beta = jnp.stack([bt for (_, _, _, bt) in layers], axis=0)[:, :, None]
    return {"w0": w0, "wr": wr, "gamma": gamma, "beta": beta}


def _pool_selectors(N, L0, dtype=jnp.bfloat16):
    """Host-precomputed 0/1 even-column compaction matrices for the 5 pools."""
    sels = []
    L = L0
    for _ in range(5):
        Lh = L // 2
        i = jnp.arange(N * L)[:, None]
        k = jnp.arange(N * Lh)[None, :]
        same_seg = (i // L) == (k // Lh)
        pick = (i % L) == 2 * (k % Lh)
        sels.append(jnp.where(same_seg & pick, 1.0, 0.0).astype(dtype))
        L = Lh
    return sels


# ---- public forward ----------------------------------------------------------

def unet1d_forward(x_ncw, packed):
    """x_ncw: (N, Cin, L) PyTorch NCW layout; returns (N, Cout, L)."""
    N, c_in, L = x_ncw.shape
    c_out = packed["w0"].shape[1]
    assert L >= 32 and (L & (L - 1)) == 0, "L must be a power of two >= 32"
    # TODO(synk): non-power-of-two L (still divisible by 32) needs i32 div/mod
    # for the in-kernel segment-position masks instead of `& (L-1)`.

    # Wrapper-side layout plumbing (cheap XLA ops): lane-dense (C, N*L) slabs
    # in and out, so the kernel never concatenates/slices at batch boundaries
    # and its output stores are full-lane (N*L is a multiple of 128 here).
    x2d = jnp.transpose(x_ncw, (1, 0, 2)).reshape(c_in, N * L).astype(jnp.float32)
    pool_sels = _pool_selectors(N, L)

    vmem = pl.BlockSpec(memory_space=pltpu.MemorySpace.VMEM)
    out2d = pl.pallas_call(
        _make_unet1d_kernel(N, L),
        out_shape=jax.ShapeDtypeStruct((c_out, N * L), jnp.float32),
        in_specs=[vmem] * (5 + len(pool_sels)),
        out_specs=vmem,
        # TODO(synk): for large N*L add a 'parallel' grid axis (batch or haloed
        # time tiles) with partial BN statistics so both v7x TensorCores are
        # used, and set pltpu.CompilerParams(vmem_limit_bytes=...) when sizing
        # tiles against v5e's smaller scoped-VMEM default.
    )(x2d, packed["w0"], packed["wr"], packed["gamma"], packed["beta"],
      *pool_sels)
    return jnp.transpose(out2d.reshape(c_out, N, L), (1, 0, 2))


# ---- plain-JAX reference (for the in-script correctness check) ---------------

def unet1d_reference(x_ncw, layers):
    """Straightforward XLA implementation.  Conv operands are rounded to bf16
    to mirror the kernel's MXU operand precision (accumulation stays f32), so
    the comparison isolates wiring errors from bf16 rounding drift.  The conv
    bias is included; train-mode BN cancels it, matching the kernel."""
    x = jnp.transpose(x_ncw, (0, 2, 1))              # -> (N, L, C)

    def cnr(h, w, b, gamma, beta):
        n, l, _ = h.shape
        cout, _, kk = w.shape
        hb = h.astype(jnp.bfloat16).astype(jnp.float32)
        wb = w.astype(jnp.bfloat16).astype(jnp.float32)
        hp = jnp.pad(hb, ((0, 0), (1, 1), (0, 0)))
        acc = jnp.zeros((n, l, cout), jnp.float32)
        for k in range(kk):
            acc = acc + lax.dot_general(
                hp[:, k:k + l, :], jnp.transpose(wb[:, :, k]),
                dimension_numbers=(((2,), (0,)), ((), ())))
        acc = acc + b
        mu = jnp.mean(acc, axis=(0, 1), keepdims=True)
        var = jnp.mean((acc - mu) ** 2, axis=(0, 1), keepdims=True)
        y = (acc - mu) * lax.rsqrt(var + _EPS) * gamma + beta
        return jnp.maximum(y, 0.0)

    def pool(h):
        n, l, c = h.shape
        return jnp.max(h.reshape(n, l // 2, 2, c), axis=2)

    def up(h):
        return jnp.concatenate([h, h], axis=1)       # torch .repeat along time

    x1 = cnr(x, *layers[0])
    x1 = cnr(x1, *layers[1])
    x2 = pool(x1)
    x2 = cnr(x2, *layers[2])
    x3 = pool(x2)
    x3 = cnr(x3, *layers[3])
    x4 = pool(x3)
    x4 = cnr(x4, *layers[4])
    x5 = pool(x4)
    x5 = cnr(x5, *layers[5])
    x6 = pool(x5)
    x6 = cnr(x6, *layers[6])
    x5 = up(x6) + x5
    x5 = cnr(x5, *layers[7])
    x4 = up(x5) + x4
    x4 = cnr(x4, *layers[8])
    x3 = up(x4) + x3
    x3 = cnr(x3, *layers[9])
    x2 = up(x3) + x2
    x2 = cnr(x2, *layers[10])
    x1 = up(x2) + x1
    x1 = cnr(x1, *layers[11])
    return jnp.transpose(x1, (0, 2, 1))


if __name__ == "__main__":
    key = jax.random.PRNGKey(0)
    k_x, k_p = jax.random.split(key)

    N, C_IN, C_OUT, L = 2, 4, 8, 128       # L: power of two, divisible by 32
    x = jax.random.normal(k_x, (N, C_IN, L), dtype=jnp.float32)
    layers = init_unet1d_params(k_p, C_IN, C_OUT)
    packed = pack_unet1d_params(layers)

    out = unet1d_forward(x, packed)
    out = jax.block_until_ready(out)

    assert out.shape == (N, C_OUT, L), out.shape
    assert out.dtype == jnp.float32
    assert bool(jnp.all(jnp.isfinite(out)))

    # Correctness check against the bf16-operand-aware JAX reference.  The
    # tolerance absorbs residual drift (pool/skip values the kernel rounds to
    # bf16, accumulation-order differences) amplified across 12 BN layers; a
    # wiring bug produces O(1)+ mismatches.
    ref = jax.block_until_ready(unet1d_reference(x, layers))
    err = float(jnp.max(jnp.abs(out - ref)))
    assert err < 0.25, f"max |out - ref| = {err}"

    print("KERNEL_OK")
</pallas_src>

<mosaic_0001>
module attributes {stable_mosaic.version = 11 : i64} {
  func.func @kernel(%arg0: memref<4x256xf32, #tpu.memory_space<vmem>>, %arg1: memref<3x8x4xbf16, #tpu.memory_space<vmem>>, %arg2: memref<33x8x8xbf16, #tpu.memory_space<vmem>>, %arg3: memref<12x8x1xf32, #tpu.memory_space<vmem>>, %arg4: memref<12x8x1xf32, #tpu.memory_space<vmem>>, %arg5: memref<256x128xbf16, #tpu.memory_space<vmem>>, %arg6: memref<128x64xbf16, #tpu.memory_space<vmem>>, %arg7: memref<64x32xbf16, #tpu.memory_space<vmem>>, %arg8: memref<32x16xbf16, #tpu.memory_space<vmem>>, %arg9: memref<16x8xbf16, #tpu.memory_space<vmem>>, %arg10: memref<8x256xf32, #tpu.memory_space<vmem>>) attributes {dimension_semantics = [], scalar_prefetch = 0 : i64, scratch_operands = 0 : i64, tpu.core_type = #tpu.core_type<tc>} {
    %c0 = arith.constant 0 : index
    %c0_0 = arith.constant 0 : index
    %0 = vector.load %arg0[%c0, %c0_0] : memref<4x256xf32, #tpu.memory_space<vmem>>, vector<4x256xf32>
    %c0_1 = arith.constant 0 : index
    %c0_2 = arith.constant 0 : index
    %c0_3 = arith.constant 0 : index
    %1 = vector.load %arg1[%c0_1, %c0_2, %c0_3] : memref<3x8x4xbf16, #tpu.memory_space<vmem>>, vector<1x8x4xbf16>
    %2 = vector.shape_cast %1 : vector<1x8x4xbf16> to vector<8x4xbf16>
    %c1 = arith.constant 1 : index
    %c0_4 = arith.constant 0 : index
    %c0_5 = arith.constant 0 : index
    %3 = vector.load %arg1[%c1, %c0_4, %c0_5] : memref<3x8x4xbf16, #tpu.memory_space<vmem>>, vector<1x8x4xbf16>
    %4 = vector.shape_cast %3 : vector<1x8x4xbf16> to vector<8x4xbf16>
    %c2 = arith.constant 2 : index
    %c0_6 = arith.constant 0 : index
    %c0_7 = arith.constant 0 : index
    %5 = vector.load %arg1[%c2, %c0_6, %c0_7] : memref<3x8x4xbf16, #tpu.memory_space<vmem>>, vector<1x8x4xbf16>
    %6 = vector.shape_cast %5 : vector<1x8x4xbf16> to vector<8x4xbf16>
    %c0_8 = arith.constant 0 : index
    %c0_9 = arith.constant 0 : index
    %c0_10 = arith.constant 0 : index
    %7 = vector.load %arg3[%c0_8, %c0_9, %c0_10] : memref<12x8x1xf32, #tpu.memory_space<vmem>>, vector<1x8x1xf32>
    %8 = vector.shape_cast %7 : vector<1x8x1xf32> to vector<8x1xf32>
    %c0_11 = arith.constant 0 : index
    %c0_12 = arith.constant 0 : index
    %c0_13 = arith.constant 0 : index
    %9 = vector.load %arg4[%c0_11, %c0_12, %c0_13] : memref<12x8x1xf32, #tpu.memory_space<vmem>>, vector<1x8x1xf32>
    %10 = vector.shape_cast %9 : vector<1x8x1xf32> to vector<8x1xf32>
    %11 = tpu.iota {dimensions = array<i32: 1>} : vector<1x256xi32>
    %c127_i32 = arith.constant 127 : i32
    %12 = vector.broadcast %c127_i32 : i32 to vector<1x256xi32>
    %13 = arith.andi %11, %12 : vector<1x256xi32>
    %14 = arith.truncf %0 : vector<4x256xf32> to vector<4x256xbf16>
    %c0_i32 = arith.constant 0 : i32
    %15 = vector.broadcast %c0_i32 : i32 to vector<1x256xi32>
    %16 = arith.cmpi eq, %13, %15 : vector<1x256xi32>
    %cst = arith.constant 0.000000e+00 : bf16
    %17 = vector.broadcast %cst : bf16 to vector<4x1xbf16>
    %18 = vector.extract_strided_slice %14 {offsets = [0, 0], sizes = [4, 255], strides = [1, 1]} : vector<4x256xbf16> to vector<4x255xbf16>
    %19 = tpu.concatenate %17, %18 in 1 : vector<4x1xbf16>, vector<4x255xbf16> -> vector<4x256xbf16>
    %cst_14 = arith.constant 0.000000e+00 : f32
    %20 = arith.truncf %cst_14 : f32 to bf16
    %21 = vector.shape_cast %16 : vector<1x256xi1> to vector<1x256xi1>
    %22 = vector.broadcast %21 : vector<1x256xi1> to vector<4x256xi1>
    %23 = vector.broadcast %20 : bf16 to vector<4x256xbf16>
    %24 = arith.select %22, %23, %19 : vector<4x256xi1>, vector<4x256xbf16>
    %c127_i32_15 = arith.constant 127 : i32
    %25 = vector.broadcast %c127_i32_15 : i32 to vector<1x256xi32>
    %26 = arith.cmpi eq, %13, %25 : vector<1x256xi32>
    %cst_16 = arith.constant 0.000000e+00 : bf16
    %27 = vector.broadcast %cst_16 : bf16 to vector<4x1xbf16>
    %28 = vector.extract_strided_slice %14 {offsets = [0, 1], sizes = [4, 255], strides = [1, 1]} : vector<4x256xbf16> to vector<4x255xbf16>
    %29 = tpu.concatenate %28, %27 in 1 : vector<4x255xbf16>, vector<4x1xbf16> -> vector<4x256xbf16>
    %cst_17 = arith.constant 0.000000e+00 : f32
    %30 = arith.truncf %cst_17 : f32 to bf16
    %31 = vector.shape_cast %26 : vector<1x256xi1> to vector<1x256xi1>
    %32 = vector.broadcast %31 : vector<1x256xi1> to vector<4x256xi1>
    %33 = vector.broadcast %30 : bf16 to vector<4x256xbf16>
    %34 = arith.select %32, %33, %29 : vector<4x256xi1>, vector<4x256xbf16>
    %cst_18 = arith.constant dense<0.000000e+00> : vector<8x256xf32>
    %35 = tpu.matmul %2, %24, %cst_18 {dimension_numbers = #tpu.dot_dimension_numbers<[1], [0], [0], [1], [0, 0, 1, 1], [], []>} : vector<8x4xbf16>, vector<4x256xbf16>, vector<8x256xf32> -> vector<8x256xf32>
    %cst_19 = arith.constant dense<0.000000e+00> : vector<8x256xf32>
    %36 = tpu.matmul %4, %14, %cst_19 {dimension_numbers = #tpu.dot_dimension_numbers<[1], [0], [0], [1], [0, 0, 1, 1], [], []>} : vector<8x4xbf16>, vector<4x256xbf16>, vector<8x256xf32> -> vector<8x256xf32>
    %37 = arith.addf %35, %36 : vector<8x256xf32>
    %cst_20 = arith.constant dense<0.000000e+00> : vector<8x256xf32>
    %38 = tpu.matmul %6, %34, %cst_20 {dimension_numbers = #tpu.dot_dimension_numbers<[1], [0], [0], [1], [0, 0, 1, 1], [], []>} : vector<8x4xbf16>, vector<4x256xbf16>, vector<8x256xf32> -> vector<8x256xf32>
    %39 = arith.addf %37, %38 : vector<8x256xf32>
    %cst_21 = arith.constant dense<0.000000e+00> : vector<8xf32>
    %40 = vector.multi_reduction <add>, %39, %cst_21 [1] : vector<8x256xf32> to vector<8xf32>
    %41 = vector.shape_cast %40 : vector<8xf32> to vector<8x1xf32>
    %cst_22 = arith.constant 3.906250e-03 : f32
    %42 = vector.broadcast %cst_22 : f32 to vector<8x1xf32>
    %43 = arith.mulf %41, %42 : vector<8x1xf32>
    %44 = vector.broadcast %43 : vector<8x1xf32> to vector<8x256xf32>
    %45 = arith.subf %39, %44 : vector<8x256xf32>
    %46 = arith.mulf %45, %45 : vector<8x256xf32>
    %cst_23 = arith.constant dense<0.000000e+00> : vector<8xf32>
    %47 = vector.multi_reduction <add>, %46, %cst_23 [1] : vector<8x256xf32> to vector<8xf32>
    %48 = vector.shape_cast %47 : vector<8xf32> to vector<8x1xf32>
    %cst_24 = arith.constant 3.906250e-03 : f32
    %49 = vector.broadcast %cst_24 : f32 to vector<8x1xf32>
    %50 = arith.mulf %48, %49 : vector<8x1xf32>
    %cst_25 = arith.constant 9.99999974E-6 : f32
    %51 = vector.broadcast %cst_25 : f32 to vector<8x1xf32>
    %52 = arith.addf %50, %51 : vector<8x1xf32>
    %53 = math.rsqrt %52 : vector<8x1xf32>
    %54 = arith.mulf %53, %8 : vector<8x1xf32>
    %55 = vector.broadcast %54 : vector<8x1xf32> to vector<8x256xf32>
    %56 = arith.mulf %45, %55 : vector<8x256xf32>
    %57 = vector.broadcast %10 : vector<8x1xf32> to vector<8x256xf32>
    %58 = arith.addf %56, %57 : vector<8x256xf32>
    %cst_26 = arith.constant 0.000000e+00 : f32
    %59 = vector.broadcast %cst_26 : f32 to vector<8x256xf32>
    %60 = arith.maximumf %58, %59 : vector<8x256xf32>
    %c0_27 = arith.constant 0 : index
    %c0_28 = arith.constant 0 : index
    %c0_29 = arith.constant 0 : index
    %61 = vector.load %arg2[%c0_27, %c0_28, %c0_29] : memref<33x8x8xbf16, #tpu.memory_space<vmem>>, vector<1x8x8xbf16>
    %62 = vector.shape_cast %61 : vector<1x8x8xbf16> to vector<8x8xbf16>
    %c1_30 = arith.constant 1 : index
    %c0_31 = arith.constant 0 : index
    %c0_32 = arith.constant 0 : index
    %63 = vector.load %arg2[%c1_30, %c0_31, %c0_32] : memref<33x8x8xbf16, #tpu.memory_space<vmem>>, vector<1x8x8xbf16>
    %64 = vector.shape_cast %63 : vector<1x8x8xbf16> to vector<8x8xbf16>
    %c2_33 = arith.constant 2 : index
    %c0_34 = arith.constant 0 : index
    %c0_35 = arith.constant 0 : index
    %65 = vector.load %arg2[%c2_33, %c0_34, %c0_35] : memref<33x8x8xbf16, #tpu.memory_space<vmem>>, vector<1x8x8xbf16>
    %66 = vector.shape_cast %65 : vector<1x8x8xbf16> to vector<8x8xbf16>
    %c1_36 = arith.constant 1 : index
    %c0_37 = arith.constant 0 : index
    %c0_38 = arith.constant 0 : index
    %67 = vector.load %arg3[%c1_36, %c0_37, %c0_38] : memref<12x8x1xf32, #tpu.memory_space<vmem>>, vector<1x8x1xf32>
    %68 = vector.shape_cast %67 : vector<1x8x1xf32> to vector<8x1xf32>
    %c1_39 = arith.constant 1 : index
    %c0_40 = arith.constant 0 : index
    %c0_41 = arith.constant 0 : index
    %69 = vector.load %arg4[%c1_39, %c0_40, %c0_41] : memref<12x8x1xf32, #tpu.memory_space<vmem>>, vector<1x8x1xf32>
    %70 = vector.shape_cast %69 : vector<1x8x1xf32> to vector<8x1xf32>
    %71 = arith.truncf %60 : vector<8x256xf32> to vector<8x256xbf16>
    %c0_i32_42 = arith.constant 0 : i32
    %72 = vector.broadcast %c0_i32_42 : i32 to vector<1x256xi32>
    %73 = arith.cmpi eq, %13, %72 : vector<1x256xi32>
    %cst_43 = arith.constant 0.000000e+00 : bf16
    %74 = vector.broadcast %cst_43 : bf16 to vector<8x1xbf16>
    %75 = vector.extract_strided_slice %71 {offsets = [0, 0], sizes = [8, 255], strides = [1, 1]} : vector<8x256xbf16> to vector<8x255xbf16>
    %76 = tpu.concatenate %74, %75 in 1 : vector<8x1xbf16>, vector<8x255xbf16> -> vector<8x256xbf16>
    %cst_44 = arith.constant 0.000000e+00 : f32
    %77 = arith.truncf %cst_44 : f32 to bf16
    %78 = vector.shape_cast %73 : vector<1x256xi1> to vector<1x256xi1>
    %79 = vector.broadcast %78 : vector<1x256xi1> to vector<8x256xi1>
    %80 = vector.broadcast %77 : bf16 to vector<8x256xbf16>
    %81 = arith.select %79, %80, %76 : vector<8x256xi1>, vector<8x256xbf16>
    %c127_i32_45 = arith.constant 127 : i32
    %82 = vector.broadcast %c127_i32_45 : i32 to vector<1x256xi32>
    %83 = arith.cmpi eq, %13, %82 : vector<1x256xi32>
    %cst_46 = arith.constant 0.000000e+00 : bf16
    %84 = vector.broadcast %cst_46 : bf16 to vector<8x1xbf16>
    %85 = vector.extract_strided_slice %71 {offsets = [0, 1], sizes = [8, 255], strides = [1, 1]} : vector<8x256xbf16> to vector<8x255xbf16>
    %86 = tpu.concatenate %85, %84 in 1 : vector<8x255xbf16>, vector<8x1xbf16> -> vector<8x256xbf16>
    %cst_47 = arith.constant 0.000000e+00 : f32
    %87 = arith.truncf %cst_47 : f32 to bf16
    %88 = vector.shape_cast %83 : vector<1x256xi1> to vector<1x256xi1>
    %89 = vector.broadcast %88 : vector<1x256xi1> to vector<8x256xi1>
    %90 = vector.broadcast %87 : bf16 to vector<8x256xbf16>
    %91 = arith.select %89, %90, %86 : vector<8x256xi1>, vector<8x256xbf16>
    %cst_48 = arith.constant dense<0.000000e+00> : vector<8x256xf32>
    %92 = tpu.matmul %62, %81, %cst_48 {dimension_numbers = #tpu.dot_dimension_numbers<[1], [0], [0], [1], [0, 0, 1, 1], [], []>} : vector<8x8xbf16>, vector<8x256xbf16>, vector<8x256xf32> -> vector<8x256xf32>
    %cst_49 = arith.constant dense<0.000000e+00> : vector<8x256xf32>
    %93 = tpu.matmul %64, %71, %cst_49 {dimension_numbers = #tpu.dot_dimension_numbers<[1], [0], [0], [1], [0, 0, 1, 1], [], []>} : vector<8x8xbf16>, vector<8x256xbf16>, vector<8x256xf32> -> vector<8x256xf32>
    %94 = arith.addf %92, %93 : vector<8x256xf32>
    %cst_50 = arith.constant dense<0.000000e+00> : vector<8x256xf32>
    %95 = tpu.matmul %66, %91, %cst_50 {dimension_numbers = #tpu.dot_dimension_numbers<[1], [0], [0], [1], [0, 0, 1, 1], [], []>} : vector<8x8xbf16>, vector<8x256xbf16>, vector<8x256xf32> -> vector<8x256xf32>
    %96 = arith.addf %94, %95 : vector<8x256xf32>
    %cst_51 = arith.constant dense<0.000000e+00> : vector<8xf32>
    %97 = vector.multi_reduction <add>, %96, %cst_51 [1] : vector<8x256xf32> to vector<8xf32>
    %98 = vector.shape_cast %97 : vector<8xf32> to vector<8x1xf32>
    %cst_52 = arith.constant 3.906250e-03 : f32
    %99 = vector.broadcast %cst_52 : f32 to vector<8x1xf32>
    %100 = arith.mulf %98, %99 : vector<8x1xf32>
    %101 = vector.broadcast %100 : vector<8x1xf32> to vector<8x256xf32>
    %102 = arith.subf %96, %101 : vector<8x256xf32>
    %103 = arith.mulf %102, %102 : vector<8x256xf32>
    %cst_53 = arith.constant dense<0.000000e+00> : vector<8xf32>
    %104 = vector.multi_reduction <add>, %103, %cst_53 [1] : vector<8x256xf32> to vector<8xf32>
    %105 = vector.shape_cast %104 : vector<8xf32> to vector<8x1xf32>
    %cst_54 = arith.constant 3.906250e-03 : f32
    %106 = vector.broadcast %cst_54 : f32 to vector<8x1xf32>
    %107 = arith.mulf %105, %106 : vector<8x1xf32>
    %cst_55 = arith.constant 9.99999974E-6 : f32
    %108 = vector.broadcast %cst_55 : f32 to vector<8x1xf32>
    %109 = arith.addf %107, %108 : vector<8x1xf32>
    %110 = math.rsqrt %109 : vector<8x1xf32>
    %111 = arith.mulf %110, %68 : vector<8x1xf32>
    %112 = vector.broadcast %111 : vector<8x1xf32> to vector<8x256xf32>
    %113 = arith.mulf %102, %112 : vector<8x256xf32>
    %114 = vector.broadcast %70 : vector<8x1xf32> to vector<8x256xf32>
    %115 = arith.addf %113, %114 : vector<8x256xf32>
    %cst_56 = arith.constant 0.000000e+00 : f32
    %116 = vector.broadcast %cst_56 : f32 to vector<8x256xf32>
    %117 = arith.maximumf %115, %116 : vector<8x256xf32>
    %cst_57 = arith.constant 0.000000e+00 : f32
    %118 = vector.broadcast %cst_57 : f32 to vector<8x1xf32>
    %119 = vector.extract_strided_slice %117 {offsets = [0, 1], sizes = [8, 255], strides = [1, 1]} : vector<8x256xf32> to vector<8x255xf32>
    %120 = tpu.concatenate %119, %118 in 1 : vector<8x255xf32>, vector<8x1xf32> -> vector<8x256xf32>
    %121 = arith.maximumf %117, %120 : vector<8x256xf32>
    %122 = arith.truncf %121 : vector<8x256xf32> to vector<8x256xbf16>
    %c0_58 = arith.constant 0 : index
    %c0_59 = arith.constant 0 : index
    %123 = vector.load %arg5[%c0_58, %c0_59] : memref<256x128xbf16, #tpu.memory_space<vmem>>, vector<256x128xbf16>
    %cst_60 = arith.constant dense<0.000000e+00> : vector<8x128xf32>
    %124 = tpu.matmul %122, %123, %cst_60 {dimension_numbers = #tpu.dot_dimension_numbers<[1], [0], [0], [1], [0, 0, 1, 1], [], []>} : vector<8x256xbf16>, vector<256x128xbf16>, vector<8x128xf32> -> vector<8x128xf32>
    %c3 = arith.constant 3 : index
    %c0_61 = arith.constant 0 : index
    %c0_62 = arith.constant 0 : index
    %125 = vector.load %arg2[%c3, %c0_61, %c0_62] : memref<33x8x8xbf16, #tpu.memory_space<vmem>>, vector<1x8x8xbf16>
    %126 = vector.shape_cast %125 : vector<1x8x8xbf16> to vector<8x8xbf16>
    %c4 = arith.constant 4 : index
    %c0_63 = arith.constant 0 : index
    %c0_64 = arith.constant 0 : index
    %127 = vector.load %arg2[%c4, %c0_63, %c0_64] : memref<33x8x8xbf16, #tpu.memory_space<vmem>>, vector<1x8x8xbf16>
    %128 = vector.shape_cast %127 : vector<1x8x8xbf16> to vector<8x8xbf16>
    %c5 = arith.constant 5 : index
    %c0_65 = arith.constant 0 : index
    %c0_66 = arith.constant 0 : index
    %129 = vector.load %arg2[%c5, %c0_65, %c0_66] : memref<33x8x8xbf16, #tpu.memory_space<vmem>>, vector<1x8x8xbf16>
    %130 = vector.shape_cast %129 : vector<1x8x8xbf16> to vector<8x8xbf16>
    %c2_67 = arith.constant 2 : index
    %c0_68 = arith.constant 0 : index
    %c0_69 = arith.constant 0 : index
    %131 = vector.load %arg3[%c2_67, %c0_68, %c0_69] : memref<12x8x1xf32, #tpu.memory_space<vmem>>, vector<1x8x1xf32>
    %132 = vector.shape_cast %131 : vector<1x8x1xf32> to vector<8x1xf32>
    %c2_70 = arith.constant 2 : index
    %c0_71 = arith.constant 0 : index
    %c0_72 = arith.constant 0 : index
    %133 = vector.load %arg4[%c2_70, %c0_71, %c0_72] : memref<12x8x1xf32, #tpu.memory_space<vmem>>, vector<1x8x1xf32>
    %134 = vector.shape_cast %133 : vector<1x8x1xf32> to vector<8x1xf32>
    %135 = tpu.iota {dimensions = array<i32: 1>} : vector<1x128xi32>
    %c63_i32 = arith.constant 63 : i32
    %136 = vector.broadcast %c63_i32 : i32 to vector<1x128xi32>
    %137 = arith.andi %135, %136 : vector<1x128xi32>
    %138 = arith.truncf %124 : vector<8x128xf32> to vector<8x128xbf16>
    %c0_i32_73 = arith.constant 0 : i32
    %139 = vector.broadcast %c0_i32_73 : i32 to vector<1x128xi32>
    %140 = arith.cmpi eq, %137, %139 : vector<1x128xi32>
    %cst_74 = arith.constant 0.000000e+00 : bf16
    %141 = vector.broadcast %cst_74 : bf16 to vector<8x1xbf16>
    %142 = vector.extract_strided_slice %138 {offsets = [0, 0], sizes = [8, 127], strides = [1, 1]} : vector<8x128xbf16> to vector<8x127xbf16>
    %143 = tpu.concatenate %141, %142 in 1 : vector<8x1xbf16>, vector<8x127xbf16> -> vector<8x128xbf16>
    %cst_75 = arith.constant 0.000000e+00 : f32
    %144 = arith.truncf %cst_75 : f32 to bf16
    %145 = vector.shape_cast %140 : vector<1x128xi1> to vector<1x128xi1>
    %146 = vector.broadcast %145 : vector<1x128xi1> to vector<8x128xi1>
    %147 = vector.broadcast %144 : bf16 to vector<8x128xbf16>
    %148 = arith.select %146, %147, %143 : vector<8x128xi1>, vector<8x128xbf16>
    %c63_i32_76 = arith.constant 63 : i32
    %149 = vector.broadcast %c63_i32_76 : i32 to vector<1x128xi32>
    %150 = arith.cmpi eq, %137, %149 : vector<1x128xi32>
    %cst_77 = arith.constant 0.000000e+00 : bf16
    %151 = vector.broadcast %cst_77 : bf16 to vector<8x1xbf16>
    %152 = vector.extract_strided_slice %138 {offsets = [0, 1], sizes = [8, 127], strides = [1, 1]} : vector<8x128xbf16> to vector<8x127xbf16>
    %153 = tpu.concatenate %152, %151 in 1 : vector<8x127xbf16>, vector<8x1xbf16> -> vector<8x128xbf16>
    %cst_78 = arith.constant 0.000000e+00 : f32
    %154 = arith.truncf %cst_78 : f32 to bf16
    %155 = vector.shape_cast %150 : vector<1x128xi1> to vector<1x128xi1>
    %156 = vector.broadcast %155 : vector<1x128xi1> to vector<8x128xi1>
    %157 = vector.broadcast %154 : bf16 to vector<8x128xbf16>
    %158 = arith.select %156, %157, %153 : vector<8x128xi1>, vector<8x128xbf16>
    %cst_79 = arith.constant dense<0.000000e+00> : vector<8x128xf32>
    %159 = tpu.matmul %126, %148, %cst_79 {dimension_numbers = #tpu.dot_dimension_numbers<[1], [0], [0], [1], [0, 0, 1, 1], [], []>} : vector<8x8xbf16>, vector<8x128xbf16>, vector<8x128xf32> -> vector<8x128xf32>
    %cst_80 = arith.constant dense<0.000000e+00> : vector<8x128xf32>
    %160 = tpu.matmul %128, %138, %cst_80 {dimension_numbers = #tpu.dot_dimension_numbers<[1], [0], [0], [1], [0, 0, 1, 1], [], []>} : vector<8x8xbf16>, vector<8x128xbf16>, vector<8x128xf32> -> vector<8x128xf32>
    %161 = arith.addf %159, %160 : vector<8x128xf32>
    %cst_81 = arith.constant dense<0.000000e+00> : vector<8x128xf32>
    %162 = tpu.matmul %130, %158, %cst_81 {dimension_numbers = #tpu.dot_dimension_numbers<[1], [0], [0], [1], [0, 0, 1, 1], [], []>} : vector<8x8xbf16>, vector<8x128xbf16>, vector<8x128xf32> -> vector<8x128xf32>
    %163 = arith.addf %161, %162 : vector<8x128xf32>
    %cst_82 = arith.constant dense<0.000000e+00> : vector<8xf32>
    %164 = vector.multi_reduction <add>, %163, %cst_82 [1] : vector<8x128xf32> to vector<8xf32>
    %165 = vector.shape_cast %164 : vector<8xf32> to vector<8x1xf32>
    %cst_83 = arith.constant 7.812500e-03 : f32
    %166 = vector.broadcast %cst_83 : f32 to vector<8x1xf32>
    %167 = arith.mulf %165, %166 : vector<8x1xf32>
    %168 = vector.broadcast %167 : vector<8x1xf32> to vector<8x128xf32>
    %169 = arith.subf %163, %168 : vector<8x128xf32>
    %170 = arith.mulf %169, %169 : vector<8x128xf32>
    %cst_84 = arith.constant dense<0.000000e+00> : vector<8xf32>
    %171 = vector.multi_reduction <add>, %170, %cst_84 [1] : vector<8x128xf32> to vector<8xf32>
    %172 = vector.shape_cast %171 : vector<8xf32> to vector<8x1xf32>
    %cst_85 = arith.constant 7.812500e-03 : f32
    %173 = vector.broadcast %cst_85 : f32 to vector<8x1xf32>
    %174 = arith.mulf %172, %173 : vector<8x1xf32>
    %cst_86 = arith.constant 9.99999974E-6 : f32
    %175 = vector.broadcast %cst_86 : f32 to vector<8x1xf32>
    %176 = arith.addf %174, %175 : vector<8x1xf32>
    %177 = math.rsqrt %176 : vector<8x1xf32>
    %178 = arith.mulf %177, %132 : vector<8x1xf32>
    %179 = vector.broadcast %178 : vector<8x1xf32> to vector<8x128xf32>
    %180 = arith.mulf %169, %179 : vector<8x128xf32>
    %181 = vector.broadcast %134 : vector<8x1xf32> to vector<8x128xf32>
    %182 = arith.addf %180, %181 : vector<8x128xf32>
    %cst_87 = arith.constant 0.000000e+00 : f32
    %183 = vector.broadcast %cst_87 : f32 to vector<8x128xf32>
    %184 = arith.maximumf %182, %183 : vector<8x128xf32>
    %cst_88 = arith.constant 0.000000e+00 : f32
    %185 = vector.broadcast %cst_88 : f32 to vector<8x1xf32>
    %186 = vector.extract_strided_slice %184 {offsets = [0, 1], sizes = [8, 127], strides = [1, 1]} : vector<8x128xf32> to vector<8x127xf32>
    %187 = tpu.concatenate %186, %185 in 1 : vector<8x127xf32>, vector<8x1xf32> -> vector<8x128xf32>
    %188 = arith.maximumf %184, %187 : vector<8x128xf32>
    %189 = arith.truncf %188 : vector<8x128xf32> to vector<8x128xbf16>
    %c0_89 = arith.constant 0 : index
    %c0_90 = arith.constant 0 : index
    %190 = vector.load %arg6[%c0_89, %c0_90] : memref<128x64xbf16, #tpu.memory_space<vmem>>, vector<128x64xbf16>
    %cst_91 = arith.constant dense<0.000000e+00> : vector<8x64xf32>
    %191 = tpu.matmul %189, %190, %cst_91 {dimension_numbers = #tpu.dot_dimension_numbers<[1], [0], [0], [1], [0, 0, 1, 1], [], []>} : vector<8x128xbf16>, vector<128x64xbf16>, vector<8x64xf32> -> vector<8x64xf32>
    %c6 = arith.constant 6 : index
    %c0_92 = arith.constant 0 : index
    %c0_93 = arith.constant 0 : index
    %192 = vector.load %arg2[%c6, %c0_92, %c0_93] : memref<33x8x8xbf16, #tpu.memory_space<vmem>>, vector<1x8x8xbf16>
    %193 = vector.shape_cast %192 : vector<1x8x8xbf16> to vector<8x8xbf16>
    %c7 = arith.constant 7 : index
    %c0_94 = arith.constant 0 : index
    %c0_95 = arith.constant 0 : index
    %194 = vector.load %arg2[%c7, %c0_94, %c0_95] : memref<33x8x8xbf16, #tpu.memory_space<vmem>>, vector<1x8x8xbf16>
    %195 = vector.shape_cast %194 : vector<1x8x8xbf16> to vector<8x8xbf16>
    %c8 = arith.constant 8 : index
    %c0_96 = arith.constant 0 : index
    %c0_97 = arith.constant 0 : index
    %196 = vector.load %arg2[%c8, %c0_96, %c0_97] : memref<33x8x8xbf16, #tpu.memory_space<vmem>>, vector<1x8x8xbf16>
    %197 = vector.shape_cast %196 : vector<1x8x8xbf16> to vector<8x8xbf16>
    %c3_98 = arith.constant 3 : index
    %c0_99 = arith.constant 0 : index
    %c0_100 = arith.constant 0 : index
    %198 = vector.load %arg3[%c3_98, %c0_99, %c0_100] : memref<12x8x1xf32, #tpu.memory_space<vmem>>, vector<1x8x1xf32>
    %199 = vector.shape_cast %198 : vector<1x8x1xf32> to vector<8x1xf32>
    %c3_101 = arith.constant 3 : index
    %c0_102 = arith.constant 0 : index
    %c0_103 = arith.constant 0 : index
    %200 = vector.load %arg4[%c3_101, %c0_102, %c0_103] : memref<12x8x1xf32, #tpu.memory_space<vmem>>, vector<1x8x1xf32>
    %201 = vector.shape_cast %200 : vector<1x8x1xf32> to vector<8x1xf32>
    %202 = tpu.iota {dimensions = array<i32: 1>} : vector<1x64xi32>
    %c31_i32 = arith.constant 31 : i32
    %203 = vector.broadcast %c31_i32 : i32 to vector<1x64xi32>
    %204 = arith.andi %202, %203 : vector<1x64xi32>
    %205 = arith.truncf %191 : vector<8x64xf32> to vector<8x64xbf16>
    %c0_i32_104 = arith.constant 0 : i32
    %206 = vector.broadcast %c0_i32_104 : i32 to vector<1x64xi32>
    %207 = arith.cmpi eq, %204, %206 : vector<1x64xi32>
    %cst_105 = arith.constant 0.000000e+00 : bf16
    %208 = vector.broadcast %cst_105 : bf16 to vector<8x1xbf16>
    %209 = vector.extract_strided_slice %205 {offsets = [0, 0], sizes = [8, 63], strides = [1, 1]} : vector<8x64xbf16> to vector<8x63xbf16>
    %210 = tpu.concatenate %208, %209 in 1 : vector<8x1xbf16>, vector<8x63xbf16> -> vector<8x64xbf16>
    %cst_106 = arith.constant 0.000000e+00 : f32
    %211 = arith.truncf %cst_106 : f32 to bf16
    %212 = vector.shape_cast %207 : vector<1x64xi1> to vector<1x64xi1>
    %213 = vector.broadcast %212 : vector<1x64xi1> to vector<8x64xi1>
    %214 = vector.broadcast %211 : bf16 to vector<8x64xbf16>
    %215 = arith.select %213, %214, %210 : vector<8x64xi1>, vector<8x64xbf16>
    %c31_i32_107 = arith.constant 31 : i32
    %216 = vector.broadcast %c31_i32_107 : i32 to vector<1x64xi32>
    %217 = arith.cmpi eq, %204, %216 : vector<1x64xi32>
    %cst_108 = arith.constant 0.000000e+00 : bf16
    %218 = vector.broadcast %cst_108 : bf16 to vector<8x1xbf16>
    %219 = vector.extract_strided_slice %205 {offsets = [0, 1], sizes = [8, 63], strides = [1, 1]} : vector<8x64xbf16> to vector<8x63xbf16>
    %220 = tpu.concatenate %219, %218 in 1 : vector<8x63xbf16>, vector<8x1xbf16> -> vector<8x64xbf16>
    %cst_109 = arith.constant 0.000000e+00 : f32
    %221 = arith.truncf %cst_109 : f32 to bf16
    %222 = vector.shape_cast %217 : vector<1x64xi1> to vector<1x64xi1>
    %223 = vector.broadcast %222 : vector<1x64xi1> to vector<8x64xi1>
    %224 = vector.broadcast %221 : bf16 to vector<8x64xbf16>
    %225 = arith.select %223, %224, %220 : vector<8x64xi1>, vector<8x64xbf16>
    %cst_110 = arith.constant dense<0.000000e+00> : vector<8x64xf32>
    %226 = tpu.matmul %193, %215, %cst_110 {dimension_numbers = #tpu.dot_dimension_numbers<[1], [0], [0], [1], [0, 0, 1, 1], [], []>} : vector<8x8xbf16>, vector<8x64xbf16>, vector<8x64xf32> -> vector<8x64xf32>
    %cst_111 = arith.constant dense<0.000000e+00> : vector<8x64xf32>
    %227 = tpu.matmul %195, %205, %cst_111 {dimension_numbers = #tpu.dot_dimension_numbers<[1], [0], [0], [1], [0, 0, 1, 1], [], []>} : vector<8x8xbf16>, vector<8x64xbf16>, vector<8x64xf32> -> vector<8x64xf32>
    %228 = arith.addf %226, %227 : vector<8x64xf32>
    %cst_112 = arith.constant dense<0.000000e+00> : vector<8x64xf32>
    %229 = tpu.matmul %197, %225, %cst_112 {dimension_numbers = #tpu.dot_dimension_numbers<[1], [0], [0], [1], [0, 0, 1, 1], [], []>} : vector<8x8xbf16>, vector<8x64xbf16>, vector<8x64xf32> -> vector<8x64xf32>
    %230 = arith.addf %228, %229 : vector<8x64xf32>
    %cst_113 = arith.constant dense<0.000000e+00> : vector<8xf32>
    %231 = vector.multi_reduction <add>, %230, %cst_113 [1] : vector<8x64xf32> to vector<8xf32>
    %232 = vector.shape_cast %231 : vector<8xf32> to vector<8x1xf32>
    %cst_114 = arith.constant 1.562500e-02 : f32
    %233 = vector.broadcast %cst_114 : f32 to vector<8x1xf32>
    %234 = arith.mulf %232, %233 : vector<8x1xf32>
    %235 = vector.broadcast %234 : vector<8x1xf32> to vector<8x64xf32>
    %236 = arith.subf %230, %235 : vector<8x64xf32>
    %237 = arith.mulf %236, %236 : vector<8x64xf32>
    %cst_115 = arith.constant dense<0.000000e+00> : vector<8xf32>
    %238 = vector.multi_reduction <add>, %237, %cst_115 [1] : vector<8x64xf32> to vector<8xf32>
    %239 = vector.shape_cast %238 : vector<8xf32> to vector<8x1xf32>
    %cst_116 = arith.constant 1.562500e-02 : f32
    %240 = vector.broadcast %cst_116 : f32 to vector<8x1xf32>
    %241 = arith.mulf %239, %240 : vector<8x1xf32>
    %cst_117 = arith.constant 9.99999974E-6 : f32
    %242 = vector.broadcast %cst_117 : f32 to vector<8x1xf32>
    %243 = arith.addf %241, %242 : vector<8x1xf32>
    %244 = math.rsqrt %243 : vector<8x1xf32>
    %245 = arith.mulf %244, %199 : vector<8x1xf32>
    %246 = vector.broadcast %245 : vector<8x1xf32> to vector<8x64xf32>
    %247 = arith.mulf %236, %246 : vector<8x64xf32>
    %248 = vector.broadcast %201 : vector<8x1xf32> to vector<8x64xf32>
    %249 = arith.addf %247, %248 : vector<8x64xf32>
    %cst_118 = arith.constant 0.000000e+00 : f32
    %250 = vector.broadcast %cst_118 : f32 to vector<8x64xf32>
    %251 = arith.maximumf %249, %250 : vector<8x64xf32>
    %cst_119 = arith.constant 0.000000e+00 : f32
    %252 = vector.broadcast %cst_119 : f32 to vector<8x1xf32>
    %253 = vector.extract_strided_slice %251 {offsets = [0, 1], sizes = [8, 63], strides = [1, 1]} : vector<8x64xf32> to vector<8x63xf32>
    %254 = tpu.concatenate %253, %252 in 1 : vector<8x63xf32>, vector<8x1xf32> -> vector<8x64xf32>
    %255 = arith.maximumf %251, %254 : vector<8x64xf32>
    %256 = arith.truncf %255 : vector<8x64xf32> to vector<8x64xbf16>
    %c0_120 = arith.constant 0 : index
    %c0_121 = arith.constant 0 : index
    %257 = vector.load %arg7[%c0_120, %c0_121] : memref<64x32xbf16, #tpu.memory_space<vmem>>, vector<64x32xbf16>
    %cst_122 = arith.constant dense<0.000000e+00> : vector<8x32xf32>
    %258 = tpu.matmul %256, %257, %cst_122 {dimension_numbers = #tpu.dot_dimension_numbers<[1], [0], [0], [1], [0, 0, 1, 1], [], []>} : vector<8x64xbf16>, vector<64x32xbf16>, vector<8x32xf32> -> vector<8x32xf32>
    %c9 = arith.constant 9 : index
    %c0_123 = arith.constant 0 : index
    %c0_124 = arith.constant 0 : index
    %259 = vector.load %arg2[%c9, %c0_123, %c0_124] : memref<33x8x8xbf16, #tpu.memory_space<vmem>>, vector<1x8x8xbf16>
    %260 = vector.shape_cast %259 : vector<1x8x8xbf16> to vector<8x8xbf16>
    %c10 = arith.constant 10 : index
    %c0_125 = arith.constant 0 : index
    %c0_126 = arith.constant 0 : index
    %261 = vector.load %arg2[%c10, %c0_125, %c0_126] : memref<33x8x8xbf16, #tpu.memory_space<vmem>>, vector<1x8x8xbf16>
    %262 = vector.shape_cast %261 : vector<1x8x8xbf16> to vector<8x8xbf16>
    %c11 = arith.constant 11 : index
    %c0_127 = arith.constant 0 : index
    %c0_128 = arith.constant 0 : index
    %263 = vector.load %arg2[%c11, %c0_127, %c0_128] : memref<33x8x8xbf16, #tpu.memory_space<vmem>>, vector<1x8x8xbf16>
    %264 = vector.shape_cast %263 : vector<1x8x8xbf16> to vector<8x8xbf16>
    %c4_129 = arith.constant 4 : index
    %c0_130 = arith.constant 0 : index
    %c0_131 = arith.constant 0 : index
    %265 = vector.load %arg3[%c4_129, %c0_130, %c0_131] : memref<12x8x1xf32, #tpu.memory_space<vmem>>, vector<1x8x1xf32>
    %266 = vector.shape_cast %265 : vector<1x8x1xf32> to vector<8x1xf32>
    %c4_132 = arith.constant 4 : index
    %c0_133 = arith.constant 0 : index
    %c0_134 = arith.constant 0 : index
    %267 = vector.load %arg4[%c4_132, %c0_133, %c0_134] : memref<12x8x1xf32, #tpu.memory_space<vmem>>, vector<1x8x1xf32>
    %268 = vector.shape_cast %267 : vector<1x8x1xf32> to vector<8x1xf32>
    %269 = tpu.iota {dimensions = array<i32: 1>} : vector<1x32xi32>
    %c15_i32 = arith.constant 15 : i32
    %270 = vector.broadcast %c15_i32 : i32 to vector<1x32xi32>
    %271 = arith.andi %269, %270 : vector<1x32xi32>
    %272 = arith.truncf %258 : vector<8x32xf32> to vector<8x32xbf16>
    %c0_i32_135 = arith.constant 0 : i32
    %273 = vector.broadcast %c0_i32_135 : i32 to vector<1x32xi32>
    %274 = arith.cmpi eq, %271, %273 : vector<1x32xi32>
    %cst_136 = arith.constant 0.000000e+00 : bf16
    %275 = vector.broadcast %cst_136 : bf16 to vector<8x1xbf16>
    %276 = vector.extract_strided_slice %272 {offsets = [0, 0], sizes = [8, 31], strides = [1, 1]} : vector<8x32xbf16> to vector<8x31xbf16>
    %277 = tpu.concatenate %275, %276 in 1 : vector<8x1xbf16>, vector<8x31xbf16> -> vector<8x32xbf16>
    %cst_137 = arith.constant 0.000000e+00 : f32
    %278 = arith.truncf %cst_137 : f32 to bf16
    %279 = vector.shape_cast %274 : vector<1x32xi1> to vector<1x32xi1>
    %280 = vector.broadcast %279 : vector<1x32xi1> to vector<8x32xi1>
    %281 = vector.broadcast %278 : bf16 to vector<8x32xbf16>
    %282 = arith.select %280, %281, %277 : vector<8x32xi1>, vector<8x32xbf16>
    %c15_i32_138 = arith.constant 15 : i32
    %283 = vector.broadcast %c15_i32_138 : i32 to vector<1x32xi32>
    %284 = arith.cmpi eq, %271, %283 : vector<1x32xi32>
    %cst_139 = arith.constant 0.000000e+00 : bf16
    %285 = vector.broadcast %cst_139 : bf16 to vector<8x1xbf16>
    %286 = vector.extract_strided_slice %272 {offsets = [0, 1], sizes = [8, 31], strides = [1, 1]} : vector<8x32xbf16> to vector<8x31xbf16>
    %287 = tpu.concatenate %286, %285 in 1 : vector<8x31xbf16>, vector<8x1xbf16> -> vector<8x32xbf16>
    %cst_140 = arith.constant 0.000000e+00 : f32
    %288 = arith.truncf %cst_140 : f32 to bf16
    %289 = vector.shape_cast %284 : vector<1x32xi1> to vector<1x32xi1>
    %290 = vector.broadcast %289 : vector<1x32xi1> to vector<8x32xi1>
    %291 = vector.broadcast %288 : bf16 to vector<8x32xbf16>
    %292 = arith.select %290, %291, %287 : vector<8x32xi1>, vector<8x32xbf16>
    %cst_141 = arith.constant dense<0.000000e+00> : vector<8x32xf32>
    %293 = tpu.matmul %260, %282, %cst_141 {dimension_numbers = #tpu.dot_dimension_numbers<[1], [0], [0], [1], [0, 0, 1, 1], [], []>} : vector<8x8xbf16>, vector<8x32xbf16>, vector<8x32xf32> -> vector<8x32xf32>
    %cst_142 = arith.constant dense<0.000000e+00> : vector<8x32xf32>
    %294 = tpu.matmul %262, %272, %cst_142 {dimension_numbers = #tpu.dot_dimension_numbers<[1], [0], [0], [1], [0, 0, 1, 1], [], []>} : vector<8x8xbf16>, vector<8x32xbf16>, vector<8x32xf32> -> vector<8x32xf32>
    %295 = arith.addf %293, %294 : vector<8x32xf32>
    %cst_143 = arith.constant dense<0.000000e+00> : vector<8x32xf32>
    %296 = tpu.matmul %264, %292, %cst_143 {dimension_numbers = #tpu.dot_dimension_numbers<[1], [0], [0], [1], [0, 0, 1, 1], [], []>} : vector<8x8xbf16>, vector<8x32xbf16>, vector<8x32xf32> -> vector<8x32xf32>
    %297 = arith.addf %295, %296 : vector<8x32xf32>
    %cst_144 = arith.constant dense<0.000000e+00> : vector<8xf32>
    %298 = vector.multi_reduction <add>, %297, %cst_144 [1] : vector<8x32xf32> to vector<8xf32>
    %299 = vector.shape_cast %298 : vector<8xf32> to vector<8x1xf32>
    %cst_145 = arith.constant 3.125000e-02 : f32
    %300 = vector.broadcast %cst_145 : f32 to vector<8x1xf32>
    %301 = arith.mulf %299, %300 : vector<8x1xf32>
    %302 = vector.broadcast %301 : vector<8x1xf32> to vector<8x32xf32>
    %303 = arith.subf %297, %302 : vector<8x32xf32>
    %304 = arith.mulf %303, %303 : vector<8x32xf32>
    %cst_146 = arith.constant dense<0.000000e+00> : vector<8xf32>
    %305 = vector.multi_reduction <add>, %304, %cst_146 [1] : vector<8x32xf32> to vector<8xf32>
    %306 = vector.shape_cast %305 : vector<8xf32> to vector<8x1xf32>
    %cst_147 = arith.constant 3.125000e-02 : f32
    %307 = vector.broadcast %cst_147 : f32 to vector<8x1xf32>
    %308 = arith.mulf %306, %307 : vector<8x1xf32>
    %cst_148 = arith.constant 9.99999974E-6 : f32
    %309 = vector.broadcast %cst_148 : f32 to vector<8x1xf32>
    %310 = arith.addf %308, %309 : vector<8x1xf32>
    %311 = math.rsqrt %310 : vector<8x1xf32>
    %312 = arith.mulf %311, %266 : vector<8x1xf32>
    %313 = vector.broadcast %312 : vector<8x1xf32> to vector<8x32xf32>
    %314 = arith.mulf %303, %313 : vector<8x32xf32>
    %315 = vector.broadcast %268 : vector<8x1xf32> to vector<8x32xf32>
    %316 = arith.addf %314, %315 : vector<8x32xf32>
    %cst_149 = arith.constant 0.000000e+00 : f32
    %317 = vector.broadcast %cst_149 : f32 to vector<8x32xf32>
    %318 = arith.maximumf %316, %317 : vector<8x32xf32>
    %cst_150 = arith.constant 0.000000e+00 : f32
    %319 = vector.broadcast %cst_150 : f32 to vector<8x1xf32>
    %320 = vector.extract_strided_slice %318 {offsets = [0, 1], sizes = [8, 31], strides = [1, 1]} : vector<8x32xf32> to vector<8x31xf32>
    %321 = tpu.concatenate %320, %319 in 1 : vector<8x31xf32>, vector<8x1xf32> -> vector<8x32xf32>
    %322 = arith.maximumf %318, %321 : vector<8x32xf32>
    %323 = arith.truncf %322 : vector<8x32xf32> to vector<8x32xbf16>
    %c0_151 = arith.constant 0 : index
    %c0_152 = arith.constant 0 : index
    %324 = vector.load %arg8[%c0_151, %c0_152] : memref<32x16xbf16, #tpu.memory_space<vmem>>, vector<32x16xbf16>
    %cst_153 = arith.constant dense<0.000000e+00> : vector<8x16xf32>
    %325 = tpu.matmul %323, %324, %cst_153 {dimension_numbers = #tpu.dot_dimension_numbers<[1], [0], [0], [1], [0, 0, 1, 1], [], []>} : vector<8x32xbf16>, vector<32x16xbf16>, vector<8x16xf32> -> vector<8x16xf32>
    %c12 = arith.constant 12 : index
    %c0_154 = arith.constant 0 : index
    %c0_155 = arith.constant 0 : index
    %326 = vector.load %arg2[%c12, %c0_154, %c0_155] : memref<33x8x8xbf16, #tpu.memory_space<vmem>>, vector<1x8x8xbf16>
    %327 = vector.shape_cast %326 : vector<1x8x8xbf16> to vector<8x8xbf16>
    %c13 = arith.constant 13 : index
    %c0_156 = arith.constant 0 : index
    %c0_157 = arith.constant 0 : index
    %328 = vector.load %arg2[%c13, %c0_156, %c0_157] : memref<33x8x8xbf16, #tpu.memory_space<vmem>>, vector<1x8x8xbf16>
    %329 = vector.shape_cast %328 : vector<1x8x8xbf16> to vector<8x8xbf16>
    %c14 = arith.constant 14 : index
    %c0_158 = arith.constant 0 : index
    %c0_159 = arith.constant 0 : index
    %330 = vector.load %arg2[%c14, %c0_158, %c0_159] : memref<33x8x8xbf16, #tpu.memory_space<vmem>>, vector<1x8x8xbf16>
    %331 = vector.shape_cast %330 : vector<1x8x8xbf16> to vector<8x8xbf16>
    %c5_160 = arith.constant 5 : index
    %c0_161 = arith.constant 0 : index
    %c0_162 = arith.constant 0 : index
    %332 = vector.load %arg3[%c5_160, %c0_161, %c0_162] : memref<12x8x1xf32, #tpu.memory_space<vmem>>, vector<1x8x1xf32>
    %333 = vector.shape_cast %332 : vector<1x8x1xf32> to vector<8x1xf32>
    %c5_163 = arith.constant 5 : index
    %c0_164 = arith.constant 0 : index
    %c0_165 = arith.constant 0 : index
    %334 = vector.load %arg4[%c5_163, %c0_164, %c0_165] : memref<12x8x1xf32, #tpu.memory_space<vmem>>, vector<1x8x1xf32>
    %335 = vector.shape_cast %334 : vector<1x8x1xf32> to vector<8x1xf32>
    %336 = tpu.iota {dimensions = array<i32: 1>} : vector<1x16xi32>
    %c7_i32 = arith.constant 7 : i32
    %337 = vector.broadcast %c7_i32 : i32 to vector<1x16xi32>
    %338 = arith.andi %336, %337 : vector<1x16xi32>
    %339 = arith.truncf %325 : vector<8x16xf32> to vector<8x16xbf16>
    %c0_i32_166 = arith.constant 0 : i32
    %340 = vector.broadcast %c0_i32_166 : i32 to vector<1x16xi32>
    %341 = arith.cmpi eq, %338, %340 : vector<1x16xi32>
    %cst_167 = arith.constant 0.000000e+00 : bf16
    %342 = vector.broadcast %cst_167 : bf16 to vector<8x1xbf16>
    %343 = vector.extract_strided_slice %339 {offsets = [0, 0], sizes = [8, 15], strides = [1, 1]} : vector<8x16xbf16> to vector<8x15xbf16>
    %344 = tpu.concatenate %342, %343 in 1 : vector<8x1xbf16>, vector<8x15xbf16> -> vector<8x16xbf16>
    %cst_168 = arith.constant 0.000000e+00 : f32
    %345 = arith.truncf %cst_168 : f32 to bf16
    %346 = vector.shape_cast %341 : vector<1x16xi1> to vector<1x16xi1>
    %347 = vector.broadcast %346 : vector<1x16xi1> to vector<8x16xi1>
    %348 = vector.broadcast %345 : bf16 to vector<8x16xbf16>
    %349 = arith.select %347, %348, %344 : vector<8x16xi1>, vector<8x16xbf16>
    %c7_i32_169 = arith.constant 7 : i32
    %350 = vector.broadcast %c7_i32_169 : i32 to vector<1x16xi32>
    %351 = arith.cmpi eq, %338, %350 : vector<1x16xi32>
    %cst_170 = arith.constant 0.000000e+00 : bf16
    %352 = vector.broadcast %cst_170 : bf16 to vector<8x1xbf16>
    %353 = vector.extract_strided_slice %339 {offsets = [0, 1], sizes = [8, 15], strides = [1, 1]} : vector<8x16xbf16> to vector<8x15xbf16>
    %354 = tpu.concatenate %353, %352 in 1 : vector<8x15xbf16>, vector<8x1xbf16> -> vector<8x16xbf16>
    %cst_171 = arith.constant 0.000000e+00 : f32
    %355 = arith.truncf %cst_171 : f32 to bf16
    %356 = vector.shape_cast %351 : vector<1x16xi1> to vector<1x16xi1>
    %357 = vector.broadcast %356 : vector<1x16xi1> to vector<8x16xi1>
    %358 = vector.broadcast %355 : bf16 to vector<8x16xbf16>
    %359 = arith.select %357, %358, %354 : vector<8x16xi1>, vector<8x16xbf16>
    %cst_172 = arith.constant dense<0.000000e+00> : vector<8x16xf32>
    %360 = tpu.matmul %327, %349, %cst_172 {dimension_numbers = #tpu.dot_dimension_numbers<[1], [0], [0], [1], [0, 0, 1, 1], [], []>} : vector<8x8xbf16>, vector<8x16xbf16>, vector<8x16xf32> -> vector<8x16xf32>
    %cst_173 = arith.constant dense<0.000000e+00> : vector<8x16xf32>
    %361 = tpu.matmul %329, %339, %cst_173 {dimension_numbers = #tpu.dot_dimension_numbers<[1], [0], [0], [1], [0, 0, 1, 1], [], []>} : vector<8x8xbf16>, vector<8x16xbf16>, vector<8x16xf32> -> vector<8x16xf32>
    %362 = arith.addf %360, %361 : vector<8x16xf32>
    %cst_174 = arith.constant dense<0.000000e+00> : vector<8x16xf32>
    %363 = tpu.matmul %331, %359, %cst_174 {dimension_numbers = #tpu.dot_dimension_numbers<[1], [0], [0], [1], [0, 0, 1, 1], [], []>} : vector<8x8xbf16>, vector<8x16xbf16>, vector<8x16xf32> -> vector<8x16xf32>
    %364 = arith.addf %362, %363 : vector<8x16xf32>
    %cst_175 = arith.constant dense<0.000000e+00> : vector<8xf32>
    %365 = vector.multi_reduction <add>, %364, %cst_175 [1] : vector<8x16xf32> to vector<8xf32>
    %366 = vector.shape_cast %365 : vector<8xf32> to vector<8x1xf32>
    %cst_176 = arith.constant 6.250000e-02 : f32
    %367 = vector.broadcast %cst_176 : f32 to vector<8x1xf32>
    %368 = arith.mulf %366, %367 : vector<8x1xf32>
    %369 = vector.broadcast %368 : vector<8x1xf32> to vector<8x16xf32>
    %370 = arith.subf %364, %369 : vector<8x16xf32>
    %371 = arith.mulf %370, %370 : vector<8x16xf32>
    %cst_177 = arith.constant dense<0.000000e+00> : vector<8xf32>
    %372 = vector.multi_reduction <add>, %371, %cst_177 [1] : vector<8x16xf32> to vector<8xf32>
    %373 = vector.shape_cast %372 : vector<8xf32> to vector<8x1xf32>
    %cst_178 = arith.constant 6.250000e-02 : f32
    %374 = vector.broadcast %cst_178 : f32 to vector<8x1xf32>
    %375 = arith.mulf %373, %374 : vector<8x1xf32>
    %cst_179 = arith.constant 9.99999974E-6 : f32
    %376 = vector.broadcast %cst_179 : f32 to vector<8x1xf32>
    %377 = arith.addf %375, %376 : vector<8x1xf32>
    %378 = math.rsqrt %377 : vector<8x1xf32>
    %379 = arith.mulf %378, %333 : vector<8x1xf32>
    %380 = vector.broadcast %379 : vector<8x1xf32> to vector<8x16xf32>
    %381 = arith.mulf %370, %380 : vector<8x16xf32>
    %382 = vector.broadcast %335 : vector<8x1xf32> to vector<8x16xf32>
    %383 = arith.addf %381, %382 : vector<8x16xf32>
    %cst_180 = arith.constant 0.000000e+00 : f32
    %384 = vector.broadcast %cst_180 : f32 to vector<8x16xf32>
    %385 = arith.maximumf %383, %384 : vector<8x16xf32>
    %cst_181 = arith.constant 0.000000e+00 : f32
    %386 = vector.broadcast %cst_181 : f32 to vector<8x1xf32>
    %387 = vector.extract_strided_slice %385 {offsets = [0, 1], sizes = [8, 15], strides = [1, 1]} : vector<8x16xf32> to vector<8x15xf32>
    %388 = tpu.concatenate %387, %386 in 1 : vector<8x15xf32>, vector<8x1xf32> -> vector<8x16xf32>
    %389 = arith.maximumf %385, %388 : vector<8x16xf32>
    %390 = arith.truncf %389 : vector<8x16xf32> to vector<8x16xbf16>
    %c0_182 = arith.constant 0 : index
    %c0_183 = arith.constant 0 : index
    %391 = vector.load %arg9[%c0_182, %c0_183] : memref<16x8xbf16, #tpu.memory_space<vmem>>, vector<16x8xbf16>
    %cst_184 = arith.constant dense<0.000000e+00> : vector<8x8xf32>
    %392 = tpu.matmul %390, %391, %cst_184 {dimension_numbers = #tpu.dot_dimension_numbers<[1], [0], [0], [1], [0, 0, 1, 1], [], []>} : vector<8x16xbf16>, vector<16x8xbf16>, vector<8x8xf32> -> vector<8x8xf32>
    %c15 = arith.constant 15 : index
    %c0_185 = arith.constant 0 : index
    %c0_186 = arith.constant 0 : index
    %393 = vector.load %arg2[%c15, %c0_185, %c0_186] : memref<33x8x8xbf16, #tpu.memory_space<vmem>>, vector<1x8x8xbf16>
    %394 = vector.shape_cast %393 : vector<1x8x8xbf16> to vector<8x8xbf16>
    %c16 = arith.constant 16 : index
    %c0_187 = arith.constant 0 : index
    %c0_188 = arith.constant 0 : index
    %395 = vector.load %arg2[%c16, %c0_187, %c0_188] : memref<33x8x8xbf16, #tpu.memory_space<vmem>>, vector<1x8x8xbf16>
    %396 = vector.shape_cast %395 : vector<1x8x8xbf16> to vector<8x8xbf16>
    %c17 = arith.constant 17 : index
    %c0_189 = arith.constant 0 : index
    %c0_190 = arith.constant 0 : index
    %397 = vector.load %arg2[%c17, %c0_189, %c0_190] : memref<33x8x8xbf16, #tpu.memory_space<vmem>>, vector<1x8x8xbf16>
    %398 = vector.shape_cast %397 : vector<1x8x8xbf16> to vector<8x8xbf16>
    %c6_191 = arith.constant 6 : index
    %c0_192 = arith.constant 0 : index
    %c0_193 = arith.constant 0 : index
    %399 = vector.load %arg3[%c6_191, %c0_192, %c0_193] : memref<12x8x1xf32, #tpu.memory_space<vmem>>, vector<1x8x1xf32>
    %400 = vector.shape_cast %399 : vector<1x8x1xf32> to vector<8x1xf32>
    %c6_194 = arith.constant 6 : index
    %c0_195 = arith.constant 0 : index
    %c0_196 = arith.constant 0 : index
    %401 = vector.load %arg4[%c6_194, %c0_195, %c0_196] : memref<12x8x1xf32, #tpu.memory_space<vmem>>, vector<1x8x1xf32>
    %402 = vector.shape_cast %401 : vector<1x8x1xf32> to vector<8x1xf32>
    %403 = tpu.iota {dimensions = array<i32: 1>} : vector<1x8xi32>
    %c3_i32 = arith.constant 3 : i32
    %404 = vector.broadcast %c3_i32 : i32 to vector<1x8xi32>
    %405 = arith.andi %403, %404 : vector<1x8xi32>
    %406 = arith.truncf %392 : vector<8x8xf32> to vector<8x8xbf16>
    %c0_i32_197 = arith.constant 0 : i32
    %407 = vector.broadcast %c0_i32_197 : i32 to vector<1x8xi32>
    %408 = arith.cmpi eq, %405, %407 : vector<1x8xi32>
    %cst_198 = arith.constant 0.000000e+00 : bf16
    %409 = vector.broadcast %cst_198 : bf16 to vector<8x1xbf16>
    %410 = vector.extract_strided_slice %406 {offsets = [0, 0], sizes = [8, 7], strides = [1, 1]} : vector<8x8xbf16> to vector<8x7xbf16>
    %411 = tpu.concatenate %409, %410 in 1 : vector<8x1xbf16>, vector<8x7xbf16> -> vector<8x8xbf16>
    %cst_199 = arith.constant 0.000000e+00 : f32
    %412 = arith.truncf %cst_199 : f32 to bf16
    %413 = vector.shape_cast %408 : vector<1x8xi1> to vector<1x8xi1>
    %414 = vector.broadcast %413 : vector<1x8xi1> to vector<8x8xi1>
    %415 = vector.broadcast %412 : bf16 to vector<8x8xbf16>
    %416 = arith.select %414, %415, %411 : vector<8x8xi1>, vector<8x8xbf16>
    %c3_i32_200 = arith.constant 3 : i32
    %417 = vector.broadcast %c3_i32_200 : i32 to vector<1x8xi32>
    %418 = arith.cmpi eq, %405, %417 : vector<1x8xi32>
    %cst_201 = arith.constant 0.000000e+00 : bf16
    %419 = vector.broadcast %cst_201 : bf16 to vector<8x1xbf16>
    %420 = vector.extract_strided_slice %406 {offsets = [0, 1], sizes = [8, 7], strides = [1, 1]} : vector<8x8xbf16> to vector<8x7xbf16>
    %421 = tpu.concatenate %420, %419 in 1 : vector<8x7xbf16>, vector<8x1xbf16> -> vector<8x8xbf16>
    %cst_202 = arith.constant 0.000000e+00 : f32
    %422 = arith.truncf %cst_202 : f32 to bf16
    %423 = vector.shape_cast %418 : vector<1x8xi1> to vector<1x8xi1>
    %424 = vector.broadcast %423 : vector<1x8xi1> to vector<8x8xi1>
    %425 = vector.broadcast %422 : bf16 to vector<8x8xbf16>
    %426 = arith.select %424, %425, %421 : vector<8x8xi1>, vector<8x8xbf16>
    %cst_203 = arith.constant dense<0.000000e+00> : vector<8x8xf32>
    %427 = tpu.matmul %394, %416, %cst_203 {dimension_numbers = #tpu.dot_dimension_numbers<[1], [0], [0], [1], [0, 0, 1, 1], [], []>} : vector<8x8xbf16>, vector<8x8xbf16>, vector<8x8xf32> -> vector<8x8xf32>
    %cst_204 = arith.constant dense<0.000000e+00> : vector<8x8xf32>
    %428 = tpu.matmul %396, %406, %cst_204 {dimension_numbers = #tpu.dot_dimension_numbers<[1], [0], [0], [1], [0, 0, 1, 1], [], []>} : vector<8x8xbf16>, vector<8x8xbf16>, vector<8x8xf32> -> vector<8x8xf32>
    %429 = arith.addf %427, %428 : vector<8x8xf32>
    %cst_205 = arith.constant dense<0.000000e+00> : vector<8x8xf32>
    %430 = tpu.matmul %398, %426, %cst_205 {dimension_numbers = #tpu.dot_dimension_numbers<[1], [0], [0], [1], [0, 0, 1, 1], [], []>} : vector<8x8xbf16>, vector<8x8xbf16>, vector<8x8xf32> -> vector<8x8xf32>
    %431 = arith.addf %429, %430 : vector<8x8xf32>
    %cst_206 = arith.constant dense<0.000000e+00> : vector<8xf32>
    %432 = vector.multi_reduction <add>, %431, %cst_206 [1] : vector<8x8xf32> to vector<8xf32>
    %433 = vector.shape_cast %432 : vector<8xf32> to vector<8x1xf32>
    %cst_207 = arith.constant 1.250000e-01 : f32
    %434 = vector.broadcast %cst_207 : f32 to vector<8x1xf32>
    %435 = arith.mulf %433, %434 : vector<8x1xf32>
    %436 = vector.broadcast %435 : vector<8x1xf32> to vector<8x8xf32>
    %437 = arith.subf %431, %436 : vector<8x8xf32>
    %438 = arith.mulf %437, %437 : vector<8x8xf32>
    %cst_208 = arith.constant dense<0.000000e+00> : vector<8xf32>
    %439 = vector.multi_reduction <add>, %438, %cst_208 [1] : vector<8x8xf32> to vector<8xf32>
    %440 = vector.shape_cast %439 : vector<8xf32> to vector<8x1xf32>
    %cst_209 = arith.constant 1.250000e-01 : f32
    %441 = vector.broadcast %cst_209 : f32 to vector<8x1xf32>
    %442 = arith.mulf %440, %441 : vector<8x1xf32>
    %cst_210 = arith.constant 9.99999974E-6 : f32
    %443 = vector.broadcast %cst_210 : f32 to vector<8x1xf32>
    %444 = arith.addf %442, %443 : vector<8x1xf32>
    %445 = math.rsqrt %444 : vector<8x1xf32>
    %446 = arith.mulf %445, %400 : vector<8x1xf32>
    %447 = vector.broadcast %446 : vector<8x1xf32> to vector<8x8xf32>
    %448 = arith.mulf %437, %447 : vector<8x8xf32>
    %449 = vector.broadcast %402 : vector<8x1xf32> to vector<8x8xf32>
    %450 = arith.addf %448, %449 : vector<8x8xf32>
    %cst_211 = arith.constant 0.000000e+00 : f32
    %451 = vector.broadcast %cst_211 : f32 to vector<8x8xf32>
    %452 = arith.maximumf %450, %451 : vector<8x8xf32>
    %453 = vector.extract_strided_slice %452 {offsets = [0, 0], sizes = [8, 4], strides = [1, 1]} : vector<8x8xf32> to vector<8x4xf32>
    %454 = vector.extract_strided_slice %452 {offsets = [0, 4], sizes = [8, 4], strides = [1, 1]} : vector<8x8xf32> to vector<8x4xf32>
    %455 = tpu.concatenate %453, %453, %454, %454 in 1 : vector<8x4xf32>, vector<8x4xf32>, vector<8x4xf32>, vector<8x4xf32> -> vector<8x16xf32>
    %456 = arith.addf %455, %385 : vector<8x16xf32>
    %c18 = arith.constant 18 : index
    %c0_212 = arith.constant 0 : index
    %c0_213 = arith.constant 0 : index
    %457 = vector.load %arg2[%c18, %c0_212, %c0_213] : memref<33x8x8xbf16, #tpu.memory_space<vmem>>, vector<1x8x8xbf16>
    %458 = vector.shape_cast %457 : vector<1x8x8xbf16> to vector<8x8xbf16>
    %c19 = arith.constant 19 : index
    %c0_214 = arith.constant 0 : index
    %c0_215 = arith.constant 0 : index
    %459 = vector.load %arg2[%c19, %c0_214, %c0_215] : memref<33x8x8xbf16, #tpu.memory_space<vmem>>, vector<1x8x8xbf16>
    %460 = vector.shape_cast %459 : vector<1x8x8xbf16> to vector<8x8xbf16>
    %c20 = arith.constant 20 : index
    %c0_216 = arith.constant 0 : index
    %c0_217 = arith.constant 0 : index
    %461 = vector.load %arg2[%c20, %c0_216, %c0_217] : memref<33x8x8xbf16, #tpu.memory_space<vmem>>, vector<1x8x8xbf16>
    %462 = vector.shape_cast %461 : vector<1x8x8xbf16> to vector<8x8xbf16>
    %c7_218 = arith.constant 7 : index
    %c0_219 = arith.constant 0 : index
    %c0_220 = arith.constant 0 : index
    %463 = vector.load %arg3[%c7_218, %c0_219, %c0_220] : memref<12x8x1xf32, #tpu.memory_space<vmem>>, vector<1x8x1xf32>
    %464 = vector.shape_cast %463 : vector<1x8x1xf32> to vector<8x1xf32>
    %c7_221 = arith.constant 7 : index
    %c0_222 = arith.constant 0 : index
    %c0_223 = arith.constant 0 : index
    %465 = vector.load %arg4[%c7_221, %c0_222, %c0_223] : memref<12x8x1xf32, #tpu.memory_space<vmem>>, vector<1x8x1xf32>
    %466 = vector.shape_cast %465 : vector<1x8x1xf32> to vector<8x1xf32>
    %467 = arith.truncf %456 : vector<8x16xf32> to vector<8x16xbf16>
    %c0_i32_224 = arith.constant 0 : i32
    %468 = vector.broadcast %c0_i32_224 : i32 to vector<1x16xi32>
    %469 = arith.cmpi eq, %338, %468 : vector<1x16xi32>
    %cst_225 = arith.constant 0.000000e+00 : bf16
    %470 = vector.broadcast %cst_225 : bf16 to vector<8x1xbf16>
    %471 = vector.extract_strided_slice %467 {offsets = [0, 0], sizes = [8, 15], strides = [1, 1]} : vector<8x16xbf16> to vector<8x15xbf16>
    %472 = tpu.concatenate %470, %471 in 1 : vector<8x1xbf16>, vector<8x15xbf16> -> vector<8x16xbf16>
    %cst_226 = arith.constant 0.000000e+00 : f32
    %473 = arith.truncf %cst_226 : f32 to bf16
    %474 = vector.shape_cast %469 : vector<1x16xi1> to vector<1x16xi1>
    %475 = vector.broadcast %474 : vector<1x16xi1> to vector<8x16xi1>
    %476 = vector.broadcast %473 : bf16 to vector<8x16xbf16>
    %477 = arith.select %475, %476, %472 : vector<8x16xi1>, vector<8x16xbf16>
    %c7_i32_227 = arith.constant 7 : i32
    %478 = vector.broadcast %c7_i32_227 : i32 to vector<1x16xi32>
    %479 = arith.cmpi eq, %338, %478 : vector<1x16xi32>
    %cst_228 = arith.constant 0.000000e+00 : bf16
    %480 = vector.broadcast %cst_228 : bf16 to vector<8x1xbf16>
    %481 = vector.extract_strided_slice %467 {offsets = [0, 1], sizes = [8, 15], strides = [1, 1]} : vector<8x16xbf16> to vector<8x15xbf16>
    %482 = tpu.concatenate %481, %480 in 1 : vector<8x15xbf16>, vector<8x1xbf16> -> vector<8x16xbf16>
    %cst_229 = arith.constant 0.000000e+00 : f32
    %483 = arith.truncf %cst_229 : f32 to bf16
    %484 = vector.shape_cast %479 : vector<1x16xi1> to vector<1x16xi1>
    %485 = vector.broadcast %484 : vector<1x16xi1> to vector<8x16xi1>
    %486 = vector.broadcast %483 : bf16 to vector<8x16xbf16>
    %487 = arith.select %485, %486, %482 : vector<8x16xi1>, vector<8x16xbf16>
    %cst_230 = arith.constant dense<0.000000e+00> : vector<8x16xf32>
    %488 = tpu.matmul %458, %477, %cst_230 {dimension_numbers = #tpu.dot_dimension_numbers<[1], [0], [0], [1], [0, 0, 1, 1], [], []>} : vector<8x8xbf16>, vector<8x16xbf16>, vector<8x16xf32> -> vector<8x16xf32>
    %cst_231 = arith.constant dense<0.000000e+00> : vector<8x16xf32>
    %489 = tpu.matmul %460, %467, %cst_231 {dimension_numbers = #tpu.dot_dimension_numbers<[1], [0], [0], [1], [0, 0, 1, 1], [], []>} : vector<8x8xbf16>, vector<8x16xbf16>, vector<8x16xf32> -> vector<8x16xf32>
    %490 = arith.addf %488, %489 : vector<8x16xf32>
    %cst_232 = arith.constant dense<0.000000e+00> : vector<8x16xf32>
    %491 = tpu.matmul %462, %487, %cst_232 {dimension_numbers = #tpu.dot_dimension_numbers<[1], [0], [0], [1], [0, 0, 1, 1], [], []>} : vector<8x8xbf16>, vector<8x16xbf16>, vector<8x16xf32> -> vector<8x16xf32>
    %492 = arith.addf %490, %491 : vector<8x16xf32>
    %cst_233 = arith.constant dense<0.000000e+00> : vector<8xf32>
    %493 = vector.multi_reduction <add>, %492, %cst_233 [1] : vector<8x16xf32> to vector<8xf32>
    %494 = vector.shape_cast %493 : vector<8xf32> to vector<8x1xf32>
    %cst_234 = arith.constant 6.250000e-02 : f32
    %495 = vector.broadcast %cst_234 : f32 to vector<8x1xf32>
    %496 = arith.mulf %494, %495 : vector<8x1xf32>
    %497 = vector.broadcast %496 : vector<8x1xf32> to vector<8x16xf32>
    %498 = arith.subf %492, %497 : vector<8x16xf32>
    %499 = arith.mulf %498, %498 : vector<8x16xf32>
    %cst_235 = arith.constant dense<0.000000e+00> : vector<8xf32>
    %500 = vector.multi_reduction <add>, %499, %cst_235 [1] : vector<8x16xf32> to vector<8xf32>
    %501 = vector.shape_cast %500 : vector<8xf32> to vector<8x1xf32>
    %cst_236 = arith.constant 6.250000e-02 : f32
    %502 = vector.broadcast %cst_236 : f32 to vector<8x1xf32>
    %503 = arith.mulf %501, %502 : vector<8x1xf32>
    %cst_237 = arith.constant 9.99999974E-6 : f32
    %504 = vector.broadcast %cst_237 : f32 to vector<8x1xf32>
    %505 = arith.addf %503, %504 : vector<8x1xf32>
    %506 = math.rsqrt %505 : vector<8x1xf32>
    %507 = arith.mulf %506, %464 : vector<8x1xf32>
    %508 = vector.broadcast %507 : vector<8x1xf32> to vector<8x16xf32>
    %509 = arith.mulf %498, %508 : vector<8x16xf32>
    %510 = vector.broadcast %466 : vector<8x1xf32> to vector<8x16xf32>
    %511 = arith.addf %509, %510 : vector<8x16xf32>
    %cst_238 = arith.constant 0.000000e+00 : f32
    %512 = vector.broadcast %cst_238 : f32 to vector<8x16xf32>
    %513 = arith.maximumf %511, %512 : vector<8x16xf32>
    %514 = vector.extract_strided_slice %513 {offsets = [0, 0], sizes = [8, 8], strides = [1, 1]} : vector<8x16xf32> to vector<8x8xf32>
    %515 = vector.extract_strided_slice %513 {offsets = [0, 8], sizes = [8, 8], strides = [1, 1]} : vector<8x16xf32> to vector<8x8xf32>
    %516 = tpu.concatenate %514, %514, %515, %515 in 1 : vector<8x8xf32>, vector<8x8xf32>, vector<8x8xf32>, vector<8x8xf32> -> vector<8x32xf32>
    %517 = arith.addf %516, %318 : vector<8x32xf32>
    %c21 = arith.constant 21 : index
    %c0_239 = arith.constant 0 : index
    %c0_240 = arith.constant 0 : index
    %518 = vector.load %arg2[%c21, %c0_239, %c0_240] : memref<33x8x8xbf16, #tpu.memory_space<vmem>>, vector<1x8x8xbf16>
    %519 = vector.shape_cast %518 : vector<1x8x8xbf16> to vector<8x8xbf16>
    %c22 = arith.constant 22 : index
    %c0_241 = arith.constant 0 : index
    %c0_242 = arith.constant 0 : index
    %520 = vector.load %arg2[%c22, %c0_241, %c0_242] : memref<33x8x8xbf16, #tpu.memory_space<vmem>>, vector<1x8x8xbf16>
    %521 = vector.shape_cast %520 : vector<1x8x8xbf16> to vector<8x8xbf16>
    %c23 = arith.constant 23 : index
    %c0_243 = arith.constant 0 : index
    %c0_244 = arith.constant 0 : index
    %522 = vector.load %arg2[%c23, %c0_243, %c0_244] : memref<33x8x8xbf16, #tpu.memory_space<vmem>>, vector<1x8x8xbf16>
    %523 = vector.shape_cast %522 : vector<1x8x8xbf16> to vector<8x8xbf16>
    %c8_245 = arith.constant 8 : index
    %c0_246 = arith.constant 0 : index
    %c0_247 = arith.constant 0 : index
    %524 = vector.load %arg3[%c8_245, %c0_246, %c0_247] : memref<12x8x1xf32, #tpu.memory_space<vmem>>, vector<1x8x1xf32>
    %525 = vector.shape_cast %524 : vector<1x8x1xf32> to vector<8x1xf32>
    %c8_248 = arith.constant 8 : index
    %c0_249 = arith.constant 0 : index
    %c0_250 = arith.constant 0 : index
    %526 = vector.load %arg4[%c8_248, %c0_249, %c0_250] : memref<12x8x1xf32, #tpu.memory_space<vmem>>, vector<1x8x1xf32>
    %527 = vector.shape_cast %526 : vector<1x8x1xf32> to vector<8x1xf32>
    %528 = arith.truncf %517 : vector<8x32xf32> to vector<8x32xbf16>
    %c0_i32_251 = arith.constant 0 : i32
    %529 = vector.broadcast %c0_i32_251 : i32 to vector<1x32xi32>
    %530 = arith.cmpi eq, %271, %529 : vector<1x32xi32>
    %cst_252 = arith.constant 0.000000e+00 : bf16
    %531 = vector.broadcast %cst_252 : bf16 to vector<8x1xbf16>
    %532 = vector.extract_strided_slice %528 {offsets = [0, 0], sizes = [8, 31], strides = [1, 1]} : vector<8x32xbf16> to vector<8x31xbf16>
    %533 = tpu.concatenate %531, %532 in 1 : vector<8x1xbf16>, vector<8x31xbf16> -> vector<8x32xbf16>
    %cst_253 = arith.constant 0.000000e+00 : f32
    %534 = arith.truncf %cst_253 : f32 to bf16
    %535 = vector.shape_cast %530 : vector<1x32xi1> to vector<1x32xi1>
    %536 = vector.broadcast %535 : vector<1x32xi1> to vector<8x32xi1>
    %537 = vector.broadcast %534 : bf16 to vector<8x32xbf16>
    %538 = arith.select %536, %537, %533 : vector<8x32xi1>, vector<8x32xbf16>
    %c15_i32_254 = arith.constant 15 : i32
    %539 = vector.broadcast %c15_i32_254 : i32 to vector<1x32xi32>
    %540 = arith.cmpi eq, %271, %539 : vector<1x32xi32>
    %cst_255 = arith.constant 0.000000e+00 : bf16
    %541 = vector.broadcast %cst_255 : bf16 to vector<8x1xbf16>
    %542 = vector.extract_strided_slice %528 {offsets = [0, 1], sizes = [8, 31], strides = [1, 1]} : vector<8x32xbf16> to vector<8x31xbf16>
    %543 = tpu.concatenate %542, %541 in 1 : vector<8x31xbf16>, vector<8x1xbf16> -> vector<8x32xbf16>
    %cst_256 = arith.constant 0.000000e+00 : f32
    %544 = arith.truncf %cst_256 : f32 to bf16
    %545 = vector.shape_cast %540 : vector<1x32xi1> to vector<1x32xi1>
    %546 = vector.broadcast %545 : vector<1x32xi1> to vector<8x32xi1>
    %547 = vector.broadcast %544 : bf16 to vector<8x32xbf16>
    %548 = arith.select %546, %547, %543 : vector<8x32xi1>, vector<8x32xbf16>
    %cst_257 = arith.constant dense<0.000000e+00> : vector<8x32xf32>
    %549 = tpu.matmul %519, %538, %cst_257 {dimension_numbers = #tpu.dot_dimension_numbers<[1], [0], [0], [1], [0, 0, 1, 1], [], []>} : vector<8x8xbf16>, vector<8x32xbf16>, vector<8x32xf32> -> vector<8x32xf32>
    %cst_258 = arith.constant dense<0.000000e+00> : vector<8x32xf32>
    %550 = tpu.matmul %521, %528, %cst_258 {dimension_numbers = #tpu.dot_dimension_numbers<[1], [0], [0], [1], [0, 0, 1, 1], [], []>} : vector<8x8xbf16>, vector<8x32xbf16>, vector<8x32xf32> -> vector<8x32xf32>
    %551 = arith.addf %549, %550 : vector<8x32xf32>
    %cst_259 = arith.constant dense<0.000000e+00> : vector<8x32xf32>
    %552 = tpu.matmul %523, %548, %cst_259 {dimension_numbers = #tpu.dot_dimension_numbers<[1], [0], [0], [1], [0, 0, 1, 1], [], []>} : vector<8x8xbf16>, vector<8x32xbf16>, vector<8x32xf32> -> vector<8x32xf32>
    %553 = arith.addf %551, %552 : vector<8x32xf32>
    %cst_260 = arith.constant dense<0.000000e+00> : vector<8xf32>
    %554 = vector.multi_reduction <add>, %553, %cst_260 [1] : vector<8x32xf32> to vector<8xf32>
    %555 = vector.shape_cast %554 : vector<8xf32> to vector<8x1xf32>
    %cst_261 = arith.constant 3.125000e-02 : f32
    %556 = vector.broadcast %cst_261 : f32 to vector<8x1xf32>
    %557 = arith.mulf %555, %556 : vector<8x1xf32>
    %558 = vector.broadcast %557 : vector<8x1xf32> to vector<8x32xf32>
    %559 = arith.subf %553, %558 : vector<8x32xf32>
    %560 = arith.mulf %559, %559 : vector<8x32xf32>
    %cst_262 = arith.constant dense<0.000000e+00> : vector<8xf32>
    %561 = vector.multi_reduction <add>, %560, %cst_262 [1] : vector<8x32xf32> to vector<8xf32>
    %562 = vector.shape_cast %561 : vector<8xf32> to vector<8x1xf32>
    %cst_263 = arith.constant 3.125000e-02 : f32
    %563 = vector.broadcast %cst_263 : f32 to vector<8x1xf32>
    %564 = arith.mulf %562, %563 : vector<8x1xf32>
    %cst_264 = arith.constant 9.99999974E-6 : f32
    %565 = vector.broadcast %cst_264 : f32 to vector<8x1xf32>
    %566 = arith.addf %564, %565 : vector<8x1xf32>
    %567 = math.rsqrt %566 : vector<8x1xf32>
    %568 = arith.mulf %567, %525 : vector<8x1xf32>
    %569 = vector.broadcast %568 : vector<8x1xf32> to vector<8x32xf32>
    %570 = arith.mulf %559, %569 : vector<8x32xf32>
    %571 = vector.broadcast %527 : vector<8x1xf32> to vector<8x32xf32>
    %572 = arith.addf %570, %571 : vector<8x32xf32>
    %cst_265 = arith.constant 0.000000e+00 : f32
    %573 = vector.broadcast %cst_265 : f32 to vector<8x32xf32>
    %574 = arith.maximumf %572, %573 : vector<8x32xf32>
    %575 = vector.extract_strided_slice %574 {offsets = [0, 0], sizes = [8, 16], strides = [1, 1]} : vector<8x32xf32> to vector<8x16xf32>
    %576 = vector.extract_strided_slice %574 {offsets = [0, 16], sizes = [8, 16], strides = [1, 1]} : vector<8x32xf32> to vector<8x16xf32>
    %577 = tpu.concatenate %575, %575, %576, %576 in 1 : vector<8x16xf32>, vector<8x16xf32>, vector<8x16xf32>, vector<8x16xf32> -> vector<8x64xf32>
    %578 = arith.addf %577, %251 : vector<8x64xf32>
    %c24 = arith.constant 24 : index
    %c0_266 = arith.constant 0 : index
    %c0_267 = arith.constant 0 : index
    %579 = vector.load %arg2[%c24, %c0_266, %c0_267] : memref<33x8x8xbf16, #tpu.memory_space<vmem>>, vector<1x8x8xbf16>
    %580 = vector.shape_cast %579 : vector<1x8x8xbf16> to vector<8x8xbf16>
    %c25 = arith.constant 25 : index
    %c0_268 = arith.constant 0 : index
    %c0_269 = arith.constant 0 : index
    %581 = vector.load %arg2[%c25, %c0_268, %c0_269] : memref<33x8x8xbf16, #tpu.memory_space<vmem>>, vector<1x8x8xbf16>
    %582 = vector.shape_cast %581 : vector<1x8x8xbf16> to vector<8x8xbf16>
    %c26 = arith.constant 26 : index
    %c0_270 = arith.constant 0 : index
    %c0_271 = arith.constant 0 : index
    %583 = vector.load %arg2[%c26, %c0_270, %c0_271] : memref<33x8x8xbf16, #tpu.memory_space<vmem>>, vector<1x8x8xbf16>
    %584 = vector.shape_cast %583 : vector<1x8x8xbf16> to vector<8x8xbf16>
    %c9_272 = arith.constant 9 : index
    %c0_273 = arith.constant 0 : index
    %c0_274 = arith.constant 0 : index
    %585 = vector.load %arg3[%c9_272, %c0_273, %c0_274] : memref<12x8x1xf32, #tpu.memory_space<vmem>>, vector<1x8x1xf32>
    %586 = vector.shape_cast %585 : vector<1x8x1xf32> to vector<8x1xf32>
    %c9_275 = arith.constant 9 : index
    %c0_276 = arith.constant 0 : index
    %c0_277 = arith.constant 0 : index
    %587 = vector.load %arg4[%c9_275, %c0_276, %c0_277] : memref<12x8x1xf32, #tpu.memory_space<vmem>>, vector<1x8x1xf32>
    %588 = vector.shape_cast %587 : vector<1x8x1xf32> to vector<8x1xf32>
    %589 = arith.truncf %578 : vector<8x64xf32> to vector<8x64xbf16>
    %c0_i32_278 = arith.constant 0 : i32
    %590 = vector.broadcast %c0_i32_278 : i32 to vector<1x64xi32>
    %591 = arith.cmpi eq, %204, %590 : vector<1x64xi32>
    %cst_279 = arith.constant 0.000000e+00 : bf16
    %592 = vector.broadcast %cst_279 : bf16 to vector<8x1xbf16>
    %593 = vector.extract_strided_slice %589 {offsets = [0, 0], sizes = [8, 63], strides = [1, 1]} : vector<8x64xbf16> to vector<8x63xbf16>
    %594 = tpu.concatenate %592, %593 in 1 : vector<8x1xbf16>, vector<8x63xbf16> -> vector<8x64xbf16>
    %cst_280 = arith.constant 0.000000e+00 : f32
    %595 = arith.truncf %cst_280 : f32 to bf16
    %596 = vector.shape_cast %591 : vector<1x64xi1> to vector<1x64xi1>
    %597 = vector.broadcast %596 : vector<1x64xi1> to vector<8x64xi1>
    %598 = vector.broadcast %595 : bf16 to vector<8x64xbf16>
    %599 = arith.select %597, %598, %594 : vector<8x64xi1>, vector<8x64xbf16>
    %c31_i32_281 = arith.constant 31 : i32
    %600 = vector.broadcast %c31_i32_281 : i32 to vector<1x64xi32>
    %601 = arith.cmpi eq, %204, %600 : vector<1x64xi32>
    %cst_282 = arith.constant 0.000000e+00 : bf16
    %602 = vector.broadcast %cst_282 : bf16 to vector<8x1xbf16>
    %603 = vector.extract_strided_slice %589 {offsets = [0, 1], sizes = [8, 63], strides = [1, 1]} : vector<8x64xbf16> to vector<8x63xbf16>
    %604 = tpu.concatenate %603, %602 in 1 : vector<8x63xbf16>, vector<8x1xbf16> -> vector<8x64xbf16>
    %cst_283 = arith.constant 0.000000e+00 : f32
    %605 = arith.truncf %cst_283 : f32 to bf16
    %606 = vector.shape_cast %601 : vector<1x64xi1> to vector<1x64xi1>
    %607 = vector.broadcast %606 : vector<1x64xi1> to vector<8x64xi1>
    %608 = vector.broadcast %605 : bf16 to vector<8x64xbf16>
    %609 = arith.select %607, %608, %604 : vector<8x64xi1>, vector<8x64xbf16>
    %cst_284 = arith.constant dense<0.000000e+00> : vector<8x64xf32>
    %610 = tpu.matmul %580, %599, %cst_284 {dimension_numbers = #tpu.dot_dimension_numbers<[1], [0], [0], [1], [0, 0, 1, 1], [], []>} : vector<8x8xbf16>, vector<8x64xbf16>, vector<8x64xf32> -> vector<8x64xf32>
    %cst_285 = arith.constant dense<0.000000e+00> : vector<8x64xf32>
    %611 = tpu.matmul %582, %589, %cst_285 {dimension_numbers = #tpu.dot_dimension_numbers<[1], [0], [0], [1], [0, 0, 1, 1], [], []>} : vector<8x8xbf16>, vector<8x64xbf16>, vector<8x64xf32> -> vector<8x64xf32>
    %612 = arith.addf %610, %611 : vector<8x64xf32>
    %cst_286 = arith.constant dense<0.000000e+00> : vector<8x64xf32>
    %613 = tpu.matmul %584, %609, %cst_286 {dimension_numbers = #tpu.dot_dimension_numbers<[1], [0], [0], [1], [0, 0, 1, 1], [], []>} : vector<8x8xbf16>, vector<8x64xbf16>, vector<8x64xf32> -> vector<8x64xf32>
    %614 = arith.addf %612, %613 : vector<8x64xf32>
    %cst_287 = arith.constant dense<0.000000e+00> : vector<8xf32>
    %615 = vector.multi_reduction <add>, %614, %cst_287 [1] : vector<8x64xf32> to vector<8xf32>
    %616 = vector.shape_cast %615 : vector<8xf32> to vector<8x1xf32>
    %cst_288 = arith.constant 1.562500e-02 : f32
    %617 = vector.broadcast %cst_288 : f32 to vector<8x1xf32>
    %618 = arith.mulf %616, %617 : vector<8x1xf32>
    %619 = vector.broadcast %618 : vector<8x1xf32> to vector<8x64xf32>
    %620 = arith.subf %614, %619 : vector<8x64xf32>
    %621 = arith.mulf %620, %620 : vector<8x64xf32>
    %cst_289 = arith.constant dense<0.000000e+00> : vector<8xf32>
    %622 = vector.multi_reduction <add>, %621, %cst_289 [1] : vector<8x64xf32> to vector<8xf32>
    %623 = vector.shape_cast %622 : vector<8xf32> to vector<8x1xf32>
    %cst_290 = arith.constant 1.562500e-02 : f32
    %624 = vector.broadcast %cst_290 : f32 to vector<8x1xf32>
    %625 = arith.mulf %623, %624 : vector<8x1xf32>
    %cst_291 = arith.constant 9.99999974E-6 : f32
    %626 = vector.broadcast %cst_291 : f32 to vector<8x1xf32>
    %627 = arith.addf %625, %626 : vector<8x1xf32>
    %628 = math.rsqrt %627 : vector<8x1xf32>
    %629 = arith.mulf %628, %586 : vector<8x1xf32>
    %630 = vector.broadcast %629 : vector<8x1xf32> to vector<8x64xf32>
    %631 = arith.mulf %620, %630 : vector<8x64xf32>
    %632 = vector.broadcast %588 : vector<8x1xf32> to vector<8x64xf32>
    %633 = arith.addf %631, %632 : vector<8x64xf32>
    %cst_292 = arith.constant 0.000000e+00 : f32
    %634 = vector.broadcast %cst_292 : f32 to vector<8x64xf32>
    %635 = arith.maximumf %633, %634 : vector<8x64xf32>
    %636 = vector.extract_strided_slice %635 {offsets = [0, 0], sizes = [8, 32], strides = [1, 1]} : vector<8x64xf32> to vector<8x32xf32>
    %637 = vector.extract_strided_slice %635 {offsets = [0, 32], sizes = [8, 32], strides = [1, 1]} : vector<8x64xf32> to vector<8x32xf32>
    %638 = tpu.concatenate %636, %636, %637, %637 in 1 : vector<8x32xf32>, vector<8x32xf32>, vector<8x32xf32>, vector<8x32xf32> -> vector<8x128xf32>
    %639 = arith.addf %638, %184 : vector<8x128xf32>
    %c27 = arith.constant 27 : index
    %c0_293 = arith.constant 0 : index
    %c0_294 = arith.constant 0 : index
    %640 = vector.load %arg2[%c27, %c0_293, %c0_294] : memref<33x8x8xbf16, #tpu.memory_space<vmem>>, vector<1x8x8xbf16>
    %641 = vector.shape_cast %640 : vector<1x8x8xbf16> to vector<8x8xbf16>
    %c28 = arith.constant 28 : index
    %c0_295 = arith.constant 0 : index
    %c0_296 = arith.constant 0 : index
    %642 = vector.load %arg2[%c28, %c0_295, %c0_296] : memref<33x8x8xbf16, #tpu.memory_space<vmem>>, vector<1x8x8xbf16>
    %643 = vector.shape_cast %642 : vector<1x8x8xbf16> to vector<8x8xbf16>
    %c29 = arith.constant 29 : index
    %c0_297 = arith.constant 0 : index
    %c0_298 = arith.constant 0 : index
    %644 = vector.load %arg2[%c29, %c0_297, %c0_298] : memref<33x8x8xbf16, #tpu.memory_space<vmem>>, vector<1x8x8xbf16>
    %645 = vector.shape_cast %644 : vector<1x8x8xbf16> to vector<8x8xbf16>
    %c10_299 = arith.constant 10 : index
    %c0_300 = arith.constant 0 : index
    %c0_301 = arith.constant 0 : index
    %646 = vector.load %arg3[%c10_299, %c0_300, %c0_301] : memref<12x8x1xf32, #tpu.memory_space<vmem>>, vector<1x8x1xf32>
    %647 = vector.shape_cast %646 : vector<1x8x1xf32> to vector<8x1xf32>
    %c10_302 = arith.constant 10 : index
    %c0_303 = arith.constant 0 : index
    %c0_304 = arith.constant 0 : index
    %648 = vector.load %arg4[%c10_302, %c0_303, %c0_304] : memref<12x8x1xf32, #tpu.memory_space<vmem>>, vector<1x8x1xf32>
    %649 = vector.shape_cast %648 : vector<1x8x1xf32> to vector<8x1xf32>
    %650 = arith.truncf %639 : vector<8x128xf32> to vector<8x128xbf16>
    %c0_i32_305 = arith.constant 0 : i32
    %651 = vector.broadcast %c0_i32_305 : i32 to vector<1x128xi32>
    %652 = arith.cmpi eq, %137, %651 : vector<1x128xi32>
    %cst_306 = arith.constant 0.000000e+00 : bf16
    %653 = vector.broadcast %cst_306 : bf16 to vector<8x1xbf16>
    %654 = vector.extract_strided_slice %650 {offsets = [0, 0], sizes = [8, 127], strides = [1, 1]} : vector<8x128xbf16> to vector<8x127xbf16>
    %655 = tpu.concatenate %653, %654 in 1 : vector<8x1xbf16>, vector<8x127xbf16> -> vector<8x128xbf16>
    %cst_307 = arith.constant 0.000000e+00 : f32
    %656 = arith.truncf %cst_307 : f32 to bf16
    %657 = vector.shape_cast %652 : vector<1x128xi1> to vector<1x128xi1>
    %658 = vector.broadcast %657 : vector<1x128xi1> to vector<8x128xi1>
    %659 = vector.broadcast %656 : bf16 to vector<8x128xbf16>
    %660 = arith.select %658, %659, %655 : vector<8x128xi1>, vector<8x128xbf16>
    %c63_i32_308 = arith.constant 63 : i32
    %661 = vector.broadcast %c63_i32_308 : i32 to vector<1x128xi32>
    %662 = arith.cmpi eq, %137, %661 : vector<1x128xi32>
    %cst_309 = arith.constant 0.000000e+00 : bf16
    %663 = vector.broadcast %cst_309 : bf16 to vector<8x1xbf16>
    %664 = vector.extract_strided_slice %650 {offsets = [0, 1], sizes = [8, 127], strides = [1, 1]} : vector<8x128xbf16> to vector<8x127xbf16>
    %665 = tpu.concatenate %664, %663 in 1 : vector<8x127xbf16>, vector<8x1xbf16> -> vector<8x128xbf16>
    %cst_310 = arith.constant 0.000000e+00 : f32
    %666 = arith.truncf %cst_310 : f32 to bf16
    %667 = vector.shape_cast %662 : vector<1x128xi1> to vector<1x128xi1>
    %668 = vector.broadcast %667 : vector<1x128xi1> to vector<8x128xi1>
    %669 = vector.broadcast %666 : bf16 to vector<8x128xbf16>
    %670 = arith.select %668, %669, %665 : vector<8x128xi1>, vector<8x128xbf16>
    %cst_311 = arith.constant dense<0.000000e+00> : vector<8x128xf32>
    %671 = tpu.matmul %641, %660, %cst_311 {dimension_numbers = #tpu.dot_dimension_numbers<[1], [0], [0], [1], [0, 0, 1, 1], [], []>} : vector<8x8xbf16>, vector<8x128xbf16>, vector<8x128xf32> -> vector<8x128xf32>
    %cst_312 = arith.constant dense<0.000000e+00> : vector<8x128xf32>
    %672 = tpu.matmul %643, %650, %cst_312 {dimension_numbers = #tpu.dot_dimension_numbers<[1], [0], [0], [1], [0, 0, 1, 1], [], []>} : vector<8x8xbf16>, vector<8x128xbf16>, vector<8x128xf32> -> vector<8x128xf32>
    %673 = arith.addf %671, %672 : vector<8x128xf32>
    %cst_313 = arith.constant dense<0.000000e+00> : vector<8x128xf32>
    %674 = tpu.matmul %645, %670, %cst_313 {dimension_numbers = #tpu.dot_dimension_numbers<[1], [0], [0], [1], [0, 0, 1, 1], [], []>} : vector<8x8xbf16>, vector<8x128xbf16>, vector<8x128xf32> -> vector<8x128xf32>
    %675 = arith.addf %673, %674 : vector<8x128xf32>
    %cst_314 = arith.constant dense<0.000000e+00> : vector<8xf32>
    %676 = vector.multi_reduction <add>, %675, %cst_314 [1] : vector<8x128xf32> to vector<8xf32>
    %677 = vector.shape_cast %676 : vector<8xf32> to vector<8x1xf32>
    %cst_315 = arith.constant 7.812500e-03 : f32
    %678 = vector.broadcast %cst_315 : f32 to vector<8x1xf32>
    %679 = arith.mulf %677, %678 : vector<8x1xf32>
    %680 = vector.broadcast %679 : vector<8x1xf32> to vector<8x128xf32>
    %681 = arith.subf %675, %680 : vector<8x128xf32>
    %682 = arith.mulf %681, %681 : vector<8x128xf32>
    %cst_316 = arith.constant dense<0.000000e+00> : vector<8xf32>
    %683 = vector.multi_reduction <add>, %682, %cst_316 [1] : vector<8x128xf32> to vector<8xf32>
    %684 = vector.shape_cast %683 : vector<8xf32> to vector<8x1xf32>
    %cst_317 = arith.constant 7.812500e-03 : f32
    %685 = vector.broadcast %cst_317 : f32 to vector<8x1xf32>
    %686 = arith.mulf %684, %685 : vector<8x1xf32>
    %cst_318 = arith.constant 9.99999974E-6 : f32
    %687 = vector.broadcast %cst_318 : f32 to vector<8x1xf32>
    %688 = arith.addf %686, %687 : vector<8x1xf32>
    %689 = math.rsqrt %688 : vector<8x1xf32>
    %690 = arith.mulf %689, %647 : vector<8x1xf32>
    %691 = vector.broadcast %690 : vector<8x1xf32> to vector<8x128xf32>
    %692 = arith.mulf %681, %691 : vector<8x128xf32>
    %693 = vector.broadcast %649 : vector<8x1xf32> to vector<8x128xf32>
    %694 = arith.addf %692, %693 : vector<8x128xf32>
    %cst_319 = arith.constant 0.000000e+00 : f32
    %695 = vector.broadcast %cst_319 : f32 to vector<8x128xf32>
    %696 = arith.maximumf %694, %695 : vector<8x128xf32>
    %697 = vector.extract_strided_slice %696 {offsets = [0, 0], sizes = [8, 64], strides = [1, 1]} : vector<8x128xf32> to vector<8x64xf32>
    %698 = vector.extract_strided_slice %696 {offsets = [0, 64], sizes = [8, 64], strides = [1, 1]} : vector<8x128xf32> to vector<8x64xf32>
    %699 = tpu.concatenate %697, %697, %698, %698 in 1 : vector<8x64xf32>, vector<8x64xf32>, vector<8x64xf32>, vector<8x64xf32> -> vector<8x256xf32>
    %700 = arith.addf %699, %117 : vector<8x256xf32>
    %c30 = arith.constant 30 : index
    %c0_320 = arith.constant 0 : index
    %c0_321 = arith.constant 0 : index
    %701 = vector.load %arg2[%c30, %c0_320, %c0_321] : memref<33x8x8xbf16, #tpu.memory_space<vmem>>, vector<1x8x8xbf16>
    %702 = vector.shape_cast %701 : vector<1x8x8xbf16> to vector<8x8xbf16>
    %c31 = arith.constant 31 : index
    %c0_322 = arith.constant 0 : index
    %c0_323 = arith.constant 0 : index
    %703 = vector.load %arg2[%c31, %c0_322, %c0_323] : memref<33x8x8xbf16, #tpu.memory_space<vmem>>, vector<1x8x8xbf16>
    %704 = vector.shape_cast %703 : vector<1x8x8xbf16> to vector<8x8xbf16>
    %c32 = arith.constant 32 : index
    %c0_324 = arith.constant 0 : index
    %c0_325 = arith.constant 0 : index
    %705 = vector.load %arg2[%c32, %c0_324, %c0_325] : memref<33x8x8xbf16, #tpu.memory_space<vmem>>, vector<1x8x8xbf16>
    %706 = vector.shape_cast %705 : vector<1x8x8xbf16> to vector<8x8xbf16>
    %c11_326 = arith.constant 11 : index
    %c0_327 = arith.constant 0 : index
    %c0_328 = arith.constant 0 : index
    %707 = vector.load %arg3[%c11_326, %c0_327, %c0_328] : memref<12x8x1xf32, #tpu.memory_space<vmem>>, vector<1x8x1xf32>
    %708 = vector.shape_cast %707 : vector<1x8x1xf32> to vector<8x1xf32>
    %c11_329 = arith.constant 11 : index
    %c0_330 = arith.constant 0 : index
    %c0_331 = arith.constant 0 : index
    %709 = vector.load %arg4[%c11_329, %c0_330, %c0_331] : memref<12x8x1xf32, #tpu.memory_space<vmem>>, vector<1x8x1xf32>
    %710 = vector.shape_cast %709 : vector<1x8x1xf32> to vector<8x1xf32>
    %711 = arith.truncf %700 : vector<8x256xf32> to vector<8x256xbf16>
    %c0_i32_332 = arith.constant 0 : i32
    %712 = vector.broadcast %c0_i32_332 : i32 to vector<1x256xi32>
    %713 = arith.cmpi eq, %13, %712 : vector<1x256xi32>
    %cst_333 = arith.constant 0.000000e+00 : bf16
    %714 = vector.broadcast %cst_333 : bf16 to vector<8x1xbf16>
    %715 = vector.extract_strided_slice %711 {offsets = [0, 0], sizes = [8, 255], strides = [1, 1]} : vector<8x256xbf16> to vector<8x255xbf16>
    %716 = tpu.concatenate %714, %715 in 1 : vector<8x1xbf16>, vector<8x255xbf16> -> vector<8x256xbf16>
    %cst_334 = arith.constant 0.000000e+00 : f32
    %717 = arith.truncf %cst_334 : f32 to bf16
    %718 = vector.shape_cast %713 : vector<1x256xi1> to vector<1x256xi1>
    %719 = vector.broadcast %718 : vector<1x256xi1> to vector<8x256xi1>
    %720 = vector.broadcast %717 : bf16 to vector<8x256xbf16>
    %721 = arith.select %719, %720, %716 : vector<8x256xi1>, vector<8x256xbf16>
    %c127_i32_335 = arith.constant 127 : i32
    %722 = vector.broadcast %c127_i32_335 : i32 to vector<1x256xi32>
    %723 = arith.cmpi eq, %13, %722 : vector<1x256xi32>
    %cst_336 = arith.constant 0.000000e+00 : bf16
    %724 = vector.broadcast %cst_336 : bf16 to vector<8x1xbf16>
    %725 = vector.extract_strided_slice %711 {offsets = [0, 1], sizes = [8, 255], strides = [1, 1]} : vector<8x256xbf16> to vector<8x255xbf16>
    %726 = tpu.concatenate %725, %724 in 1 : vector<8x255xbf16>, vector<8x1xbf16> -> vector<8x256xbf16>
    %cst_337 = arith.constant 0.000000e+00 : f32
    %727 = arith.truncf %cst_337 : f32 to bf16
    %728 = vector.shape_cast %723 : vector<1x256xi1> to vector<1x256xi1>
    %729 = vector.broadcast %728 : vector<1x256xi1> to vector<8x256xi1>
    %730 = vector.broadcast %727 : bf16 to vector<8x256xbf16>
    %731 = arith.select %729, %730, %726 : vector<8x256xi1>, vector<8x256xbf16>
    %cst_338 = arith.constant dense<0.000000e+00> : vector<8x256xf32>
    %732 = tpu.matmul %702, %721, %cst_338 {dimension_numbers = #tpu.dot_dimension_numbers<[1], [0], [0], [1], [0, 0, 1, 1], [], []>} : vector<8x8xbf16>, vector<8x256xbf16>, vector<8x256xf32> -> vector<8x256xf32>
    %cst_339 = arith.constant dense<0.000000e+00> : vector<8x256xf32>
    %733 = tpu.matmul %704, %711, %cst_339 {dimension_numbers = #tpu.dot_dimension_numbers<[1], [0], [0], [1], [0, 0, 1, 1], [], []>} : vector<8x8xbf16>, vector<8x256xbf16>, vector<8x256xf32> -> vector<8x256xf32>
    %734 = arith.addf %732, %733 : vector<8x256xf32>
    %cst_340 = arith.constant dense<0.000000e+00> : vector<8x256xf32>
    %735 = tpu.matmul %706, %731, %cst_340 {dimension_numbers = #tpu.dot_dimension_numbers<[1], [0], [0], [1], [0, 0, 1, 1], [], []>} : vector<8x8xbf16>, vector<8x256xbf16>, vector<8x256xf32> -> vector<8x256xf32>
    %736 = arith.addf %734, %735 : vector<8x256xf32>
    %cst_341 = arith.constant dense<0.000000e+00> : vector<8xf32>
    %737 = vector.multi_reduction <add>, %736, %cst_341 [1] : vector<8x256xf32> to vector<8xf32>
    %738 = vector.shape_cast %737 : vector<8xf32> to vector<8x1xf32>
    %cst_342 = arith.constant 3.906250e-03 : f32
    %739 = vector.broadcast %cst_342 : f32 to vector<8x1xf32>
    %740 = arith.mulf %738, %739 : vector<8x1xf32>
    %741 = vector.broadcast %740 : vector<8x1xf32> to vector<8x256xf32>
    %742 = arith.subf %736, %741 : vector<8x256xf32>
    %743 = arith.mulf %742, %742 : vector<8x256xf32>
    %cst_343 = arith.constant dense<0.000000e+00> : vector<8xf32>
    %744 = vector.multi_reduction <add>, %743, %cst_343 [1] : vector<8x256xf32> to vector<8xf32>
    %745 = vector.shape_cast %744 : vector<8xf32> to vector<8x1xf32>
    %cst_344 = arith.constant 3.906250e-03 : f32
    %746 = vector.broadcast %cst_344 : f32 to vector<8x1xf32>
    %747 = arith.mulf %745, %746 : vector<8x1xf32>
    %cst_345 = arith.constant 9.99999974E-6 : f32
    %748 = vector.broadcast %cst_345 : f32 to vector<8x1xf32>
    %749 = arith.addf %747, %748 : vector<8x1xf32>
    %750 = math.rsqrt %749 : vector<8x1xf32>
    %751 = arith.mulf %750, %708 : vector<8x1xf32>
    %752 = vector.broadcast %751 : vector<8x1xf32> to vector<8x256xf32>
    %753 = arith.mulf %742, %752 : vector<8x256xf32>
    %754 = vector.broadcast %710 : vector<8x1xf32> to vector<8x256xf32>
    %755 = arith.addf %753, %754 : vector<8x256xf32>
    %cst_346 = arith.constant 0.000000e+00 : f32
    %756 = vector.broadcast %cst_346 : f32 to vector<8x256xf32>
    %757 = arith.maximumf %755, %756 : vector<8x256xf32>
    %c0_347 = arith.constant 0 : index
    %c0_348 = arith.constant 0 : index
    %758 = vector.load %arg10[%c0_347, %c0_348] : memref<8x256xf32, #tpu.memory_space<vmem>>, vector<8x256xf32>
    tpu.vector_store %arg10[%c0_347, %c0_348], %757 {strides = array<i32>} : memref<8x256xf32, #tpu.memory_space<vmem>>, vector<8x256xf32>,
    return
  }
}

</mosaic_0001>

<llo_original>
// kernel: tpu_custom_call.1
$region0: #{tpu_custom_call.1}
  #allocation0 [shape = 'u32[]', space=smem, size = 0x4, offset = 0x4, fixed_abs, tag = 'smem constant byte address 0x4 - core index']
  #allocation1 [shape = 'u32[144,128]{1,0:T(1,128)}', space=vmem, size = 0x12000, scoped, tag = 'internal scratch']
  %s0 = inlined_call_operand.vmem [shape: f32[4,256], index: 0, kind: input, shape index: {}]
  %s1 = inlined_call_operand.vmem [shape: bf16[3,8,4], index: 1, kind: input, shape index: {}]
  %s2 = inlined_call_operand.vmem [shape: bf16[33,8,8], index: 2, kind: input, shape index: {}]
  %s3 = inlined_call_operand.vmem [shape: f32[12,8,1], index: 3, kind: input, shape index: {}]
  %s4 = inlined_call_operand.vmem [shape: f32[12,8,1], index: 4, kind: input, shape index: {}]
  %s5 = inlined_call_operand.vmem [shape: bf16[256,128], index: 5, kind: input, shape index: {}]
  %s6 = inlined_call_operand.vmem [shape: bf16[128,64], index: 6, kind: input, shape index: {}]
  %s7 = inlined_call_operand.vmem [shape: bf16[64,32], index: 7, kind: input, shape index: {}]
  %s8 = inlined_call_operand.vmem [shape: bf16[32,16], index: 8, kind: input, shape index: {}]
  %s9 = inlined_call_operand.vmem [shape: bf16[16,8], index: 9, kind: input, shape index: {}]
  %s10 = inlined_call_operand.hbm [shape: f32[8,256], index: 10, kind: output, shape index: {}]
  %s11 = sld [smem:[#allocation0]]
  $region50: #{tpu_custom_call.1} parent=0
    _
  %s13 = ssub.s32 1, %s11
  %s14 = scalar_select 0, %s13, %s11
  $region1: #{tpu_custom_call.1} parent=0
    #allocation2 [shape = 'u8[8192]{0}', space=vmem, size = 0x2000, scoped, tag = 'output window, operand 0, single buffered']
    #allocation3 [shape = 's32[1]{0}', space=sflag, size = 0x4, scoped, tag = 'scoped memory for tpu_custom_call.1']
    %15 = vsyncpa [#allocation3], 0
    // Predicated region
    $region2: #{tpu_custom_call.1} parent=1 // pred_check
      _
    $region3: #{tpu_custom_call.1} parent=1 // pred_check_branch
      %17 = sbr.rel (0) target = $region5
    $region4: #{tpu_custom_call.1} parent=1 // pred_region
      _
    $region5: #{tpu_custom_call.1} parent=1 // pred_fallthru
      _
    // Predicated region
    $region6: #{tpu_custom_call.1} parent=1 // pred_check
      _
    $region7: #{tpu_custom_call.1} parent=1 // pred_check_branch
      %19 = sbr.rel (0) target = $region9
    $region8: #{tpu_custom_call.1} parent=1 // pred_region
      _
    $region9: #{tpu_custom_call.1} parent=1 // pred_fallthru
      _
    // Predicated region
    $region10: #{tpu_custom_call.1} parent=1 // pred_check
      _
    $region11: #{tpu_custom_call.1} parent=1 // pred_check_branch
      %21 = sbr.rel (0) target = $region13
    $region12: #{tpu_custom_call.1} parent=1 // pred_region
      _
    $region13: #{tpu_custom_call.1} parent=1 // pred_fallthru
      _
    // Predicated region
    $region14: #{tpu_custom_call.1} parent=1 // pred_check
      _
    $region15: #{tpu_custom_call.1} parent=1 // pred_check_branch
      %23 = sbr.rel (0) target = $region17
    $region16: #{tpu_custom_call.1} parent=1 // pred_region
      _
    $region17: #{tpu_custom_call.1} parent=1 // pred_fallthru
      _
    // Predicated region
    $region18: #{tpu_custom_call.1} parent=1 // pred_check
      _
    $region19: #{tpu_custom_call.1} parent=1 // pred_check_branch
      %25 = sbr.rel (0) target = $region21
    $region20: #{tpu_custom_call.1} parent=1 // pred_region
      _
    $region21: #{tpu_custom_call.1} parent=1 // pred_fallthru
      _
    // Predicated region
    $region22: #{tpu_custom_call.1} parent=1 // pred_check
      _
    $region23: #{tpu_custom_call.1} parent=1 // pred_check_branch
      %27 = sbr.rel (0) target = $region25
    $region24: #{tpu_custom_call.1} parent=1 // pred_region
      _
    $region25: #{tpu_custom_call.1} parent=1 // pred_fallthru
      _
    // Predicated region
    $region26: #{tpu_custom_call.1} parent=1 // pred_check
      _
    $region27: #{tpu_custom_call.1} parent=1 // pred_check_branch
      %29 = sbr.rel (0) target = $region29
    $region28: #{tpu_custom_call.1} parent=1 // pred_region
      _
    $region29: #{tpu_custom_call.1} parent=1 // pred_fallthru
      _
    // Predicated region
    $region30: #{tpu_custom_call.1} parent=1 // pred_check
      _
    $region31: #{tpu_custom_call.1} parent=1 // pred_check_branch
      %31 = sbr.rel (0) target = $region33
    $region32: #{tpu_custom_call.1} parent=1 // pred_region
      _
    $region33: #{tpu_custom_call.1} parent=1 // pred_fallthru
      _
    // Predicated region
    $region34: #{tpu_custom_call.1} parent=1 // pred_check
      _
    $region35: #{tpu_custom_call.1} parent=1 // pred_check_branch
      %33 = sbr.rel (0) target = $region37
    $region36: #{tpu_custom_call.1} parent=1 // pred_region
      _
    $region37: #{tpu_custom_call.1} parent=1 // pred_fallthru
      _
    // Predicated region
    $region38: #{tpu_custom_call.1} parent=1 // pred_check
      _
    $region39: #{tpu_custom_call.1} parent=1 // pred_check_branch
      %35 = sbr.rel (0) target = $region41
    $region40: #{tpu_custom_call.1} parent=1 // pred_region
      _
    $region41: #{tpu_custom_call.1} parent=1 // pred_fallthru
      _
    %v39 = vld [vmem:[%s0] sm:$0xff]
    %v40 = vld [vmem:[%s1] sm:$0xf]
    %s41 = scalar_lea.vmem %s1, 4
    %v42 = vld [vmem:[%s41] sm:$0xf]
    %s43 = scalar_lea.vmem %s1, 8
    %v44 = vld [vmem:[%s43] sm:$0xf]
    %v45 = vld [vmem:[%s3] sm:$0xff]
    %v46 = vld [vmem:[%s4] sm:$0xff]
    %v47 = vlaneseq
    %v48 = vand.u32 %v47, 127
    %v49 = vadd.s32 %v48, 128
    %v50 = vand.u32 %v48, 127
    %v51 = vand.u32 %v49, 127
    %v53 = vcombine.high %v39, %v39
    %v55 = vpack.c.bf16 %v39, %v39
    %v56 = vpack.c.bf16 %v53, %v53
    %vm57 = vcmp.eq.s32.totalorder %v50, 0
    %vm58 = vcmp.eq.s32.totalorder %v51, 0
    %61 = vrot.lane.b32.xlu0 %v55, 1
    %v62 = vpop.permute.xlu0 %61
    %63 = vrot.lane.b32.xlu0 %v56, 1
    %v64 = vpop.permute.xlu0 %63
    %vm65 = vcmask 7168
    %v66 = vsel %vm65, %v62, %v64
    %vm68 = vcmask 7168
    %v71 = vsel %vm68, 0, %v62
    %v73 = vsel %vm57, 1, 0
    %v74 = vsel %vm58, 1, 0
    %vm75 = vcmp.eq.s32.totalorder %v73, 1
    %vm76 = vcmp.eq.s32.totalorder %v74, 1
    %vm77 = vmpackc.low %vm76, %vm75
    %v78 = vsel %vm77, 65537, 0
    %v79 = vlaneseq
    %v80 = vshrl.u32 %v79, 7
    %v81 = vsub.s32 0, %v80
    %v82 = vrot.slane %v78, %v81
    %v83 = vlaneseq
    %v84 = vshrl.u32 %v83, 7
    %v85 = vsub.s32 4, %v84
    %v86 = vrot.slane %v78, %v85
    %vm87 = vcmp.ne.s16.totalorder %v82, 0
    %vm88 = vcmp.ne.s16.totalorder %v86, 0
    %v89 = vsel %vm87, 0, %v71
    %v90 = vsel %vm88, 0, %v66
    %vm91 = vcmp.eq.s32.totalorder %v50, 127
    %vm92 = vcmp.eq.s32.totalorder %v51, 127
    %93 = vrot.lane.b32.xlu0 %v55, 127
    %v94 = vpop.permute.xlu0 %93
    %95 = vrot.lane.b32.xlu0 %v56, 127
    %v96 = vpop.permute.xlu0 %95
    %vm97 = vcmask 1039360
    %v98 = vsel %vm97, %v94, %v96
    %vm100 = vcmask 1039360
    %v102 = vsel %vm100, %v96, 0
    %v104 = vsel %vm91, 1, 0
    %v105 = vsel %vm92, 1, 0
    %vm106 = vcmp.eq.s32.totalorder %v104, 1
    %vm107 = vcmp.eq.s32.totalorder %v105, 1
    %vm108 = vmpackc.low %vm107, %vm106
    %v109 = vsel %vm108, 65537, 0
    %v110 = vlaneseq
    %v111 = vshrl.u32 %v110, 7
    %v112 = vsub.s32 0, %v111
    %v113 = vrot.slane %v109, %v112
    %v114 = vlaneseq
    %v115 = vshrl.u32 %v114, 7
    %v116 = vsub.s32 4, %v115
    %v117 = vrot.slane %v109, %v116
    %vm118 = vcmp.ne.s16.totalorder %v113, 0
    %vm119 = vcmp.ne.s16.totalorder %v117, 0
    %v120 = vsel %vm118, 0, %v98
    %v121 = vsel %vm119, 0, %v102
    %vm122 = vcmask 31744
    %v124 = vsel %vm122, %v42, 0
    %vm126 = vcmask 1041408
    %v128 = vsel %vm126, %v55, 0
    %v131 = vsel %vm126, %v56, 0
    %133 = vmatprep.subr.bf16.mxu0 0
    %134 = vmatpush1.bf16.msra.mxu0 0
    %135 = vmatprep.subr.bf16.mxu0 0
    %136 = vmatpush1.bf16.msra.mxu0 0
    %137 = vmatprep.subr.bf16.mxu0 0
    %138 = vmatpush1.bf16.msra.mxu0 0
    %139 = vmatprep.subr.bf16.mxu0 0
    %140 = vmatpush1.bf16.msra.mxu0 0
    %141 = vmatprep.subr.bf16.mxu0 0
    %142 = vmatpush1.bf16.msra.mxu0 0
    %143 = vmatprep.subr.bf16.mxu0 0
    %144 = vmatpush1.bf16.msra.mxu0 0
    %145 = vmatprep.subr.bf16.mxu0 0
    %146 = vmatpush1.bf16.msra.mxu0 0
    %147 = vmatprep.subr.bf16.mxu0 %v131
    %148 = vmatpush1.bf16.msra.mxu0 %v128
    %149 = vmatprep.subr.bf16.mxu0 0
    %150 = vmatpush2.bf16.msra.mxu0 0
    %151 = vmatprep.subr.bf16.mxu0 0
    %152 = vmatpush2.bf16.msra.mxu0 0
    %153 = vmatprep.subr.bf16.mxu0 0
    %154 = vmatpush2.bf16.msra.mxu0 0
    %155 = vmatprep.subr.bf16.mxu0 0
    %156 = vmatpush2.bf16.msra.mxu0 0
    %157 = vmatprep.subr.bf16.mxu0 0
    %158 = vmatpush2.bf16.msra.mxu0 0
    %159 = vmatprep.subr.bf16.mxu0 0
    %160 = vmatpush2.bf16.msra.mxu0 0
    %161 = vmatprep.subr.bf16.mxu0 0
    %162 = vmatpush2.bf16.msra.mxu0 0
    %163 = vmatprep.subr.bf16.mxu0 0
    %164 = vmatpush2.bf16.msra.mxu0 0
    %165 = vmatprep.mubr.bf16.mxu0 0
    %166 = vmatmul.mubr.bf16.gmra.mxu0 %v124
    %v167 = vpop.f32.mrf.mxu0
    %v168 = vadd.f32 0.0, %v167
    %v169 = vpop.f32.mrf.mxu0
    %v170 = vadd.f32 0.0, %v169
    %v171 = vpop.f32.mrf.mxu0
    %v172 = vpop.f32.mrf.mxu0
    %173 = vdwg.mxu0
    %v175 = vsel %vm122, %v40, 0
    %v178 = vsel %vm126, %v89, 0
    %v181 = vsel %vm126, %v90, 0
    %183 = vmatprep.subr.bf16.mxu0 0
    %184 = vmatpush1.bf16.msra.mxu0 0
    %185 = vmatprep.subr.bf16.mxu0 0
    %186 = vmatpush1.bf16.msra.mxu0 0
    %187 = vmatprep.subr.bf16.mxu0 0
    %188 = vmatpush1.bf16.msra.mxu0 0
    %189 = vmatprep.subr.bf16.mxu0 0
    %190 = vmatpush1.bf16.msra.mxu0 0
    %191 = vmatprep.subr.bf16.mxu0 0
    %192 = vmatpush1.bf16.msra.mxu0 0
    %193 = vmatprep.subr.bf16.mxu0 0
    %194 = vmatpush1.bf16.msra.mxu0 0
    %195 = vmatprep.subr.bf16.mxu0 0
    %196 = vmatpush1.bf16.msra.mxu0 0
    %197 = vmatprep.subr.bf16.mxu0 %v181
    %198 = vmatpush1.bf16.msra.mxu0 %v178
    %199 = vmatprep.subr.bf16.mxu0 0
    %200 = vmatpush2.bf16.msra.mxu0 0
    %201 = vmatprep.subr.bf16.mxu0 0
    %202 = vmatpush2.bf16.msra.mxu0 0
    %203 = vmatprep.subr.bf16.mxu0 0
    %204 = vmatpush2.bf16.msra.mxu0 0
    %205 = vmatprep.subr.bf16.mxu0 0
    %206 = vmatpush2.bf16.msra.mxu0 0
    %207 = vmatprep.subr.bf16.mxu0 0
    %208 = vmatpush2.bf16.msra.mxu0 0
    %209 = vmatprep.subr.bf16.mxu0 0
    %210 = vmatpush2.bf16.msra.mxu0 0
    %211 = vmatprep.subr.bf16.mxu0 0
    %212 = vmatpush2.bf16.msra.mxu0 0
    %213 = vmatprep.subr.bf16.mxu0 0
    %214 = vmatpush2.bf16.msra.mxu0 0
    %215 = vmatprep.mubr.bf16.mxu0 0
    %216 = vmatmul.mubr.bf16.gmra.mxu0 %v175
    %v217 = vpop.f32.mrf.mxu0
    %v218 = vadd.f32 %v168, %v217
    %v219 = vpop.f32.mrf.mxu0
    %v220 = vadd.f32 %v170, %v219
    %v221 = vpop.f32.mrf.mxu0
    %v222 = vpop.f32.mrf.mxu0
    %223 = vdwg.mxu0
    %v225 = vsel %vm122, %v44, 0
    %v228 = vsel %vm126, %v120, 0
    %v231 = vsel %vm126, %v121, 0
    %233 = vmatprep.subr.bf16.mxu0 0
    %234 = vmatpush1.bf16.msra.mxu0 0
    %235 = vmatprep.subr.bf16.mxu0 0
    %236 = vmatpush1.bf16.msra.mxu0 0
    %237 = vmatprep.subr.bf16.mxu0 0
    %238 = vmatpush1.bf16.msra.mxu0 0
    %239 = vmatprep.subr.bf16.mxu0 0
    %240 = vmatpush1.bf16.msra.mxu0 0
    %241 = vmatprep.subr.bf16.mxu0 0
    %242 = vmatpush1.bf16.msra.mxu0 0
    %243 = vmatprep.subr.bf16.mxu0 0
    %244 = vmatpush1.bf16.msra.mxu0 0
    %245 = vmatprep.subr.bf16.mxu0 0
    %246 = vmatpush1.bf16.msra.mxu0 0
    %247 = vmatprep.subr.bf16.mxu0 %v231
    %248 = vmatpush1.bf16.msra.mxu0 %v228
    %249 = vmatprep.subr.bf16.mxu0 0
    %250 = vmatpush2.bf16.msra.mxu0 0
    %251 = vmatprep.subr.bf16.mxu0 0
    %252 = vmatpush2.bf16.msra.mxu0 0
    %253 = vmatprep.subr.bf16.mxu0 0
    %254 = vmatpush2.bf16.msra.mxu0 0
    %255 = vmatprep.subr.bf16.mxu0 0
    %256 = vmatpush2.bf16.msra.mxu0 0
    %257 = vmatprep.subr.bf16.mxu0 0
    %258 = vmatpush2.bf16.msra.mxu0 0
    %259 = vmatprep.subr.bf16.mxu0 0
    %260 = vmatpush2.bf16.msra.mxu0 0
    %261 = vmatprep.subr.bf16.mxu0 0
    %262 = vmatpush2.bf16.msra.mxu0 0
    %263 = vmatprep.subr.bf16.mxu0 0
    %264 = vmatpush2.bf16.msra.mxu0 0
    %265 = vmatprep.mubr.bf16.mxu0 0
    %266 = vmatmul.mubr.bf16.gmra.mxu0 %v225
    %v267 = vpop.f32.mrf.mxu0
    %v268 = vadd.f32 0.0, %v267
    %v269 = vpop.f32.mrf.mxu0
    %v270 = vadd.f32 0.0, %v269
    %v271 = vpop.f32.mrf.mxu0
    %v272 = vpop.f32.mrf.mxu0
    %273 = vdwg.mxu0
    %v274 = vadd.f32 %v218, %v268
    %v275 = vadd.f32 %v220, %v270
    %v276 = vadd.f32 %v274, %v275
    %277 = vadd.xlane.f32.xlu0 %v276
    %v278 = vpop.xlane.xlu0 %277
    %v279 = vmul.f32 %v278, 0.00390625
    %v280 = vsub.f32 %v274, %v279
    %v281 = vsub.f32 %v275, %v279
    %v282 = vmul.f32 %v280, %v280
    %v283 = vmul.f32 %v281, %v281
    %v284 = vadd.f32 %v282, %v283
    %285 = vadd.xlane.f32.xlu0 %v284
    %v286 = vpop.xlane.xlu0 %285
    %v287 = vmul.f32 %v286, 0.00390625
    %v288 = vadd.f32 %v287, 1e-05
    %v289 = vrsqrt.pop %v288
    %v290 = vmul.f32 %v289, %v45
    %292 = vset.pattern.permute.xlu0 0
    %293 = vperm.xlu0 %292, %v290
    %v294 = vpop.permute.xlu0 %293
    %v296 = vmul.f32 %v280, %v294
    %v297 = vmul.f32 %v281, %v294
    %299 = vset.pattern.permute.xlu0 0
    %300 = vperm.xlu0 %299, %v46
    %v301 = vpop.permute.xlu0 %300
    %v303 = vadd.f32 %v296, %v301
    %v304 = vadd.f32 %v297, %v301
    %v305 = vmax.f32 %v303, 0.0
    %v306 = vmax.f32 %v304, 0.0
    %v307 = vld [vmem:[%s2] sm:$0xf]
    %s308 = scalar_lea.vmem %s2, 4
    %v309 = vld [vmem:[%s308] sm:$0xf]
    %s310 = scalar_lea.vmem %s2, 8
    %v311 = vld [vmem:[%s310] sm:$0xf]
    %s312 = scalar_lea.vmem %s3, 8
    %v313 = vld [vmem:[%s312] sm:$0xff]
    %s314 = scalar_lea.vmem %s4, 8
    %v315 = vld [vmem:[%s314] sm:$0xff]
    %v316 = vpack.c.bf16 %v305, %v305
    %v317 = vpack.c.bf16 %v306, %v306
    %320 = vrot.lane.b32.xlu0 %v316, 1
    %v321 = vpop.permute.xlu0 %320
    %322 = vrot.lane.b32.xlu0 %v317, 1
    %v323 = vpop.permute.xlu0 %322
    %v324 = vsel %vm65, %v321, %v323
    %v327 = vsel %vm68, 0, %v321
    %v329 = vsel %vm87, 0, %v327
    %v330 = vsel %vm88, 0, %v324
    %331 = vrot.lane.b32.xlu0 %v316, 127
    %v332 = vpop.permute.xlu0 %331
    %333 = vrot.lane.b32.xlu0 %v317, 127
    %v334 = vpop.permute.xlu0 %333
    %v335 = vsel %vm97, %v332, %v334
    %v338 = vsel %vm100, %v334, 0
    %v340 = vsel %vm118, 0, %v335
    %v341 = vsel %vm119, 0, %v338
    %vm342 = vcmask 64512
    %v344 = vsel %vm342, %v309, 0
    %vm346 = vcmask 1043456
    %v348 = vsel %vm346, %v316, 0
    %v351 = vsel %vm346, %v317, 0
    %353 = vmatprep.subr.bf16.mxu0 0
    %354 = vmatpush1.bf16.msra.mxu0 0
    %355 = vmatprep.subr.bf16.mxu0 0
    %356 = vmatpush1.bf16.msra.mxu0 0
    %357 = vmatprep.subr.bf16.mxu0 0
    %358 = vmatpush1.bf16.msra.mxu0 0
    %359 = vmatprep.subr.bf16.mxu0 0
    %360 = vmatpush1.bf16.msra.mxu0 0
    %361 = vmatprep.subr.bf16.mxu0 0
    %362 = vmatpush1.bf16.msra.mxu0 0
    %363 = vmatprep.subr.bf16.mxu0 0
    %364 = vmatpush1.bf16.msra.mxu0 0
    %365 = vmatprep.subr.bf16.mxu0 0
    %366 = vmatpush1.bf16.msra.mxu0 0
    %367 = vmatprep.subr.bf16.mxu0 %v351
    %368 = vmatpush1.bf16.msra.mxu0 %v348
    %369 = vmatprep.subr.bf16.mxu0 0
    %370 = vmatpush2.bf16.msra.mxu0 0
    %371 = vmatprep.subr.bf16.mxu0 0
    %372 = vmatpush2.bf16.msra.mxu0 0
    %373 = vmatprep.subr.bf16.mxu0 0
    %374 = vmatpush2.bf16.msra.mxu0 0
    %375 = vmatprep.subr.bf16.mxu0 0
    %376 = vmatpush2.bf16.msra.mxu0 0
    %377 = vmatprep.subr.bf16.mxu0 0
    %378 = vmatpush2.bf16.msra.mxu0 0
    %379 = vmatprep.subr.bf16.mxu0 0
    %380 = vmatpush2.bf16.msra.mxu0 0
    %381 = vmatprep.subr.bf16.mxu0 0
    %382 = vmatpush2.bf16.msra.mxu0 0
    %383 = vmatprep.subr.bf16.mxu0 0
    %384 = vmatpush2.bf16.msra.mxu0 0
    %385 = vmatprep.mubr.bf16.mxu0 0
    %386 = vmatmul.mubr.bf16.gmra.mxu0 %v344
    %v387 = vpop.f32.mrf.mxu0
    %v388 = vadd.f32 0.0, %v387
    %v389 = vpop.f32.mrf.mxu0
    %v390 = vadd.f32 0.0, %v389
    %v391 = vpop.f32.mrf.mxu0
    %v392 = vpop.f32.mrf.mxu0
    %393 = vdwg.mxu0
    %v395 = vsel %vm342, %v307, 0
    %v398 = vsel %vm346, %v329, 0
    %v401 = vsel %vm346, %v330, 0
    %403 = vmatprep.subr.bf16.mxu0 0
    %404 = vmatpush1.bf16.msra.mxu0 0
    %405 = vmatprep.subr.bf16.mxu0 0
    %406 = vmatpush1.bf16.msra.mxu0 0
    %407 = vmatprep.subr.bf16.mxu0 0
    %408 = vmatpush1.bf16.msra.mxu0 0
    %409 = vmatprep.subr.bf16.mxu0 0
    %410 = vmatpush1.bf16.msra.mxu0 0
    %411 = vmatprep.subr.bf16.mxu0 0
    %412 = vmatpush1.bf16.msra.mxu0 0
    %413 = vmatprep.subr.bf16.mxu0 0
    %414 = vmatpush1.bf16.msra.mxu0 0
    %415 = vmatprep.subr.bf16.mxu0 0
    %416 = vmatpush1.bf16.msra.mxu0 0
    %417 = vmatprep.subr.bf16.mxu0 %v401
    %418 = vmatpush1.bf16.msra.mxu0 %v398
    %419 = vmatprep.subr.bf16.mxu0 0
    %420 = vmatpush2.bf16.msra.mxu0 0
    %421 = vmatprep.subr.bf16.mxu0 0
    %422 = vmatpush2.bf16.msra.mxu0 0
    %423 = vmatprep.subr.bf16.mxu0 0
    %424 = vmatpush2.bf16.msra.mxu0 0
    %425 = vmatprep.subr.bf16.mxu0 0
    %426 = vmatpush2.bf16.msra.mxu0 0
    %427 = vmatprep.subr.bf16.mxu0 0
    %428 = vmatpush2.bf16.msra.mxu0 0
    %429 = vmatprep.subr.bf16.mxu0 0
    %430 = vmatpush2.bf16.msra.mxu0 0
    %431 = vmatprep.subr.bf16.mxu0 0
    %432 = vmatpush2.bf16.msra.mxu0 0
    %433 = vmatprep.subr.bf16.mxu0 0
    %434 = vmatpush2.bf16.msra.mxu0 0
    %435 = vmatprep.mubr.bf16.mxu0 0
    %436 = vmatmul.mubr.bf16.gmra.mxu0 %v395
    %v437 = vpop.f32.mrf.mxu0
    %v438 = vadd.f32 %v388, %v437
    %v439 = vpop.f32.mrf.mxu0
    %v440 = vadd.f32 %v390, %v439
    %v441 = vpop.f32.mrf.mxu0
    %v442 = vpop.f32.mrf.mxu0
    %443 = vdwg.mxu0
    %v445 = vsel %vm342, %v311, 0
    %v448 = vsel %vm346, %v340, 0
    %v451 = vsel %vm346, %v341, 0
    %453 = vmatprep.subr.bf16.mxu0 0
    %454 = vmatpush1.bf16.msra.mxu0 0
    %455 = vmatprep.subr.bf16.mxu0 0
    %456 = vmatpush1.bf16.msra.mxu0 0
    %457 = vmatprep.subr.bf16.mxu0 0
    %458 = vmatpush1.bf16.msra.mxu0 0
    %459 = vmatprep.subr.bf16.mxu0 0
    %460 = vmatpush1.bf16.msra.mxu0 0
    %461 = vmatprep.subr.bf16.mxu0 0
    %462 = vmatpush1.bf16.msra.mxu0 0
    %463 = vmatprep.subr.bf16.mxu0 0
    %464 = vmatpush1.bf16.msra.mxu0 0
    %465 = vmatprep.subr.bf16.mxu0 0
    %466 = vmatpush1.bf16.msra.mxu0 0
    %467 = vmatprep.subr.bf16.mxu0 %v451
    %468 = vmatpush1.bf16.msra.mxu0 %v448
    %469 = vmatprep.subr.bf16.mxu0 0
    %470 = vmatpush2.bf16.msra.mxu0 0
    %471 = vmatprep.subr.bf16.mxu0 0
    %472 = vmatpush2.bf16.msra.mxu0 0
    %473 = vmatprep.subr.bf16.mxu0 0
    %474 = vmatpush2.bf16.msra.mxu0 0
    %475 = vmatprep.subr.bf16.mxu0 0
    %476 = vmatpush2.bf16.msra.mxu0 0
    %477 = vmatprep.subr.bf16.mxu0 0
    %478 = vmatpush2.bf16.msra.mxu0 0
    %479 = vmatprep.subr.bf16.mxu0 0
    %480 = vmatpush2.bf16.msra.mxu0 0
    %481 = vmatprep.subr.bf16.mxu0 0
    %482 = vmatpush2.bf16.msra.mxu0 0
    %483 = vmatprep.subr.bf16.mxu0 0
    %484 = vmatpush2.bf16.msra.mxu0 0
    %485 = vmatprep.mubr.bf16.mxu0 0
    %486 = vmatmul.mubr.bf16.gmra.mxu0 %v445
    %v487 = vpop.f32.mrf.mxu0
    %v488 = vadd.f32 0.0, %v487
    %v489 = vpop.f32.mrf.mxu0
    %v490 = vadd.f32 0.0, %v489
    %v491 = vpop.f32.mrf.mxu0
    %v492 = vpop.f32.mrf.mxu0
    %493 = vdwg.mxu0
    %v494 = vadd.f32 %v438, %v488
    %v495 = vadd.f32 %v440, %v490
    %v496 = vadd.f32 %v494, %v495
    %497 = vadd.xlane.f32.xlu0 %v496
    %v498 = vpop.xlane.xlu0 %497
    %v499 = vmul.f32 %v498, 0.00390625
    %v500 = vsub.f32 %v494, %v499
    %v501 = vsub.f32 %v495, %v499
    %v502 = vmul.f32 %v500, %v500
    %v503 = vmul.f32 %v501, %v501
    %v504 = vadd.f32 %v502, %v503
    %505 = vadd.xlane.f32.xlu0 %v504
    %v506 = vpop.xlane.xlu0 %505
    %v507 = vmul.f32 %v506, 0.00390625
    %v508 = vadd.f32 %v507, 1e-05
    %v509 = vrsqrt.pop %v508
    %v510 = vmul.f32 %v509, %v313
    %512 = vset.pattern.permute.xlu0 0
    %513 = vperm.xlu0 %512, %v510
    %v514 = vpop.permute.xlu0 %513
    %v516 = vmul.f32 %v500, %v514
    %v517 = vmul.f32 %v501, %v514
    %519 = vset.pattern.permute.xlu0 0
    %520 = vperm.xlu0 %519, %v315
    %v521 = vpop.permute.xlu0 %520
    %v523 = vadd.f32 %v516, %v521
    %v524 = vadd.f32 %v517, %v521
    %v525 = vmax.f32 %v523, 0.0
    %v526 = vmax.f32 %v524, 0.0
    %529 = vrot.lane.b32.xlu0 %v525, 127
    %v530 = vpop.permute.xlu0 %529
    %531 = vrot.lane.b32.xlu0 %v526, 127
    %v532 = vpop.permute.xlu0 %531
    %v533 = vsel %vm100, %v530, %v532
    %v536 = vsel %vm100, %v532, 0.0
    %v537 = vmax.f32 %v525, %v533
    %v538 = vmax.f32 %v526, %v536
    %v539 = vpack.c.bf16 %v537, %v537
    %v540 = vpack.c.bf16 %v538, %v538
    %v541 = vld [vmem:[%s5] sm:$0xf]
    %v542 = vld [vmem:[%s5 + $0x4] sm:$0xf]
    %v543 = vld [vmem:[%s5 + $0x8] sm:$0xf]
    %v544 = vld [vmem:[%s5 + $0xc] sm:$0xf]
    %v545 = vld [vmem:[%s5 + $0x10] sm:$0xf]
    %v546 = vld [vmem:[%s5 + $0x14] sm:$0xf]
    %v547 = vld [vmem:[%s5 + $0x18] sm:$0xf]
    %v548 = vld [vmem:[%s5 + $0x1c] sm:$0xf]
    %v549 = vld [vmem:[%s5 + $0x20] sm:$0xf]
    %v550 = vld [vmem:[%s5 + $0x24] sm:$0xf]
    %v551 = vld [vmem:[%s5 + $0x28] sm:$0xf]
    %v552 = vld [vmem:[%s5 + $0x2c] sm:$0xf]
    %v553 = vld [vmem:[%s5 + $0x30] sm:$0xf]
    %v554 = vld [vmem:[%s5 + $0x34] sm:$0xf]
    %v555 = vld [vmem:[%s5 + $0x38] sm:$0xf]
    %v556 = vld [vmem:[%s5 + $0x3c] sm:$0xf]
    %v557 = vld [vmem:[%s5 + $0x40] sm:$0xf]
    %v558 = vld [vmem:[%s5 + $0x44] sm:$0xf]
    %v559 = vld [vmem:[%s5 + $0x48] sm:$0xf]
    %v560 = vld [vmem:[%s5 + $0x4c] sm:$0xf]
    %v561 = vld [vmem:[%s5 + $0x50] sm:$0xf]
    %v562 = vld [vmem:[%s5 + $0x54] sm:$0xf]
    %v563 = vld [vmem:[%s5 + $0x58] sm:$0xf]
    %v564 = vld [vmem:[%s5 + $0x5c] sm:$0xf]
    %v565 = vld [vmem:[%s5 + $0x60] sm:$0xf]
    %v566 = vld [vmem:[%s5 + $0x64] sm:$0xf]
    %v567 = vld [vmem:[%s5 + $0x68] sm:$0xf]
    %v568 = vld [vmem:[%s5 + $0x6c] sm:$0xf]
    %v569 = vld [vmem:[%s5 + $0x70] sm:$0xf]
    %v570 = vld [vmem:[%s5 + $0x74] sm:$0xf]
    %v571 = vld [vmem:[%s5 + $0x78] sm:$0xf]
    %v572 = vld [vmem:[%s5 + $0x7c] sm:$0xf]
    %v605 = vunpack.c.l.b16 %v541
    %v606 = vunpack.c.l.b16 %v542
    %v607 = vunpack.c.l.b16 %v543
    %v608 = vunpack.c.l.b16 %v544
    %v609 = vunpack.c.l.b16 %v545
    %v610 = vunpack.c.l.b16 %v546
    %v611 = vunpack.c.l.b16 %v547
    %v612 = vunpack.c.l.b16 %v548
    %v613 = vunpack.c.l.b16 %v549
    %v614 = vunpack.c.l.b16 %v550
    %v615 = vunpack.c.l.b16 %v551
    %v616 = vunpack.c.l.b16 %v552
    %v617 = vunpack.c.l.b16 %v553
    %v618 = vunpack.c.l.b16 %v554
    %v619 = vunpack.c.l.b16 %v555
    %v620 = vunpack.c.l.b16 %v556
    %v621 = vunpack.c.l.b16 %v557
    %v622 = vunpack.c.l.b16 %v558
    %v623 = vunpack.c.l.b16 %v559
    %v624 = vunpack.c.l.b16 %v560
    %v625 = vunpack.c.l.b16 %v561
    %v626 = vunpack.c.l.b16 %v562
    %v627 = vunpack.c.l.b16 %v563
    %v628 = vunpack.c.l.b16 %v564
    %v629 = vunpack.c.l.b16 %v565
    %v630 = vunpack.c.l.b16 %v566
    %v631 = vunpack.c.l.b16 %v567
    %v632 = vunpack.c.l.b16 %v568
    %v633 = vunpack.c.l.b16 %v569
    %v634 = vunpack.c.l.b16 %v570
    %v635 = vunpack.c.l.b16 %v571
    %v636 = vunpack.c.l.b16 %v572
    %v637 = vpack.c.b16 %v606, %v605
    %v638 = vpack.c.b16 %v608, %v607
    %v639 = vpack.c.b16 %v610, %v609
    %v640 = vpack.c.b16 %v612, %v611
    %v641 = vpack.c.b16 %v614, %v613
    %v642 = vpack.c.b16 %v616, %v615
    %v643 = vpack.c.b16 %v618, %v617
    %v644 = vpack.c.b16 %v620, %v619
    %v645 = vpack.c.b16 %v622, %v621
    %v646 = vpack.c.b16 %v624, %v623
    %v647 = vpack.c.b16 %v626, %v625
    %v648 = vpack.c.b16 %v628, %v627
    %v649 = vpack.c.b16 %v630, %v629
    %v650 = vpack.c.b16 %v632, %v631
    %v651 = vpack.c.b16 %v634, %v633
    %v652 = vpack.c.b16 %v636, %v635
    %669 = vmatprep.subr.bf16.mxu0 0
    %670 = vmatpush1.bf16.msra.mxu0 %v644
    %671 = vmatprep.subr.bf16.mxu0 0
    %672 = vmatpush1.bf16.msra.mxu0 %v643
    %673 = vmatprep.subr.bf16.mxu0 0
    %674 = vmatpush1.bf16.msra.mxu0 %v642
    %675 = vmatprep.subr.bf16.mxu0 0
    %676 = vmatpush1.bf16.msra.mxu0 %v641
    %677 = vmatprep.subr.bf16.mxu0 0
    %678 = vmatpush1.bf16.msra.mxu0 %v640
    %679 = vmatprep.subr.bf16.mxu0 0
    %680 = vmatpush1.bf16.msra.mxu0 %v639
    %681 = vmatprep.subr.bf16.mxu0 0
    %682 = vmatpush1.bf16.msra.mxu0 %v638
    %683 = vmatprep.subr.bf16.mxu0 0
    %684 = vmatpush1.bf16.msra.mxu0 %v637
    %685 = vmatprep.subr.bf16.mxu0 0
    %686 = vmatpush2.bf16.msra.mxu0 %v652
    %687 = vmatprep.subr.bf16.mxu0 0
    %688 = vmatpush2.bf16.msra.mxu0 %v651
    %689 = vmatprep.subr.bf16.mxu0 0
    %690 = vmatpush2.bf16.msra.mxu0 %v650
    %691 = vmatprep.subr.bf16.mxu0 0
    %692 = vmatpush2.bf16.msra.mxu0 %v649
    %693 = vmatprep.subr.bf16.mxu0 0
    %694 = vmatpush2.bf16.msra.mxu0 %v648
    %695 = vmatprep.subr.bf16.mxu0 0
    %696 = vmatpush2.bf16.msra.mxu0 %v647
    %697 = vmatprep.subr.bf16.mxu0 0
    %698 = vmatpush2.bf16.msra.mxu0 %v646
    %699 = vmatprep.subr.bf16.mxu0 0
    %700 = vmatpush2.bf16.msra.mxu0 %v645
    %701 = vmatprep.mubr.bf16.mxu0 %v540
    %702 = vmatmul.mubr.bf16.gmra.mxu0 %v539
    %v703 = vpop.f32.mrf.mxu0
    %v704 = vadd.f32 0.0, %v703
    %v705 = vpop.f32.mrf.mxu0
    %v706 = vpop.f32.mrf.mxu0
    %v707 = vpop.f32.mrf.mxu0
    %708 = vdwg.mxu0
    %s709 = scalar_lea.vmem %s2, 12
    %v710 = vld [vmem:[%s709] sm:$0xf]
    %s711 = scalar_lea.vmem %s2, 16
    %v712 = vld [vmem:[%s711] sm:$0xf]
    %s713 = scalar_lea.vmem %s2, 20
    %v714 = vld [vmem:[%s713] sm:$0xf]
    %s715 = scalar_lea.vmem %s3, 16
    %v716 = vld [vmem:[%s715] sm:$0xff]
    %s717 = scalar_lea.vmem %s4, 16
    %v718 = vld [vmem:[%s717] sm:$0xff]
    %v719 = vand.u32 %v48, 63
    %v720 = vpack.c.bf16 %v704, %v704
    %vm721 = vcmp.eq.s32.totalorder %v719, 0
    %723 = vrot.lane.b32.xlu0 %v720, 1
    %v724 = vpop.permute.xlu0 %723
    %v726 = vsel %vm68, 0, %v724
    %v728 = vsel %vm721, 1, 0
    %vm729 = vcmp.eq.s32.totalorder %v728, 1
    %vm730 = vmpackc.low %vm729, %vm729
    %v731 = vsel %vm730, 0, %v726
    %vm732 = vcmp.eq.s32.totalorder %v719, 63
    %733 = vrot.lane.b32.xlu0 %v720, 127
    %v734 = vpop.permute.xlu0 %733
    %v736 = vsel %vm100, %v734, 0
    %v738 = vsel %vm732, 1, 0
    %vm739 = vcmp.eq.s32.totalorder %v738, 1
    %vm740 = vmpackc.low %vm739, %vm739
    %v741 = vsel %vm740, 0, %v736
    %v743 = vsel %vm342, %v712, 0
    %v746 = vsel %vm346, %v720, 0
    %748 = vmatprep.subr.bf16.mxu0 0
    %749 = vmatpush1.bf16.msra.mxu0 0
    %750 = vmatprep.subr.bf16.mxu0 0
    %751 = vmatpush1.bf16.msra.mxu0 0
    %752 = vmatprep.subr.bf16.mxu0 0
    %753 = vmatpush1.bf16.msra.mxu0 0
    %754 = vmatprep.subr.bf16.mxu0 0
    %755 = vmatpush1.bf16.msra.mxu0 0
    %756 = vmatprep.subr.bf16.mxu0 0
    %757 = vmatpush1.bf16.msra.mxu0 0
    %758 = vmatprep.subr.bf16.mxu0 0
    %759 = vmatpush1.bf16.msra.mxu0 0
    %760 = vmatprep.subr.bf16.mxu0 0
    %761 = vmatpush1.bf16.msra.mxu0 0
    %762 = vmatprep.subr.bf16.mxu0 0
    %763 = vmatpush1.bf16.msra.mxu0 %v746
    %764 = vmatprep.subr.bf16.mxu0 0
    %765 = vmatpush2.bf16.msra.mxu0 0
    %766 = vmatprep.subr.bf16.mxu0 0
    %767 = vmatpush2.bf16.msra.mxu0 0
    %768 = vmatprep.subr.bf16.mxu0 0
    %769 = vmatpush2.bf16.msra.mxu0 0
    %770 = vmatprep.subr.bf16.mxu0 0
    %771 = vmatpush2.bf16.msra.mxu0 0
    %772 = vmatprep.subr.bf16.mxu0 0
    %773 = vmatpush2.bf16.msra.mxu0 0
    %774 = vmatprep.subr.bf16.mxu0 0
    %775 = vmatpush2.bf16.msra.mxu0 0
    %776 = vmatprep.subr.bf16.mxu0 0
    %777 = vmatpush2.bf16.msra.mxu0 0
    %778 = vmatprep.subr.bf16.mxu0 0
    %779 = vmatpush2.bf16.msra.mxu0 0
    %780 = vmatprep.mubr.bf16.mxu0 0
    %781 = vmatmul.mubr.bf16.gmra.mxu0 %v743
    %v782 = vpop.f32.mrf.mxu0
    %v783 = vadd.f32 0.0, %v782
    %v784 = vpop.f32.mrf.mxu0
    %v785 = vpop.f32.mrf.mxu0
    %v786 = vpop.f32.mrf.mxu0
    %787 = vdwg.mxu0
    %v789 = vsel %vm342, %v710, 0
    %v792 = vsel %vm346, %v731, 0
    %794 = vmatprep.subr.bf16.mxu0 0
    %795 = vmatpush1.bf16.msra.mxu0 0
    %796 = vmatprep.subr.bf16.mxu0 0
    %797 = vmatpush1.bf16.msra.mxu0 0
    %798 = vmatprep.subr.bf16.mxu0 0
    %799 = vmatpush1.bf16.msra.mxu0 0
    %800 = vmatprep.subr.bf16.mxu0 0
    %801 = vmatpush1.bf16.msra.mxu0 0
    %802 = vmatprep.subr.bf16.mxu0 0
    %803 = vmatpush1.bf16.msra.mxu0 0
    %804 = vmatprep.subr.bf16.mxu0 0
    %805 = vmatpush1.bf16.msra.mxu0 0
    %806 = vmatprep.subr.bf16.mxu0 0
    %807 = vmatpush1.bf16.msra.mxu0 0
    %808 = vmatprep.subr.bf16.mxu0 0
    %809 = vmatpush1.bf16.msra.mxu0 %v792
    %810 = vmatprep.subr.bf16.mxu0 0
    %811 = vmatpush2.bf16.msra.mxu0 0
    %812 = vmatprep.subr.bf16.mxu0 0
    %813 = vmatpush2.bf16.msra.mxu0 0
    %814 = vmatprep.subr.bf16.mxu0 0
    %815 = vmatpush2.bf16.msra.mxu0 0
    %816 = vmatprep.subr.bf16.mxu0 0
    %817 = vmatpush2.bf16.msra.mxu0 0
    %818 = vmatprep.subr.bf16.mxu0 0
    %819 = vmatpush2.bf16.msra.mxu0 0
    %820 = vmatprep.subr.bf16.mxu0 0
    %821 = vmatpush2.bf16.msra.mxu0 0
    %822 = vmatprep.subr.bf16.mxu0 0
    %823 = vmatpush2.bf16.msra.mxu0 0
    %824 = vmatprep.subr.bf16.mxu0 0
    %825 = vmatpush2.bf16.msra.mxu0 0
    %826 = vmatprep.mubr.bf16.mxu0 0
    %827 = vmatmul.mubr.bf16.gmra.mxu0 %v789
    %v828 = vpop.f32.mrf.mxu0
    %v829 = vadd.f32 %v783, %v828
    %v830 = vpop.f32.mrf.mxu0
    %v831 = vpop.f32.mrf.mxu0
    %v832 = vpop.f32.mrf.mxu0
    %833 = vdwg.mxu0
    %v835 = vsel %vm342, %v714, 0
    %v838 = vsel %vm346, %v741, 0
    %840 = vmatprep.subr.bf16.mxu0 0
    %841 = vmatpush1.bf16.msra.mxu0 0
    %842 = vmatprep.subr.bf16.mxu0 0
    %843 = vmatpush1.bf16.msra.mxu0 0
    %844 = vmatprep.subr.bf16.mxu0 0
    %845 = vmatpush1.bf16.msra.mxu0 0
    %846 = vmatprep.subr.bf16.mxu0 0
    %847 = vmatpush1.bf16.msra.mxu0 0
    %848 = vmatprep.subr.bf16.mxu0 0
    %849 = vmatpush1.bf16.msra.mxu0 0
    %850 = vmatprep.subr.bf16.mxu0 0
    %851 = vmatpush1.bf16.msra.mxu0 0
    %852 = vmatprep.subr.bf16.mxu0 0
    %853 = vmatpush1.bf16.msra.mxu0 0
    %854 = vmatprep.subr.bf16.mxu0 0
    %855 = vmatpush1.bf16.msra.mxu0 %v838
    %856 = vmatprep.subr.bf16.mxu0 0
    %857 = vmatpush2.bf16.msra.mxu0 0
    %858 = vmatprep.subr.bf16.mxu0 0
    %859 = vmatpush2.bf16.msra.mxu0 0
    %860 = vmatprep.subr.bf16.mxu0 0
    %861 = vmatpush2.bf16.msra.mxu0 0
    %862 = vmatprep.subr.bf16.mxu0 0
    %863 = vmatpush2.bf16.msra.mxu0 0
    %864 = vmatprep.subr.bf16.mxu0 0
    %865 = vmatpush2.bf16.msra.mxu0 0
    %866 = vmatprep.subr.bf16.mxu0 0
    %867 = vmatpush2.bf16.msra.mxu0 0
    %868 = vmatprep.subr.bf16.mxu0 0
    %869 = vmatpush2.bf16.msra.mxu0 0
    %870 = vmatprep.subr.bf16.mxu0 0
    %871 = vmatpush2.bf16.msra.mxu0 0
    %872 = vmatprep.mubr.bf16.mxu0 0
    %873 = vmatmul.mubr.bf16.gmra.mxu0 %v835
    %v874 = vpop.f32.mrf.mxu0
    %v875 = vadd.f32 0.0, %v874
    %v876 = vpop.f32.mrf.mxu0
    %v877 = vpop.f32.mrf.mxu0
    %v878 = vpop.f32.mrf.mxu0
    %879 = vdwg.mxu0
    %v880 = vadd.f32 %v829, %v875
    %881 = vadd.xlane.f32.xlu0 %v880
    %v882 = vpop.xlane.xlu0 %881
    %v883 = vmul.f32 %v882, 0.0078125
    %v884 = vsub.f32 %v880, %v883
    %v885 = vmul.f32 %v884, %v884
    %886 = vadd.xlane.f32.xlu0 %v885
    %v887 = vpop.xlane.xlu0 %886
    %v888 = vmul.f32 %v887, 0.0078125
    %v889 = vadd.f32 %v888, 1e-05
    %v890 = vrsqrt.pop %v889
    %v891 = vmul.f32 %v890, %v716
    %893 = vset.pattern.permute.xlu0 0
    %894 = vperm.xlu0 %893, %v891
    %v895 = vpop.permute.xlu0 %894
    %v897 = vmul.f32 %v884, %v895
    %899 = vset.pattern.permute.xlu0 0
    %900 = vperm.xlu0 %899, %v718
    %v901 = vpop.permute.xlu0 %900
    %v903 = vadd.f32 %v897, %v901
    %v904 = vmax.f32 %v903, 0.0
    %906 = vrot.lane.b32.xlu0 %v904, 127
    %v907 = vpop.permute.xlu0 %906
    %v909 = vsel %vm100, %v907, 0.0
    %v910 = vmax.f32 %v904, %v909
    %v911 = vpack.c.bf16 %v910, %v910
    %v912 = vld [vmem:[%s6] sm:$0xf]
    %v913 = vld [vmem:[%s6 + $0x4] sm:$0xf]
    %v914 = vld [vmem:[%s6 + $0x8] sm:$0xf]
    %v915 = vld [vmem:[%s6 + $0xc] sm:$0xf]
    %v916 = vld [vmem:[%s6 + $0x10] sm:$0xf]
    %v917 = vld [vmem:[%s6 + $0x14] sm:$0xf]
    %v918 = vld [vmem:[%s6 + $0x18] sm:$0xf]
    %v919 = vld [vmem:[%s6 + $0x1c] sm:$0xf]
    %v920 = vld [vmem:[%s6 + $0x20] sm:$0xf]
    %v921 = vld [vmem:[%s6 + $0x24] sm:$0xf]
    %v922 = vld [vmem:[%s6 + $0x28] sm:$0xf]
    %v923 = vld [vmem:[%s6 + $0x2c] sm:$0xf]
    %v924 = vld [vmem:[%s6 + $0x30] sm:$0xf]
    %v925 = vld [vmem:[%s6 + $0x34] sm:$0xf]
    %v926 = vld [vmem:[%s6 + $0x38] sm:$0xf]
    %v927 = vld [vmem:[%s6 + $0x3c] sm:$0xf]
    %v944 = vunpack.c.l.b16 %v912
    %v945 = vunpack.c.l.b16 %v913
    %v946 = vunpack.c.l.b16 %v914
    %v947 = vunpack.c.l.b16 %v915
    %v948 = vunpack.c.l.b16 %v916
    %v949 = vunpack.c.l.b16 %v917
    %v950 = vunpack.c.l.b16 %v918
    %v951 = vunpack.c.l.b16 %v919
    %v952 = vunpack.c.l.b16 %v920
    %v953 = vunpack.c.l.b16 %v921
    %v954 = vunpack.c.l.b16 %v922
    %v955 = vunpack.c.l.b16 %v923
    %v956 = vunpack.c.l.b16 %v924
    %v957 = vunpack.c.l.b16 %v925
    %v958 = vunpack.c.l.b16 %v926
    %v959 = vunpack.c.l.b16 %v927
    %v960 = vpack.c.b16 %v945, %v944
    %v961 = vpack.c.b16 %v947, %v946
    %v962 = vpack.c.b16 %v949, %v948
    %v963 = vpack.c.b16 %v951, %v950
    %v964 = vpack.c.b16 %v953, %v952
    %v965 = vpack.c.b16 %v955, %v954
    %v966 = vpack.c.b16 %v957, %v956
    %v967 = vpack.c.b16 %v959, %v958
    %976 = vmatprep.subr.bf16.mxu0 0
    %977 = vmatpush1.bf16.msra.mxu0 %v967
    %978 = vmatprep.subr.bf16.mxu0 0
    %979 = vmatpush1.bf16.msra.mxu0 %v966
    %980 = vmatprep.subr.bf16.mxu0 0
    %981 = vmatpush1.bf16.msra.mxu0 %v965
    %982 = vmatprep.subr.bf16.mxu0 0
    %983 = vmatpush1.bf16.msra.mxu0 %v964
    %984 = vmatprep.subr.bf16.mxu0 0
    %985 = vmatpush1.bf16.msra.mxu0 %v963
    %986 = vmatprep.subr.bf16.mxu0 0
    %987 = vmatpush1.bf16.msra.mxu0 %v962
    %988 = vmatprep.subr.bf16.mxu0 0
    %989 = vmatpush1.bf16.msra.mxu0 %v961
    %990 = vmatprep.subr.bf16.mxu0 0
    %991 = vmatpush1.bf16.msra.mxu0 %v960
    %992 = vmatprep.subr.bf16.mxu0 0
    %993 = vmatpush2.bf16.msra.mxu0 0
    %994 = vmatprep.subr.bf16.mxu0 0
    %995 = vmatpush2.bf16.msra.mxu0 0
    %996 = vmatprep.subr.bf16.mxu0 0
    %997 = vmatpush2.bf16.msra.mxu0 0
    %998 = vmatprep.subr.bf16.mxu0 0
    %999 = vmatpush2.bf16.msra.mxu0 0
    %1000 = vmatprep.subr.bf16.mxu0 0
    %1001 = vmatpush2.bf16.msra.mxu0 0
    %1002 = vmatprep.subr.bf16.mxu0 0
    %1003 = vmatpush2.bf16.msra.mxu0 0
    %1004 = vmatprep.subr.bf16.mxu0 0
    %1005 = vmatpush2.bf16.msra.mxu0 0
    %1006 = vmatprep.subr.bf16.mxu0 0
    %1007 = vmatpush2.bf16.msra.mxu0 0
    %1008 = vmatprep.mubr.bf16.mxu0 0
    %1009 = vmatmul.mubr.bf16.gmra.mxu0 %v911
    %v1010 = vpop.f32.mrf.mxu0
    %v1011 = vadd.f32 0.0, %v1010
    %v1012 = vpop.f32.mrf.mxu0
    %v1013 = vpop.f32.mrf.mxu0
    %v1014 = vpop.f32.mrf.mxu0
    %1015 = vdwg.mxu0
    %s1016 = scalar_lea.vmem %s2, 24
    %v1017 = vld [vmem:[%s1016] sm:$0xf]
    %s1018 = scalar_lea.vmem %s2, 28
    %v1019 = vld [vmem:[%s1018] sm:$0xf]
    %s1020 = scalar_lea.vmem %s2, 32
    %v1021 = vld [vmem:[%s1020] sm:$0xf]
    %s1022 = scalar_lea.vmem %s3, 24
    %v1023 = vld [vmem:[%s1022] sm:$0xff]
    %s1024 = scalar_lea.vmem %s4, 24
    %v1025 = vld [vmem:[%s1024] sm:$0xff]
    %v1026 = vand.u32 %v48, 31
    %v1027 = vpack.c.bf16 %v1011, %v1011
    %vm1028 = vcmp.eq.s32.totalorder %v1026, 0
    %1030 = vrot.lane.b32.xlu0 %v1027, 1
    %v1031 = vpop.permute.xlu0 %1030
    %v1033 = vsel %vm68, 0, %v1031
    %v1035 = vsel %vm1028, 1, 0
    %vm1036 = vcmp.eq.s32.totalorder %v1035, 1
    %vm1037 = vmpackc.low %vm1036, %vm1036
    %v1038 = vsel %vm1037, 0, %v1033
    %vm1039 = vcmp.eq.s32.totalorder %v1026, 31
    %1040 = vrot.lane.b32.xlu0 %v1027, 127
    %v1041 = vpop.permute.xlu0 %1040
    %vm1042 = vcmask 515072
    %v1044 = vsel %vm1042, %v1041, 0
    %v1046 = vsel %vm1039, 1, 0
    %vm1047 = vcmp.eq.s32.totalorder %v1046, 1
    %vm1048 = vmpackc.low %vm1047, %vm1047
    %v1049 = vsel %vm1048, 0, %v1044
    %v1051 = vsel %vm342, %v1019, 0
    %v1054 = vsel %vm346, %v1027, 0
    %1056 = vmatprep.subr.bf16.mxu0 0
    %1057 = vmatpush1.bf16.msra.mxu0 0
    %1058 = vmatprep.subr.bf16.mxu0 0
    %1059 = vmatpush1.bf16.msra.mxu0 0
    %1060 = vmatprep.subr.bf16.mxu0 0
    %1061 = vmatpush1.bf16.msra.mxu0 0
    %1062 = vmatprep.subr.bf16.mxu0 0
    %1063 = vmatpush1.bf16.msra.mxu0 0
    %1064 = vmatprep.subr.bf16.mxu0 0
    %1065 = vmatpush1.bf16.msra.mxu0 0
    %1066 = vmatprep.subr.bf16.mxu0 0
    %1067 = vmatpush1.bf16.msra.mxu0 0
    %1068 = vmatprep.subr.bf16.mxu0 0
    %1069 = vmatpush1.bf16.msra.mxu0 0
    %1070 = vmatprep.subr.bf16.mxu0 0
    %1071 = vmatpush1.bf16.msra.mxu0 %v1054
    %1072 = vmatprep.subr.bf16.mxu0 0
    %1073 = vmatpush2.bf16.msra.mxu0 0
    %1074 = vmatprep.subr.bf16.mxu0 0
    %1075 = vmatpush2.bf16.msra.mxu0 0
    %1076 = vmatprep.subr.bf16.mxu0 0
    %1077 = vmatpush2.bf16.msra.mxu0 0
    %1078 = vmatprep.subr.bf16.mxu0 0
    %1079 = vmatpush2.bf16.msra.mxu0 0
    %1080 = vmatprep.subr.bf16.mxu0 0
    %1081 = vmatpush2.bf16.msra.mxu0 0
    %1082 = vmatprep.subr.bf16.mxu0 0
    %1083 = vmatpush2.bf16.msra.mxu0 0
    %1084 = vmatprep.subr.bf16.mxu0 0
    %1085 = vmatpush2.bf16.msra.mxu0 0
    %1086 = vmatprep.subr.bf16.mxu0 0
    %1087 = vmatpush2.bf16.msra.mxu0 0
    %1088 = vmatprep.mubr.bf16.mxu0 0
    %1089 = vmatmul.mubr.bf16.gmra.mxu0 %v1051
    %v1090 = vpop.f32.mrf.mxu0
    %v1091 = vadd.f32 0.0, %v1090
    %v1092 = vpop.f32.mrf.mxu0
    %v1093 = vpop.f32.mrf.mxu0
    %v1094 = vpop.f32.mrf.mxu0
    %1095 = vdwg.mxu0
    %v1097 = vsel %vm342, %v1017, 0
    %v1100 = vsel %vm346, %v1038, 0
    %1102 = vmatprep.subr.bf16.mxu0 0
    %1103 = vmatpush1.bf16.msra.mxu0 0
    %1104 = vmatprep.subr.bf16.mxu0 0
    %1105 = vmatpush1.bf16.msra.mxu0 0
    %1106 = vmatprep.subr.bf16.mxu0 0
    %1107 = vmatpush1.bf16.msra.mxu0 0
    %1108 = vmatprep.subr.bf16.mxu0 0
    %1109 = vmatpush1.bf16.msra.mxu0 0
    %1110 = vmatprep.subr.bf16.mxu0 0
    %1111 = vmatpush1.bf16.msra.mxu0 0
    %1112 = vmatprep.subr.bf16.mxu0 0
    %1113 = vmatpush1.bf16.msra.mxu0 0
    %1114 = vmatprep.subr.bf16.mxu0 0
    %1115 = vmatpush1.bf16.msra.mxu0 0
    %1116 = vmatprep.subr.bf16.mxu0 0
    %1117 = vmatpush1.bf16.msra.mxu0 %v1100
    %1118 = vmatprep.subr.bf16.mxu0 0
    %1119 = vmatpush2.bf16.msra.mxu0 0
    %1120 = vmatprep.subr.bf16.mxu0 0
    %1121 = vmatpush2.bf16.msra.mxu0 0
    %1122 = vmatprep.subr.bf16.mxu0 0
    %1123 = vmatpush2.bf16.msra.mxu0 0
    %1124 = vmatprep.subr.bf16.mxu0 0
    %1125 = vmatpush2.bf16.msra.mxu0 0
    %1126 = vmatprep.subr.bf16.mxu0 0
    %1127 = vmatpush2.bf16.msra.mxu0 0
    %1128 = vmatprep.subr.bf16.mxu0 0
    %1129 = vmatpush2.bf16.msra.mxu0 0
    %1130 = vmatprep.subr.bf16.mxu0 0
    %1131 = vmatpush2.bf16.msra.mxu0 0
    %1132 = vmatprep.subr.bf16.mxu0 0
    %1133 = vmatpush2.bf16.msra.mxu0 0
    %1134 = vmatprep.mubr.bf16.mxu0 0
    %1135 = vmatmul.mubr.bf16.gmra.mxu0 %v1097
    %v1136 = vpop.f32.mrf.mxu0
    %v1137 = vadd.f32 %v1091, %v1136
    %v1138 = vpop.f32.mrf.mxu0
    %v1139 = vpop.f32.mrf.mxu0
    %v1140 = vpop.f32.mrf.mxu0
    %1141 = vdwg.mxu0
    %v1143 = vsel %vm342, %v1021, 0
    %v1146 = vsel %vm346, %v1049, 0
    %1148 = vmatprep.subr.bf16.mxu0 0
    %1149 = vmatpush1.bf16.msra.mxu0 0
    %1150 = vmatprep.subr.bf16.mxu0 0
    %1151 = vmatpush1.bf16.msra.mxu0 0
    %1152 = vmatprep.subr.bf16.mxu0 0
    %1153 = vmatpush1.bf16.msra.mxu0 0
    %1154 = vmatprep.subr.bf16.mxu0 0
    %1155 = vmatpush1.bf16.msra.mxu0 0
    %1156 = vmatprep.subr.bf16.mxu0 0
    %1157 = vmatpush1.bf16.msra.mxu0 0
    %1158 = vmatprep.subr.bf16.mxu0 0
    %1159 = vmatpush1.bf16.msra.mxu0 0
    %1160 = vmatprep.subr.bf16.mxu0 0
    %1161 = vmatpush1.bf16.msra.mxu0 0
    %1162 = vmatprep.subr.bf16.mxu0 0
    %1163 = vmatpush1.bf16.msra.mxu0 %v1146
    %1164 = vmatprep.subr.bf16.mxu0 0
    %1165 = vmatpush2.bf16.msra.mxu0 0
    %1166 = vmatprep.subr.bf16.mxu0 0
    %1167 = vmatpush2.bf16.msra.mxu0 0
    %1168 = vmatprep.subr.bf16.mxu0 0
    %1169 = vmatpush2.bf16.msra.mxu0 0
    %1170 = vmatprep.subr.bf16.mxu0 0
    %1171 = vmatpush2.bf16.msra.mxu0 0
    %1172 = vmatprep.subr.bf16.mxu0 0
    %1173 = vmatpush2.bf16.msra.mxu0 0
    %1174 = vmatprep.subr.bf16.mxu0 0
    %1175 = vmatpush2.bf16.msra.mxu0 0
    %1176 = vmatprep.subr.bf16.mxu0 0
    %1177 = vmatpush2.bf16.msra.mxu0 0
    %1178 = vmatprep.subr.bf16.mxu0 0
    %1179 = vmatpush2.bf16.msra.mxu0 0
    %1180 = vmatprep.mubr.bf16.mxu0 0
    %1181 = vmatmul.mubr.bf16.gmra.mxu0 %v1143
    %v1182 = vpop.f32.mrf.mxu0
    %v1183 = vadd.f32 0.0, %v1182
    %v1184 = vpop.f32.mrf.mxu0
    %v1185 = vpop.f32.mrf.mxu0
    %v1186 = vpop.f32.mrf.mxu0
    %1187 = vdwg.mxu0
    %v1188 = vadd.f32 %v1137, %v1183
    %vm1189 = vcmask 523264
    %v1190 = vsel %vm1189, %v1188, 0.0
    %1191 = vadd.xlane.f32.xlu0 %v1190
    %v1192 = vpop.xlane.xlu0 %1191
    %v1193 = vmul.f32 %v1192, 0.015625
    %v1194 = vsub.f32 %v1188, %v1193
    %v1195 = vmul.f32 %v1194, %v1194
    %v1196 = vsel %vm1189, %v1195, 0.0
    %1197 = vadd.xlane.f32.xlu0 %v1196
    %v1198 = vpop.xlane.xlu0 %1197
    %v1199 = vmul.f32 %v1198, 0.015625
    %v1200 = vadd.f32 %v1199, 1e-05
    %v1201 = vrsqrt.pop %v1200
    %v1202 = vmul.f32 %v1201, %v1023
    %1204 = vset.pattern.permute.xlu0 0
    %1205 = vperm.xlu0 %1204, %v1202
    %v1206 = vpop.permute.xlu0 %1205
    %v1208 = vmul.f32 %v1194, %v1206
    %1210 = vset.pattern.permute.xlu0 0
    %1211 = vperm.xlu0 %1210, %v1025
    %v1212 = vpop.permute.xlu0 %1211
    %v1214 = vadd.f32 %v1208, %v1212
    %v1215 = vmax.f32 %v1214, 0.0
    %1217 = vrot.lane.b32.xlu0 %v1215, 127
    %v1218 = vpop.permute.xlu0 %1217
    %v1220 = vsel %vm1042, %v1218, 0.0
    %v1221 = vmax.f32 %v1215, %v1220
    %v1222 = vpack.c.bf16 %v1221, %v1221
    %v1223 = vld [vmem:[%s7] sm:$0xf]
    %v1224 = vld [vmem:[%s7 + $0x4] sm:$0xf]
    %v1225 = vld [vmem:[%s7 + $0x8] sm:$0xf]
    %v1226 = vld [vmem:[%s7 + $0xc] sm:$0xf]
    %v1227 = vld [vmem:[%s7 + $0x10] sm:$0xf]
    %v1228 = vld [vmem:[%s7 + $0x14] sm:$0xf]
    %v1229 = vld [vmem:[%s7 + $0x18] sm:$0xf]
    %v1230 = vld [vmem:[%s7 + $0x1c] sm:$0xf]
    %v1239 = vunpack.c.l.b16 %v1223
    %v1240 = vunpack.c.l.b16 %v1224
    %v1241 = vunpack.c.l.b16 %v1225
    %v1242 = vunpack.c.l.b16 %v1226
    %v1243 = vunpack.c.l.b16 %v1227
    %v1244 = vunpack.c.l.b16 %v1228
    %v1245 = vunpack.c.l.b16 %v1229
    %v1246 = vunpack.c.l.b16 %v1230
    %v1247 = vpack.c.b16 %v1240, %v1239
    %v1248 = vpack.c.b16 %v1242, %v1241
    %v1249 = vpack.c.b16 %v1244, %v1243
    %v1250 = vpack.c.b16 %v1246, %v1245
    %v1256 = vsel %vm1189, %v1222, 0
    %1258 = vmatprep.subr.bf16.mxu0 0
    %1259 = vmatpush1.bf16.msra.mxu0 0
    %1260 = vmatprep.subr.bf16.mxu0 0
    %1261 = vmatpush1.bf16.msra.mxu0 0
    %1262 = vmatprep.subr.bf16.mxu0 0
    %1263 = vmatpush1.bf16.msra.mxu0 0
    %1264 = vmatprep.subr.bf16.mxu0 0
    %1265 = vmatpush1.bf16.msra.mxu0 0
    %1266 = vmatprep.subr.bf16.mxu0 0
    %1267 = vmatpush1.bf16.msra.mxu0 %v1250
    %1268 = vmatprep.subr.bf16.mxu0 0
    %1269 = vmatpush1.bf16.msra.mxu0 %v1249
    %1270 = vmatprep.subr.bf16.mxu0 0
    %1271 = vmatpush1.bf16.msra.mxu0 %v1248
    %1272 = vmatprep.subr.bf16.mxu0 0
    %1273 = vmatpush1.bf16.msra.mxu0 %v1247
    %1274 = vmatprep.subr.bf16.mxu0 0
    %1275 = vmatpush2.bf16.msra.mxu0 0
    %1276 = vmatprep.subr.bf16.mxu0 0
    %1277 = vmatpush2.bf16.msra.mxu0 0
    %1278 = vmatprep.subr.bf16.mxu0 0
    %1279 = vmatpush2.bf16.msra.mxu0 0
    %1280 = vmatprep.subr.bf16.mxu0 0
    %1281 = vmatpush2.bf16.msra.mxu0 0
    %1282 = vmatprep.subr.bf16.mxu0 0
    %1283 = vmatpush2.bf16.msra.mxu0 0
    %1284 = vmatprep.subr.bf16.mxu0 0
    %1285 = vmatpush2.bf16.msra.mxu0 0
    %1286 = vmatprep.subr.bf16.mxu0 0
    %1287 = vmatpush2.bf16.msra.mxu0 0
    %1288 = vmatprep.subr.bf16.mxu0 0
    %1289 = vmatpush2.bf16.msra.mxu0 0
    %1290 = vmatprep.mubr.bf16.mxu0 0
    %1291 = vmatmul.mubr.bf16.gmra.mxu0 %v1256
    %v1292 = vpop.f32.mrf.mxu0
    %v1293 = vadd.f32 0.0, %v1292
    %v1294 = vpop.f32.mrf.mxu0
    %v1295 = vpop.f32.mrf.mxu0
    %v1296 = vpop.f32.mrf.mxu0
    %1297 = vdwg.mxu0
    %s1298 = scalar_lea.vmem %s2, 36
    %v1299 = vld [vmem:[%s1298] sm:$0xf]
    %s1300 = scalar_lea.vmem %s2, 40
    %v1301 = vld [vmem:[%s1300] sm:$0xf]
    %s1302 = scalar_lea.vmem %s2, 44
    %v1303 = vld [vmem:[%s1302] sm:$0xf]
    %s1304 = scalar_lea.vmem %s3, 32
    %v1305 = vld [vmem:[%s1304] sm:$0xff]
    %s1306 = scalar_lea.vmem %s4, 32
    %v1307 = vld [vmem:[%s1306] sm:$0xff]
    %v1308 = vand.u32 %v48, 15
    %v1309 = vpack.c.bf16 %v1293, %v1293
    %vm1310 = vcmp.eq.s32.totalorder %v1308, 0
    %1312 = vrot.lane.b32.xlu0 %v1309, 1
    %v1313 = vpop.permute.xlu0 %1312
    %v1315 = vsel %vm68, 0, %v1313
    %v1317 = vsel %vm1310, 1, 0
    %vm1318 = vcmp.eq.s32.totalorder %v1317, 1
    %vm1319 = vmpackc.low %vm1318, %vm1318
    %v1320 = vsel %vm1319, 0, %v1315
    %vm1321 = vcmp.eq.s32.totalorder %v1308, 15
    %1322 = vrot.lane.b32.xlu0 %v1309, 127
    %v1323 = vpop.permute.xlu0 %1322
    %vm1324 = vcmask 252928
    %v1326 = vsel %vm1324, %v1323, 0
    %v1328 = vsel %vm1321, 1, 0
    %vm1329 = vcmp.eq.s32.totalorder %v1328, 1
    %vm1330 = vmpackc.low %vm1329, %vm1329
    %v1331 = vsel %vm1330, 0, %v1326
    %v1333 = vsel %vm342, %v1301, 0
    %v1336 = vsel %vm346, %v1309, 0
    %1338 = vmatprep.subr.bf16.mxu0 0
    %1339 = vmatpush1.bf16.msra.mxu0 0
    %1340 = vmatprep.subr.bf16.mxu0 0
    %1341 = vmatpush1.bf16.msra.mxu0 0
    %1342 = vmatprep.subr.bf16.mxu0 0
    %1343 = vmatpush1.bf16.msra.mxu0 0
    %1344 = vmatprep.subr.bf16.mxu0 0
    %1345 = vmatpush1.bf16.msra.mxu0 0
    %1346 = vmatprep.subr.bf16.mxu0 0
    %1347 = vmatpush1.bf16.msra.mxu0 0
    %1348 = vmatprep.subr.bf16.mxu0 0
    %1349 = vmatpush1.bf16.msra.mxu0 0
    %1350 = vmatprep.subr.bf16.mxu0 0
    %1351 = vmatpush1.bf16.msra.mxu0 0
    %1352 = vmatprep.subr.bf16.mxu0 0
    %1353 = vmatpush1.bf16.msra.mxu0 %v1336
    %1354 = vmatprep.subr.bf16.mxu0 0
    %1355 = vmatpush2.bf16.msra.mxu0 0
    %1356 = vmatprep.subr.bf16.mxu0 0
    %1357 = vmatpush2.bf16.msra.mxu0 0
    %1358 = vmatprep.subr.bf16.mxu0 0
    %1359 = vmatpush2.bf16.msra.mxu0 0
    %1360 = vmatprep.subr.bf16.mxu0 0
    %1361 = vmatpush2.bf16.msra.mxu0 0
    %1362 = vmatprep.subr.bf16.mxu0 0
    %1363 = vmatpush2.bf16.msra.mxu0 0
    %1364 = vmatprep.subr.bf16.mxu0 0
    %1365 = vmatpush2.bf16.msra.mxu0 0
    %1366 = vmatprep.subr.bf16.mxu0 0
    %1367 = vmatpush2.bf16.msra.mxu0 0
    %1368 = vmatprep.subr.bf16.mxu0 0
    %1369 = vmatpush2.bf16.msra.mxu0 0
    %1370 = vmatprep.mubr.bf16.mxu0 0
    %1371 = vmatmul.mubr.bf16.gmra.mxu0 %v1333
    %v1372 = vpop.f32.mrf.mxu0
    %v1373 = vadd.f32 0.0, %v1372
    %v1374 = vpop.f32.mrf.mxu0
    %v1375 = vpop.f32.mrf.mxu0
    %v1376 = vpop.f32.mrf.mxu0
    %1377 = vdwg.mxu0
    %v1379 = vsel %vm342, %v1299, 0
    %v1382 = vsel %vm346, %v1320, 0
    %1384 = vmatprep.subr.bf16.mxu0 0
    %1385 = vmatpush1.bf16.msra.mxu0 0
    %1386 = vmatprep.subr.bf16.mxu0 0
    %1387 = vmatpush1.bf16.msra.mxu0 0
    %1388 = vmatprep.subr.bf16.mxu0 0
    %1389 = vmatpush1.bf16.msra.mxu0 0
    %1390 = vmatprep.subr.bf16.mxu0 0
    %1391 = vmatpush1.bf16.msra.mxu0 0
    %1392 = vmatprep.subr.bf16.mxu0 0
    %1393 = vmatpush1.bf16.msra.mxu0 0
    %1394 = vmatprep.subr.bf16.mxu0 0
    %1395 = vmatpush1.bf16.msra.mxu0 0
    %1396 = vmatprep.subr.bf16.mxu0 0
    %1397 = vmatpush1.bf16.msra.mxu0 0
    %1398 = vmatprep.subr.bf16.mxu0 0
    %1399 = vmatpush1.bf16.msra.mxu0 %v1382
    %1400 = vmatprep.subr.bf16.mxu0 0
    %1401 = vmatpush2.bf16.msra.mxu0 0
    %1402 = vmatprep.subr.bf16.mxu0 0
    %1403 = vmatpush2.bf16.msra.mxu0 0
    %1404 = vmatprep.subr.bf16.mxu0 0
    %1405 = vmatpush2.bf16.msra.mxu0 0
    %1406 = vmatprep.subr.bf16.mxu0 0
    %1407 = vmatpush2.bf16.msra.mxu0 0
    %1408 = vmatprep.subr.bf16.mxu0 0
    %1409 = vmatpush2.bf16.msra.mxu0 0
    %1410 = vmatprep.subr.bf16.mxu0 0
    %1411 = vmatpush2.bf16.msra.mxu0 0
    %1412 = vmatprep.subr.bf16.mxu0 0
    %1413 = vmatpush2.bf16.msra.mxu0 0
    %1414 = vmatprep.subr.bf16.mxu0 0
    %1415 = vmatpush2.bf16.msra.mxu0 0
    %1416 = vmatprep.mubr.bf16.mxu0 0
    %1417 = vmatmul.mubr.bf16.gmra.mxu0 %v1379
    %v1418 = vpop.f32.mrf.mxu0
    %v1419 = vadd.f32 %v1373, %v1418
    %v1420 = vpop.f32.mrf.mxu0
    %v1421 = vpop.f32.mrf.mxu0
    %v1422 = vpop.f32.mrf.mxu0
    %1423 = vdwg.mxu0
    %v1425 = vsel %vm342, %v1303, 0
    %v1428 = vsel %vm346, %v1331, 0
    %1430 = vmatprep.subr.bf16.mxu0 0
    %1431 = vmatpush1.bf16.msra.mxu0 0
    %1432 = vmatprep.subr.bf16.mxu0 0
    %1433 = vmatpush1.bf16.msra.mxu0 0
    %1434 = vmatprep.subr.bf16.mxu0 0
    %1435 = vmatpush1.bf16.msra.mxu0 0
    %1436 = vmatprep.subr.bf16.mxu0 0
    %1437 = vmatpush1.bf16.msra.mxu0 0
    %1438 = vmatprep.subr.bf16.mxu0 0
    %1439 = vmatpush1.bf16.msra.mxu0 0
    %1440 = vmatprep.subr.bf16.mxu0 0
    %1441 = vmatpush1.bf16.msra.mxu0 0
    %1442 = vmatprep.subr.bf16.mxu0 0
    %1443 = vmatpush1.bf16.msra.mxu0 0
    %1444 = vmatprep.subr.bf16.mxu0 0
    %1445 = vmatpush1.bf16.msra.mxu0 %v1428
    %1446 = vmatprep.subr.bf16.mxu0 0
    %1447 = vmatpush2.bf16.msra.mxu0 0
    %1448 = vmatprep.subr.bf16.mxu0 0
    %1449 = vmatpush2.bf16.msra.mxu0 0
    %1450 = vmatprep.subr.bf16.mxu0 0
    %1451 = vmatpush2.bf16.msra.mxu0 0
    %1452 = vmatprep.subr.bf16.mxu0 0
    %1453 = vmatpush2.bf16.msra.mxu0 0
    %1454 = vmatprep.subr.bf16.mxu0 0
    %1455 = vmatpush2.bf16.msra.mxu0 0
    %1456 = vmatprep.subr.bf16.mxu0 0
    %1457 = vmatpush2.bf16.msra.mxu0 0
    %1458 = vmatprep.subr.bf16.mxu0 0
    %1459 = vmatpush2.bf16.msra.mxu0 0
    %1460 = vmatprep.subr.bf16.mxu0 0
    %1461 = vmatpush2.bf16.msra.mxu0 0
    %1462 = vmatprep.mubr.bf16.mxu0 0
    %1463 = vmatmul.mubr.bf16.gmra.mxu0 %v1425
    %v1464 = vpop.f32.mrf.mxu0
    %v1465 = vadd.f32 0.0, %v1464
    %v1466 = vpop.f32.mrf.mxu0
    %v1467 = vpop.f32.mrf.mxu0
    %v1468 = vpop.f32.mrf.mxu0
    %1469 = vdwg.mxu0
    %v1470 = vadd.f32 %v1419, %v1465
    %vm1471 = vcmask 261120
    %v1472 = vsel %vm1471, %v1470, 0.0
    %1473 = vadd.xlane.f32.xlu0 %v1472
    %v1474 = vpop.xlane.xlu0 %1473
    %v1475 = vmul.f32 %v1474, 0.03125
    %v1476 = vsub.f32 %v1470, %v1475
    %v1477 = vmul.f32 %v1476, %v1476
    %v1478 = vsel %vm1471, %v1477, 0.0
    %1479 = vadd.xlane.f32.xlu0 %v1478
    %v1480 = vpop.xlane.xlu0 %1479
    %v1481 = vmul.f32 %v1480, 0.03125
    %v1482 = vadd.f32 %v1481, 1e-05
    %v1483 = vrsqrt.pop %v1482
    %v1484 = vmul.f32 %v1483, %v1305
    %1486 = vset.pattern.permute.xlu0 0
    %1487 = vperm.xlu0 %1486, %v1484
    %v1488 = vpop.permute.xlu0 %1487
    %v1490 = vmul.f32 %v1476, %v1488
    %1492 = vset.pattern.permute.xlu0 0
    %1493 = vperm.xlu0 %1492, %v1307
    %v1494 = vpop.permute.xlu0 %1493
    %v1496 = vadd.f32 %v1490, %v1494
    %v1497 = vmax.f32 %v1496, 0.0
    %1499 = vrot.lane.b32.xlu0 %v1497, 127
    %v1500 = vpop.permute.xlu0 %1499
    %v1502 = vsel %vm1324, %v1500, 0.0
    %v1503 = vmax.f32 %v1497, %v1502
    %v1504 = vpack.c.bf16 %v1503, %v1503
    %v1505 = vld [vmem:[%s8] sm:$0xf]
    %v1506 = vld [vmem:[%s8 + $0x4] sm:$0xf]
    %v1507 = vld [vmem:[%s8 + $0x8] sm:$0xf]
    %v1508 = vld [vmem:[%s8 + $0xc] sm:$0xf]
    %v1513 = vunpack.c.l.b16 %v1505
    %v1514 = vunpack.c.l.b16 %v1506
    %v1515 = vunpack.c.l.b16 %v1507
    %v1516 = vunpack.c.l.b16 %v1508
    %v1517 = vpack.c.b16 %v1514, %v1513
    %v1518 = vpack.c.b16 %v1516, %v1515
    %v1522 = vsel %vm1471, %v1504, 0
    %1524 = vmatprep.subr.bf16.mxu0 0
    %1525 = vmatpush1.bf16.msra.mxu0 0
    %1526 = vmatprep.subr.bf16.mxu0 0
    %1527 = vmatpush1.bf16.msra.mxu0 0
    %1528 = vmatprep.subr.bf16.mxu0 0
    %1529 = vmatpush1.bf16.msra.mxu0 0
    %1530 = vmatprep.subr.bf16.mxu0 0
    %1531 = vmatpush1.bf16.msra.mxu0 0
    %1532 = vmatprep.subr.bf16.mxu0 0
    %1533 = vmatpush1.bf16.msra.mxu0 0
    %1534 = vmatprep.subr.bf16.mxu0 0
    %1535 = vmatpush1.bf16.msra.mxu0 0
    %1536 = vmatprep.subr.bf16.mxu0 0
    %1537 = vmatpush1.bf16.msra.mxu0 %v1518
    %1538 = vmatprep.subr.bf16.mxu0 0
    %1539 = vmatpush1.bf16.msra.mxu0 %v1517
    %1540 = vmatprep.subr.bf16.mxu0 0
    %1541 = vmatpush2.bf16.msra.mxu0 0
    %1542 = vmatprep.subr.bf16.mxu0 0
    %1543 = vmatpush2.bf16.msra.mxu0 0
    %1544 = vmatprep.subr.bf16.mxu0 0
    %1545 = vmatpush2.bf16.msra.mxu0 0
    %1546 = vmatprep.subr.bf16.mxu0 0
    %1547 = vmatpush2.bf16.msra.mxu0 0
    %1548 = vmatprep.subr.bf16.mxu0 0
    %1549 = vmatpush2.bf16.msra.mxu0 0
    %1550 = vmatprep.subr.bf16.mxu0 0
    %1551 = vmatpush2.bf16.msra.mxu0 0
    %1552 = vmatprep.subr.bf16.mxu0 0
    %1553 = vmatpush2.bf16.msra.mxu0 0
    %1554 = vmatprep.subr.bf16.mxu0 0
    %1555 = vmatpush2.bf16.msra.mxu0 0
    %1556 = vmatprep.mubr.bf16.mxu0 0
    %1557 = vmatmul.mubr.bf16.gmra.mxu0 %v1522
    %v1558 = vpop.f32.mrf.mxu0
    %v1559 = vadd.f32 0.0, %v1558
    %v1560 = vpop.f32.mrf.mxu0
    %v1561 = vpop.f32.mrf.mxu0
    %v1562 = vpop.f32.mrf.mxu0
    %1563 = vdwg.mxu0
    %s1564 = scalar_lea.vmem %s2, 48
    %v1565 = vld [vmem:[%s1564] sm:$0xf]
    %s1566 = scalar_lea.vmem %s2, 52
    %v1567 = vld [vmem:[%s1566] sm:$0xf]
    %s1568 = scalar_lea.vmem %s2, 56
    %v1569 = vld [vmem:[%s1568] sm:$0xf]
    %s1570 = scalar_lea.vmem %s3, 40
    %v1571 = vld [vmem:[%s1570] sm:$0xff]
    %s1572 = scalar_lea.vmem %s4, 40
    %v1573 = vld [vmem:[%s1572] sm:$0xff]
    %v1574 = vand.u32 %v48, 7
    %v1575 = vpack.c.bf16 %v1559, %v1559
    %vm1576 = vcmp.eq.s32.totalorder %v1574, 0
    %1578 = vrot.lane.b32.xlu0 %v1575, 1
    %v1579 = vpop.permute.xlu0 %1578
    %v1581 = vsel %vm68, 0, %v1579
    %v1583 = vsel %vm1576, 1, 0
    %vm1584 = vcmp.eq.s32.totalorder %v1583, 1
    %vm1585 = vmpackc.low %vm1584, %vm1584
    %v1586 = vsel %vm1585, 0, %v1581
    %vm1587 = vcmp.eq.s32.totalorder %v1574, 7
    %1588 = vrot.lane.b32.xlu0 %v1575, 127
    %v1589 = vpop.permute.xlu0 %1588
    %vm1590 = vcmask 121856
    %v1592 = vsel %vm1590, %v1589, 0
    %v1594 = vsel %vm1587, 1, 0
    %vm1595 = vcmp.eq.s32.totalorder %v1594, 1
    %vm1596 = vmpackc.low %vm1595, %vm1595
    %v1597 = vsel %vm1596, 0, %v1592
    %v1599 = vsel %vm342, %v1567, 0
    %v1602 = vsel %vm346, %v1575, 0
    %1604 = vmatprep.subr.bf16.mxu0 0
    %1605 = vmatpush1.bf16.msra.mxu0 0
    %1606 = vmatprep.subr.bf16.mxu0 0
    %1607 = vmatpush1.bf16.msra.mxu0 0
    %1608 = vmatprep.subr.bf16.mxu0 0
    %1609 = vmatpush1.bf16.msra.mxu0 0
    %1610 = vmatprep.subr.bf16.mxu0 0
    %1611 = vmatpush1.bf16.msra.mxu0 0
    %1612 = vmatprep.subr.bf16.mxu0 0
    %1613 = vmatpush1.bf16.msra.mxu0 0
    %1614 = vmatprep.subr.bf16.mxu0 0
    %1615 = vmatpush1.bf16.msra.mxu0 0
    %1616 = vmatprep.subr.bf16.mxu0 0
    %1617 = vmatpush1.bf16.msra.mxu0 0
    %1618 = vmatprep.subr.bf16.mxu0 0
    %1619 = vmatpush1.bf16.msra.mxu0 %v1602
    %1620 = vmatprep.subr.bf16.mxu0 0
    %1621 = vmatpush2.bf16.msra.mxu0 0
    %1622 = vmatprep.subr.bf16.mxu0 0
    %1623 = vmatpush2.bf16.msra.mxu0 0
    %1624 = vmatprep.subr.bf16.mxu0 0
    %1625 = vmatpush2.bf16.msra.mxu0 0
    %1626 = vmatprep.subr.bf16.mxu0 0
    %1627 = vmatpush2.bf16.msra.mxu0 0
    %1628 = vmatprep.subr.bf16.mxu0 0
    %1629 = vmatpush2.bf16.msra.mxu0 0
    %1630 = vmatprep.subr.bf16.mxu0 0
    %1631 = vmatpush2.bf16.msra.mxu0 0
    %1632 = vmatprep.subr.bf16.mxu0 0
    %1633 = vmatpush2.bf16.msra.mxu0 0
    %1634 = vmatprep.subr.bf16.mxu0 0
    %1635 = vmatpush2.bf16.msra.mxu0 0
    %1636 = vmatprep.mubr.bf16.mxu0 0
    %1637 = vmatmul.mubr.bf16.gmra.mxu0 %v1599
    %v1638 = vpop.f32.mrf.mxu0
    %v1639 = vadd.f32 0.0, %v1638
    %v1640 = vpop.f32.mrf.mxu0
    %v1641 = vpop.f32.mrf.mxu0
    %v1642 = vpop.f32.mrf.mxu0
    %1643 = vdwg.mxu0
    %v1645 = vsel %vm342, %v1565, 0
    %v1648 = vsel %vm346, %v1586, 0
    %1650 = vmatprep.subr.bf16.mxu0 0
    %1651 = vmatpush1.bf16.msra.mxu0 0
    %1652 = vmatprep.subr.bf16.mxu0 0
    %1653 = vmatpush1.bf16.msra.mxu0 0
    %1654 = vmatprep.subr.bf16.mxu0 0
    %1655 = vmatpush1.bf16.msra.mxu0 0
    %1656 = vmatprep.subr.bf16.mxu0 0
    %1657 = vmatpush1.bf16.msra.mxu0 0
    %1658 = vmatprep.subr.bf16.mxu0 0
    %1659 = vmatpush1.bf16.msra.mxu0 0
    %1660 = vmatprep.subr.bf16.mxu0 0
    %1661 = vmatpush1.bf16.msra.mxu0 0
    %1662 = vmatprep.subr.bf16.mxu0 0
    %1663 = vmatpush1.bf16.msra.mxu0 0
    %1664 = vmatprep.subr.bf16.mxu0 0
    %1665 = vmatpush1.bf16.msra.mxu0 %v1648
    %1666 = vmatprep.subr.bf16.mxu0 0
    %1667 = vmatpush2.bf16.msra.mxu0 0
    %1668 = vmatprep.subr.bf16.mxu0 0
    %1669 = vmatpush2.bf16.msra.mxu0 0
    %1670 = vmatprep.subr.bf16.mxu0 0
    %1671 = vmatpush2.bf16.msra.mxu0 0
    %1672 = vmatprep.subr.bf16.mxu0 0
    %1673 = vmatpush2.bf16.msra.mxu0 0
    %1674 = vmatprep.subr.bf16.mxu0 0
    %1675 = vmatpush2.bf16.msra.mxu0 0
    %1676 = vmatprep.subr.bf16.mxu0 0
    %1677 = vmatpush2.bf16.msra.mxu0 0
    %1678 = vmatprep.subr.bf16.mxu0 0
    %1679 = vmatpush2.bf16.msra.mxu0 0
    %1680 = vmatprep.subr.bf16.mxu0 0
    %1681 = vmatpush2.bf16.msra.mxu0 0
    %1682 = vmatprep.mubr.bf16.mxu0 0
    %1683 = vmatmul.mubr.bf16.gmra.mxu0 %v1645
    %v1684 = vpop.f32.mrf.mxu0
    %v1685 = vadd.f32 %v1639, %v1684
    %v1686 = vpop.f32.mrf.mxu0
    %v1687 = vpop.f32.mrf.mxu0
    %v1688 = vpop.f32.mrf.mxu0
    %1689 = vdwg.mxu0
    %v1691 = vsel %vm342, %v1569, 0
    %v1694 = vsel %vm346, %v1597, 0
    %1696 = vmatprep.subr.bf16.mxu0 0
    %1697 = vmatpush1.bf16.msra.mxu0 0
    %1698 = vmatprep.subr.bf16.mxu0 0
    %1699 = vmatpush1.bf16.msra.mxu0 0
    %1700 = vmatprep.subr.bf16.mxu0 0
    %1701 = vmatpush1.bf16.msra.mxu0 0
    %1702 = vmatprep.subr.bf16.mxu0 0
    %1703 = vmatpush1.bf16.msra.mxu0 0
    %1704 = vmatprep.subr.bf16.mxu0 0
    %1705 = vmatpush1.bf16.msra.mxu0 0
    %1706 = vmatprep.subr.bf16.mxu0 0
    %1707 = vmatpush1.bf16.msra.mxu0 0
    %1708 = vmatprep.subr.bf16.mxu0 0
    %1709 = vmatpush1.bf16.msra.mxu0 0
    %1710 = vmatprep.subr.bf16.mxu0 0
    %1711 = vmatpush1.bf16.msra.mxu0 %v1694
    %1712 = vmatprep.subr.bf16.mxu0 0
    %1713 = vmatpush2.bf16.msra.mxu0 0
    %1714 = vmatprep.subr.bf16.mxu0 0
    %1715 = vmatpush2.bf16.msra.mxu0 0
    %1716 = vmatprep.subr.bf16.mxu0 0
    %1717 = vmatpush2.bf16.msra.mxu0 0
    %1718 = vmatprep.subr.bf16.mxu0 0
    %1719 = vmatpush2.bf16.msra.mxu0 0
    %1720 = vmatprep.subr.bf16.mxu0 0
    %1721 = vmatpush2.bf16.msra.mxu0 0
    %1722 = vmatprep.subr.bf16.mxu0 0
    %1723 = vmatpush2.bf16.msra.mxu0 0
    %1724 = vmatprep.subr.bf16.mxu0 0
    %1725 = vmatpush2.bf16.msra.mxu0 0
    %1726 = vmatprep.subr.bf16.mxu0 0
    %1727 = vmatpush2.bf16.msra.mxu0 0
    %1728 = vmatprep.mubr.bf16.mxu0 0
    %1729 = vmatmul.mubr.bf16.gmra.mxu0 %v1691
    %v1730 = vpop.f32.mrf.mxu0
    %v1731 = vadd.f32 0.0, %v1730
    %v1732 = vpop.f32.mrf.mxu0
    %v1733 = vpop.f32.mrf.mxu0
    %v1734 = vpop.f32.mrf.mxu0
    %1735 = vdwg.mxu0
    %v1736 = vadd.f32 %v1685, %v1731
    %vm1737 = vcmask 130048
    %v1738 = vsel %vm1737, %v1736, 0.0
    %1739 = vadd.xlane.f32.xlu0 %v1738
    %v1740 = vpop.xlane.xlu0 %1739
    %v1741 = vmul.f32 %v1740, 0.0625
    %v1742 = vsub.f32 %v1736, %v1741
    %v1743 = vmul.f32 %v1742, %v1742
    %v1744 = vsel %vm1737, %v1743, 0.0
    %1745 = vadd.xlane.f32.xlu0 %v1744
    %v1746 = vpop.xlane.xlu0 %1745
    %v1747 = vmul.f32 %v1746, 0.0625
    %v1748 = vadd.f32 %v1747, 1e-05
    %v1749 = vrsqrt.pop %v1748
    %v1750 = vmul.f32 %v1749, %v1571
    %1752 = vset.pattern.permute.xlu0 0
    %1753 = vperm.xlu0 %1752, %v1750
    %v1754 = vpop.permute.xlu0 %1753
    %v1756 = vmul.f32 %v1742, %v1754
    %1758 = vset.pattern.permute.xlu0 0
    %1759 = vperm.xlu0 %1758, %v1573
    %v1760 = vpop.permute.xlu0 %1759
    %v1762 = vadd.f32 %v1756, %v1760
    %v1763 = vmax.f32 %v1762, 0.0
    %1765 = vrot.lane.b32.xlu0 %v1763, 127
    %v1766 = vpop.permute.xlu0 %1765
    %v1768 = vsel %vm1590, %v1766, 0.0
    %v1769 = vmax.f32 %v1763, %v1768
    %v1770 = vpack.c.bf16 %v1769, %v1769
    %v1771 = vld [vmem:[%s9] sm:$0xf]
    %v1772 = vld [vmem:[%s9 + $0x4] sm:$0xf]
    %v1775 = vunpack.c.l.b16 %v1771
    %v1776 = vunpack.c.l.b16 %v1772
    %v1777 = vpack.c.b16 %v1776, %v1775
    %v1780 = vsel %vm1737, %v1770, 0
    %1782 = vmatprep.subr.bf16.mxu0 0
    %1783 = vmatpush1.bf16.msra.mxu0 0
    %1784 = vmatprep.subr.bf16.mxu0 0
    %1785 = vmatpush1.bf16.msra.mxu0 0
    %1786 = vmatprep.subr.bf16.mxu0 0
    %1787 = vmatpush1.bf16.msra.mxu0 0
    %1788 = vmatprep.subr.bf16.mxu0 0
    %1789 = vmatpush1.bf16.msra.mxu0 0
    %1790 = vmatprep.subr.bf16.mxu0 0
    %1791 = vmatpush1.bf16.msra.mxu0 0
    %1792 = vmatprep.subr.bf16.mxu0 0
    %1793 = vmatpush1.bf16.msra.mxu0 0
    %1794 = vmatprep.subr.bf16.mxu0 0
    %1795 = vmatpush1.bf16.msra.mxu0 0
    %1796 = vmatprep.subr.bf16.mxu0 0
    %1797 = vmatpush1.bf16.msra.mxu0 %v1777
    %1798 = vmatprep.subr.bf16.mxu0 0
    %1799 = vmatpush2.bf16.msra.mxu0 0
    %1800 = vmatprep.subr.bf16.mxu0 0
    %1801 = vmatpush2.bf16.msra.mxu0 0
    %1802 = vmatprep.subr.bf16.mxu0 0
    %1803 = vmatpush2.bf16.msra.mxu0 0
    %1804 = vmatprep.subr.bf16.mxu0 0
    %1805 = vmatpush2.bf16.msra.mxu0 0
    %1806 = vmatprep.subr.bf16.mxu0 0
    %1807 = vmatpush2.bf16.msra.mxu0 0
    %1808 = vmatprep.subr.bf16.mxu0 0
    %1809 = vmatpush2.bf16.msra.mxu0 0
    %1810 = vmatprep.subr.bf16.mxu0 0
    %1811 = vmatpush2.bf16.msra.mxu0 0
    %1812 = vmatprep.subr.bf16.mxu0 0
    %1813 = vmatpush2.bf16.msra.mxu0 0
    %1814 = vmatprep.mubr.bf16.mxu0 0
    %1815 = vmatmul.mubr.bf16.gmra.mxu0 %v1780
    %v1816 = vpop.f32.mrf.mxu0
    %v1817 = vadd.f32 0.0, %v1816
    %v1818 = vpop.f32.mrf.mxu0
    %v1819 = vpop.f32.mrf.mxu0
    %v1820 = vpop.f32.mrf.mxu0
    %1821 = vdwg.mxu0
    %s1822 = scalar_lea.vmem %s2, 60
    %v1823 = vld [vmem:[%s1822] sm:$0xf]
    %s1824 = scalar_lea.vmem %s2, 64
    %v1825 = vld [vmem:[%s1824] sm:$0xf]
    %s1826 = scalar_lea.vmem %s2, 68
    %v1827 = vld [vmem:[%s1826] sm:$0xf]
    %s1828 = scalar_lea.vmem %s3, 48
    %v1829 = vld [vmem:[%s1828] sm:$0xff]
    %s1830 = scalar_lea.vmem %s4, 48
    %v1831 = vld [vmem:[%s1830] sm:$0xff]
    %v1832 = vand.u32 %v48, 3
    %v1833 = vpack.c.bf16 %v1817, %v1817
    %vm1834 = vcmp.eq.s32.totalorder %v1832, 0
    %1836 = vrot.lane.b32.xlu0 %v1833, 1
    %v1837 = vpop.permute.xlu0 %1836
    %v1839 = vsel %vm68, 0, %v1837
    %v1841 = vsel %vm1834, 1, 0
    %vm1842 = vcmp.eq.s32.totalorder %v1841, 1
    %vm1843 = vmpackc.low %vm1842, %vm1842
    %v1844 = vsel %vm1843, 0, %v1839
    %vm1845 = vcmp.eq.s32.totalorder %v1832, 3
    %1846 = vrot.lane.b32.xlu0 %v1833, 127
    %v1847 = vpop.permute.xlu0 %1846
    %vm1848 = vcmask 56320
    %v1850 = vsel %vm1848, %v1847, 0
    %v1852 = vsel %vm1845, 1, 0
    %vm1853 = vcmp.eq.s32.totalorder %v1852, 1
    %vm1854 = vmpackc.low %vm1853, %vm1853
    %v1855 = vsel %vm1854, 0, %v1850
    %v1857 = vsel %vm342, %v1825, 0
    %v1860 = vsel %vm346, %v1833, 0
    %1862 = vmatprep.subr.bf16.mxu0 0
    %1863 = vmatpush1.bf16.msra.mxu0 0
    %1864 = vmatprep.subr.bf16.mxu0 0
    %1865 = vmatpush1.bf16.msra.mxu0 0
    %1866 = vmatprep.subr.bf16.mxu0 0
    %1867 = vmatpush1.bf16.msra.mxu0 0
    %1868 = vmatprep.subr.bf16.mxu0 0
    %1869 = vmatpush1.bf16.msra.mxu0 0
    %1870 = vmatprep.subr.bf16.mxu0 0
    %1871 = vmatpush1.bf16.msra.mxu0 0
    %1872 = vmatprep.subr.bf16.mxu0 0
    %1873 = vmatpush1.bf16.msra.mxu0 0
    %1874 = vmatprep.subr.bf16.mxu0 0
    %1875 = vmatpush1.bf16.msra.mxu0 0
    %1876 = vmatprep.subr.bf16.mxu0 0
    %1877 = vmatpush1.bf16.msra.mxu0 %v1860
    %1878 = vmatprep.subr.bf16.mxu0 0
    %1879 = vmatpush2.bf16.msra.mxu0 0
    %1880 = vmatprep.subr.bf16.mxu0 0
    %1881 = vmatpush2.bf16.msra.mxu0 0
    %1882 = vmatprep.subr.bf16.mxu0 0
    %1883 = vmatpush2.bf16.msra.mxu0 0
    %1884 = vmatprep.subr.bf16.mxu0 0
    %1885 = vmatpush2.bf16.msra.mxu0 0
    %1886 = vmatprep.subr.bf16.mxu0 0
    %1887 = vmatpush2.bf16.msra.mxu0 0
    %1888 = vmatprep.subr.bf16.mxu0 0
    %1889 = vmatpush2.bf16.msra.mxu0 0
    %1890 = vmatprep.subr.bf16.mxu0 0
    %1891 = vmatpush2.bf16.msra.mxu0 0
    %1892 = vmatprep.subr.bf16.mxu0 0
    %1893 = vmatpush2.bf16.msra.mxu0 0
    %1894 = vmatprep.mubr.bf16.mxu0 0
    %1895 = vmatmul.mubr.bf16.gmra.mxu0 %v1857
    %v1896 = vpop.f32.mrf.mxu0
    %v1897 = vadd.f32 0.0, %v1896
    %v1898 = vpop.f32.mrf.mxu0
    %v1899 = vpop.f32.mrf.mxu0
    %v1900 = vpop.f32.mrf.mxu0
    %1901 = vdwg.mxu0
    %v1903 = vsel %vm342, %v1823, 0
    %v1906 = vsel %vm346, %v1844, 0
    %1908 = vmatprep.subr.bf16.mxu0 0
    %1909 = vmatpush1.bf16.msra.mxu0 0
    %1910 = vmatprep.subr.bf16.mxu0 0
    %1911 = vmatpush1.bf16.msra.mxu0 0
    %1912 = vmatprep.subr.bf16.mxu0 0
    %1913 = vmatpush1.bf16.msra.mxu0 0
    %1914 = vmatprep.subr.bf16.mxu0 0
    %1915 = vmatpush1.bf16.msra.mxu0 0
    %1916 = vmatprep.subr.bf16.mxu0 0
    %1917 = vmatpush1.bf16.msra.mxu0 0
    %1918 = vmatprep.subr.bf16.mxu0 0
    %1919 = vmatpush1.bf16.msra.mxu0 0
    %1920 = vmatprep.subr.bf16.mxu0 0
    %1921 = vmatpush1.bf16.msra.mxu0 0
    %1922 = vmatprep.subr.bf16.mxu0 0
    %1923 = vmatpush1.bf16.msra.mxu0 %v1906
    %1924 = vmatprep.subr.bf16.mxu0 0
    %1925 = vmatpush2.bf16.msra.mxu0 0
    %1926 = vmatprep.subr.bf16.mxu0 0
    %1927 = vmatpush2.bf16.msra.mxu0 0
    %1928 = vmatprep.subr.bf16.mxu0 0
    %1929 = vmatpush2.bf16.msra.mxu0 0
    %1930 = vmatprep.subr.bf16.mxu0 0
    %1931 = vmatpush2.bf16.msra.mxu0 0
    %1932 = vmatprep.subr.bf16.mxu0 0
    %1933 = vmatpush2.bf16.msra.mxu0 0
    %1934 = vmatprep.subr.bf16.mxu0 0
    %1935 = vmatpush2.bf16.msra.mxu0 0
    %1936 = vmatprep.subr.bf16.mxu0 0
    %1937 = vmatpush2.bf16.msra.mxu0 0
    %1938 = vmatprep.subr.bf16.mxu0 0
    %1939 = vmatpush2.bf16.msra.mxu0 0
    %1940 = vmatprep.mubr.bf16.mxu0 0
    %1941 = vmatmul.mubr.bf16.gmra.mxu0 %v1903
    %v1942 = vpop.f32.mrf.mxu0
    %v1943 = vadd.f32 %v1897, %v1942
    %v1944 = vpop.f32.mrf.mxu0
    %v1945 = vpop.f32.mrf.mxu0
    %v1946 = vpop.f32.mrf.mxu0
    %1947 = vdwg.mxu0
    %v1949 = vsel %vm342, %v1827, 0
    %v1952 = vsel %vm346, %v1855, 0
    %1954 = vmatprep.subr.bf16.mxu0 0
    %1955 = vmatpush1.bf16.msra.mxu0 0
    %1956 = vmatprep.subr.bf16.mxu0 0
    %1957 = vmatpush1.bf16.msra.mxu0 0
    %1958 = vmatprep.subr.bf16.mxu0 0
    %1959 = vmatpush1.bf16.msra.mxu0 0
    %1960 = vmatprep.subr.bf16.mxu0 0
    %1961 = vmatpush1.bf16.msra.mxu0 0
    %1962 = vmatprep.subr.bf16.mxu0 0
    %1963 = vmatpush1.bf16.msra.mxu0 0
    %1964 = vmatprep.subr.bf16.mxu0 0
    %1965 = vmatpush1.bf16.msra.mxu0 0
    %1966 = vmatprep.subr.bf16.mxu0 0
    %1967 = vmatpush1.bf16.msra.mxu0 0
    %1968 = vmatprep.subr.bf16.mxu0 0
    %1969 = vmatpush1.bf16.msra.mxu0 %v1952
    %1970 = vmatprep.subr.bf16.mxu0 0
    %1971 = vmatpush2.bf16.msra.mxu0 0
    %1972 = vmatprep.subr.bf16.mxu0 0
    %1973 = vmatpush2.bf16.msra.mxu0 0
    %1974 = vmatprep.subr.bf16.mxu0 0
    %1975 = vmatpush2.bf16.msra.mxu0 0
    %1976 = vmatprep.subr.bf16.mxu0 0
    %1977 = vmatpush2.bf16.msra.mxu0 0
    %1978 = vmatprep.subr.bf16.mxu0 0
    %1979 = vmatpush2.bf16.msra.mxu0 0
    %1980 = vmatprep.subr.bf16.mxu0 0
    %1981 = vmatpush2.bf16.msra.mxu0 0
    %1982 = vmatprep.subr.bf16.mxu0 0
    %1983 = vmatpush2.bf16.msra.mxu0 0
    %1984 = vmatprep.subr.bf16.mxu0 0
    %1985 = vmatpush2.bf16.msra.mxu0 0
    %1986 = vmatprep.mubr.bf16.mxu0 0
    %1987 = vmatmul.mubr.bf16.gmra.mxu0 %v1949
    %v1988 = vpop.f32.mrf.mxu0
    %v1989 = vadd.f32 0.0, %v1988
    %v1990 = vpop.f32.mrf.mxu0
    %v1991 = vpop.f32.mrf.mxu0
    %v1992 = vpop.f32.mrf.mxu0
    %1993 = vdwg.mxu0
    %v1994 = vadd.f32 %v1943, %v1989
    %v1995 = vsel %vm342, %v1994, 0.0
    %1996 = vadd.xlane.f32.xlu0 %v1995
    %v1997 = vpop.xlane.xlu0 %1996
    %v1998 = vmul.f32 %v1997, 0.125
    %v1999 = vsub.f32 %v1994, %v1998
    %v2000 = vmul.f32 %v1999, %v1999
    %v2001 = vsel %vm342, %v2000, 0.0
    %2002 = vadd.xlane.f32.xlu0 %v2001
    %v2003 = vpop.xlane.xlu0 %2002
    %v2004 = vmul.f32 %v2003, 0.125
    %v2005 = vadd.f32 %v2004, 1e-05
    %v2006 = vrsqrt.pop %v2005
    %v2007 = vmul.f32 %v2006, %v1829
    %2009 = vset.pattern.permute.xlu0 0
    %2010 = vperm.xlu0 %2009, %v2007
    %v2011 = vpop.permute.xlu0 %2010
    %v2013 = vmul.f32 %v1999, %v2011
    %2015 = vset.pattern.permute.xlu0 0
    %2016 = vperm.xlu0 %2015, %v1831
    %v2017 = vpop.permute.xlu0 %2016
    %v2019 = vadd.f32 %v2013, %v2017
    %v2020 = vmax.f32 %v2019, 0.0
    %2022 = vrot.lane.b32.xlu0 %v2020, 4
    %v2023 = vpop.permute.xlu0 %2022
    %2025 = vrot.lane.b32.xlu0 %v2020, 8
    %v2026 = vpop.permute.xlu0 %2025
    %v2028 = vsel %vm122, %v2020, %v2023
    %v2029 = vsel %vm342, %v2028, %v2023
    %vm2030 = vcmask 97280
    %v2031 = vsel %vm2030, %v2029, %v2026
    %v2032 = vadd.f32 %v2031, %v1763
    %s2033 = scalar_lea.vmem %s2, 72
    %v2034 = vld [vmem:[%s2033] sm:$0xf]
    %s2035 = scalar_lea.vmem %s2, 76
    %v2036 = vld [vmem:[%s2035] sm:$0xf]
    %s2037 = scalar_lea.vmem %s2, 80
    %v2038 = vld [vmem:[%s2037] sm:$0xf]
    %s2039 = scalar_lea.vmem %s3, 56
    %v2040 = vld [vmem:[%s2039] sm:$0xff]
    %s2041 = scalar_lea.vmem %s4, 56
    %v2042 = vld [vmem:[%s2041] sm:$0xff]
    %v2043 = vpack.c.bf16 %v2032, %v2032
    %2045 = vrot.lane.b32.xlu0 %v2043, 1
    %v2046 = vpop.permute.xlu0 %2045
    %v2048 = vsel %vm68, 0, %v2046
    %v2050 = vsel %vm1585, 0, %v2048
    %2051 = vrot.lane.b32.xlu0 %v2043, 127
    %v2052 = vpop.permute.xlu0 %2051
    %v2054 = vsel %vm1590, %v2052, 0
    %v2056 = vsel %vm1596, 0, %v2054
    %v2058 = vsel %vm342, %v2036, 0
    %v2061 = vsel %vm346, %v2043, 0
    %2063 = vmatprep.subr.bf16.mxu0 0
    %2064 = vmatpush1.bf16.msra.mxu0 0
    %2065 = vmatprep.subr.bf16.mxu0 0
    %2066 = vmatpush1.bf16.msra.mxu0 0
    %2067 = vmatprep.subr.bf16.mxu0 0
    %2068 = vmatpush1.bf16.msra.mxu0 0
    %2069 = vmatprep.subr.bf16.mxu0 0
    %2070 = vmatpush1.bf16.msra.mxu0 0
    %2071 = vmatprep.subr.bf16.mxu0 0
    %2072 = vmatpush1.bf16.msra.mxu0 0
    %2073 = vmatprep.subr.bf16.mxu0 0
    %2074 = vmatpush1.bf16.msra.mxu0 0
    %2075 = vmatprep.subr.bf16.mxu0 0
    %2076 = vmatpush1.bf16.msra.mxu0 0
    %2077 = vmatprep.subr.bf16.mxu0 0
    %2078 = vmatpush1.bf16.msra.mxu0 %v2061
    %2079 = vmatprep.subr.bf16.mxu0 0
    %2080 = vmatpush2.bf16.msra.mxu0 0
    %2081 = vmatprep.subr.bf16.mxu0 0
    %2082 = vmatpush2.bf16.msra.mxu0 0
    %2083 = vmatprep.subr.bf16.mxu0 0
    %2084 = vmatpush2.bf16.msra.mxu0 0
    %2085 = vmatprep.subr.bf16.mxu0 0
    %2086 = vmatpush2.bf16.msra.mxu0 0
    %2087 = vmatprep.subr.bf16.mxu0 0
    %2088 = vmatpush2.bf16.msra.mxu0 0
    %2089 = vmatprep.subr.bf16.mxu0 0
    %2090 = vmatpush2.bf16.msra.mxu0 0
    %2091 = vmatprep.subr.bf16.mxu0 0
    %2092 = vmatpush2.bf16.msra.mxu0 0
    %2093 = vmatprep.subr.bf16.mxu0 0
    %2094 = vmatpush2.bf16.msra.mxu0 0
    %2095 = vmatprep.mubr.bf16.mxu0 0
    %2096 = vmatmul.mubr.bf16.gmra.mxu0 %v2058
    %v2097 = vpop.f32.mrf.mxu0
    %v2098 = vadd.f32 0.0, %v2097
    %v2099 = vpop.f32.mrf.mxu0
    %v2100 = vpop.f32.mrf.mxu0
    %v2101 = vpop.f32.mrf.mxu0
    %2102 = vdwg.mxu0
    %v2104 = vsel %vm342, %v2034, 0
    %v2107 = vsel %vm346, %v2050, 0
    %2109 = vmatprep.subr.bf16.mxu0 0
    %2110 = vmatpush1.bf16.msra.mxu0 0
    %2111 = vmatprep.subr.bf16.mxu0 0
    %2112 = vmatpush1.bf16.msra.mxu0 0
    %2113 = vmatprep.subr.bf16.mxu0 0
    %2114 = vmatpush1.bf16.msra.mxu0 0
    %2115 = vmatprep.subr.bf16.mxu0 0
    %2116 = vmatpush1.bf16.msra.mxu0 0
    %2117 = vmatprep.subr.bf16.mxu0 0
    %2118 = vmatpush1.bf16.msra.mxu0 0
    %2119 = vmatprep.subr.bf16.mxu0 0
    %2120 = vmatpush1.bf16.msra.mxu0 0
    %2121 = vmatprep.subr.bf16.mxu0 0
    %2122 = vmatpush1.bf16.msra.mxu0 0
    %2123 = vmatprep.subr.bf16.mxu0 0
    %2124 = vmatpush1.bf16.msra.mxu0 %v2107
    %2125 = vmatprep.subr.bf16.mxu0 0
    %2126 = vmatpush2.bf16.msra.mxu0 0
    %2127 = vmatprep.subr.bf16.mxu0 0
    %2128 = vmatpush2.bf16.msra.mxu0 0
    %2129 = vmatprep.subr.bf16.mxu0 0
    %2130 = vmatpush2.bf16.msra.mxu0 0
    %2131 = vmatprep.subr.bf16.mxu0 0
    %2132 = vmatpush2.bf16.msra.mxu0 0
    %2133 = vmatprep.subr.bf16.mxu0 0
    %2134 = vmatpush2.bf16.msra.mxu0 0
    %2135 = vmatprep.subr.bf16.mxu0 0
    %2136 = vmatpush2.bf16.msra.mxu0 0
    %2137 = vmatprep.subr.bf16.mxu0 0
    %2138 = vmatpush2.bf16.msra.mxu0 0
    %2139 = vmatprep.subr.bf16.mxu0 0
    %2140 = vmatpush2.bf16.msra.mxu0 0
    %2141 = vmatprep.mubr.bf16.mxu0 0
    %2142 = vmatmul.mubr.bf16.gmra.mxu0 %v2104
    %v2143 = vpop.f32.mrf.mxu0
    %v2144 = vadd.f32 %v2098, %v2143
    %v2145 = vpop.f32.mrf.mxu0
    %v2146 = vpop.f32.mrf.mxu0
    %v2147 = vpop.f32.mrf.mxu0
    %2148 = vdwg.mxu0
    %v2150 = vsel %vm342, %v2038, 0
    %v2153 = vsel %vm346, %v2056, 0
    %2155 = vmatprep.subr.bf16.mxu0 0
    %2156 = vmatpush1.bf16.msra.mxu0 0
    %2157 = vmatprep.subr.bf16.mxu0 0
    %2158 = vmatpush1.bf16.msra.mxu0 0
    %2159 = vmatprep.subr.bf16.mxu0 0
    %2160 = vmatpush1.bf16.msra.mxu0 0
    %2161 = vmatprep.subr.bf16.mxu0 0
    %2162 = vmatpush1.bf16.msra.mxu0 0
    %2163 = vmatprep.subr.bf16.mxu0 0
    %2164 = vmatpush1.bf16.msra.mxu0 0
    %2165 = vmatprep.subr.bf16.mxu0 0
    %2166 = vmatpush1.bf16.msra.mxu0 0
    %2167 = vmatprep.subr.bf16.mxu0 0
    %2168 = vmatpush1.bf16.msra.mxu0 0
    %2169 = vmatprep.subr.bf16.mxu0 0
    %2170 = vmatpush1.bf16.msra.mxu0 %v2153
    %2171 = vmatprep.subr.bf16.mxu0 0
    %2172 = vmatpush2.bf16.msra.mxu0 0
    %2173 = vmatprep.subr.bf16.mxu0 0
    %2174 = vmatpush2.bf16.msra.mxu0 0
    %2175 = vmatprep.subr.bf16.mxu0 0
    %2176 = vmatpush2.bf16.msra.mxu0 0
    %2177 = vmatprep.subr.bf16.mxu0 0
    %2178 = vmatpush2.bf16.msra.mxu0 0
    %2179 = vmatprep.subr.bf16.mxu0 0
    %2180 = vmatpush2.bf16.msra.mxu0 0
    %2181 = vmatprep.subr.bf16.mxu0 0
    %2182 = vmatpush2.bf16.msra.mxu0 0
    %2183 = vmatprep.subr.bf16.mxu0 0
    %2184 = vmatpush2.bf16.msra.mxu0 0
    %2185 = vmatprep.subr.bf16.mxu0 0
    %2186 = vmatpush2.bf16.msra.mxu0 0
    %2187 = vmatprep.mubr.bf16.mxu0 0
    %2188 = vmatmul.mubr.bf16.gmra.mxu0 %v2150
    %v2189 = vpop.f32.mrf.mxu0
    %v2190 = vadd.f32 0.0, %v2189
    %v2191 = vpop.f32.mrf.mxu0
    %v2192 = vpop.f32.mrf.mxu0
    %v2193 = vpop.f32.mrf.mxu0
    %2194 = vdwg.mxu0
    %v2195 = vadd.f32 %v2144, %v2190
    %v2196 = vsel %vm1737, %v2195, 0.0
    %2197 = vadd.xlane.f32.xlu0 %v2196
    %v2198 = vpop.xlane.xlu0 %2197
    %v2199 = vmul.f32 %v2198, 0.0625
    %v2200 = vsub.f32 %v2195, %v2199
    %v2201 = vmul.f32 %v2200, %v2200
    %v2202 = vsel %vm1737, %v2201, 0.0
    %2203 = vadd.xlane.f32.xlu0 %v2202
    %v2204 = vpop.xlane.xlu0 %2203
    %v2205 = vmul.f32 %v2204, 0.0625
    %v2206 = vadd.f32 %v2205, 1e-05
    %v2207 = vrsqrt.pop %v2206
    %v2208 = vmul.f32 %v2207, %v2040
    %2210 = vset.pattern.permute.xlu0 0
    %2211 = vperm.xlu0 %2210, %v2208
    %v2212 = vpop.permute.xlu0 %2211
    %v2214 = vmul.f32 %v2200, %v2212
    %2216 = vset.pattern.permute.xlu0 0
    %2217 = vperm.xlu0 %2216, %v2042
    %v2218 = vpop.permute.xlu0 %2217
    %v2220 = vadd.f32 %v2214, %v2218
    %v2221 = vmax.f32 %v2220, 0.0
    %2223 = vrot.lane.b32.xlu0 %v2221, 8
    %v2224 = vpop.permute.xlu0 %2223
    %2226 = vrot.lane.b32.xlu0 %v2221, 16
    %v2227 = vpop.permute.xlu0 %2226
    %v2229 = vsel %vm342, %v2221, %v2224
    %v2230 = vsel %vm1737, %v2229, %v2224
    %vm2231 = vcmask 195584
    %v2232 = vsel %vm2231, %v2230, %v2227
    %v2233 = vadd.f32 %v2232, %v1497
    %s2234 = scalar_lea.vmem %s2, 84
    %v2235 = vld [vmem:[%s2234] sm:$0xf]
    %s2236 = scalar_lea.vmem %s2, 88
    %v2237 = vld [vmem:[%s2236] sm:$0xf]
    %s2238 = scalar_lea.vmem %s2, 92
    %v2239 = vld [vmem:[%s2238] sm:$0xf]
    %s2240 = scalar_lea.vmem %s3, 64
    %v2241 = vld [vmem:[%s2240] sm:$0xff]
    %s2242 = scalar_lea.vmem %s4, 64
    %v2243 = vld [vmem:[%s2242] sm:$0xff]
    %v2244 = vpack.c.bf16 %v2233, %v2233
    %2246 = vrot.lane.b32.xlu0 %v2244, 1
    %v2247 = vpop.permute.xlu0 %2246
    %v2249 = vsel %vm68, 0, %v2247
    %v2251 = vsel %vm1319, 0, %v2249
    %2252 = vrot.lane.b32.xlu0 %v2244, 127
    %v2253 = vpop.permute.xlu0 %2252
    %v2255 = vsel %vm1324, %v2253, 0
    %v2257 = vsel %vm1330, 0, %v2255
    %v2259 = vsel %vm342, %v2237, 0
    %v2262 = vsel %vm346, %v2244, 0
    %2264 = vmatprep.subr.bf16.mxu0 0
    %2265 = vmatpush1.bf16.msra.mxu0 0
    %2266 = vmatprep.subr.bf16.mxu0 0
    %2267 = vmatpush1.bf16.msra.mxu0 0
    %2268 = vmatprep.subr.bf16.mxu0 0
    %2269 = vmatpush1.bf16.msra.mxu0 0
    %2270 = vmatprep.subr.bf16.mxu0 0
    %2271 = vmatpush1.bf16.msra.mxu0 0
    %2272 = vmatprep.subr.bf16.mxu0 0
    %2273 = vmatpush1.bf16.msra.mxu0 0
    %2274 = vmatprep.subr.bf16.mxu0 0
    %2275 = vmatpush1.bf16.msra.mxu0 0
    %2276 = vmatprep.subr.bf16.mxu0 0
    %2277 = vmatpush1.bf16.msra.mxu0 0
    %2278 = vmatprep.subr.bf16.mxu0 0
    %2279 = vmatpush1.bf16.msra.mxu0 %v2262
    %2280 = vmatprep.subr.bf16.mxu0 0
    %2281 = vmatpush2.bf16.msra.mxu0 0
    %2282 = vmatprep.subr.bf16.mxu0 0
    %2283 = vmatpush2.bf16.msra.mxu0 0
    %2284 = vmatprep.subr.bf16.mxu0 0
    %2285 = vmatpush2.bf16.msra.mxu0 0
    %2286 = vmatprep.subr.bf16.mxu0 0
    %2287 = vmatpush2.bf16.msra.mxu0 0
    %2288 = vmatprep.subr.bf16.mxu0 0
    %2289 = vmatpush2.bf16.msra.mxu0 0
    %2290 = vmatprep.subr.bf16.mxu0 0
    %2291 = vmatpush2.bf16.msra.mxu0 0
    %2292 = vmatprep.subr.bf16.mxu0 0
    %2293 = vmatpush2.bf16.msra.mxu0 0
    %2294 = vmatprep.subr.bf16.mxu0 0
    %2295 = vmatpush2.bf16.msra.mxu0 0
    %2296 = vmatprep.mubr.bf16.mxu0 0
    %2297 = vmatmul.mubr.bf16.gmra.mxu0 %v2259
    %v2298 = vpop.f32.mrf.mxu0
    %v2299 = vadd.f32 0.0, %v2298
    %v2300 = vpop.f32.mrf.mxu0
    %v2301 = vpop.f32.mrf.mxu0
    %v2302 = vpop.f32.mrf.mxu0
    %2303 = vdwg.mxu0
    %v2305 = vsel %vm342, %v2235, 0
    %v2308 = vsel %vm346, %v2251, 0
    %2310 = vmatprep.subr.bf16.mxu0 0
    %2311 = vmatpush1.bf16.msra.mxu0 0
    %2312 = vmatprep.subr.bf16.mxu0 0
    %2313 = vmatpush1.bf16.msra.mxu0 0
    %2314 = vmatprep.subr.bf16.mxu0 0
    %2315 = vmatpush1.bf16.msra.mxu0 0
    %2316 = vmatprep.subr.bf16.mxu0 0
    %2317 = vmatpush1.bf16.msra.mxu0 0
    %2318 = vmatprep.subr.bf16.mxu0 0
    %2319 = vmatpush1.bf16.msra.mxu0 0
    %2320 = vmatprep.subr.bf16.mxu0 0
    %2321 = vmatpush1.bf16.msra.mxu0 0
    %2322 = vmatprep.subr.bf16.mxu0 0
    %2323 = vmatpush1.bf16.msra.mxu0 0
    %2324 = vmatprep.subr.bf16.mxu0 0
    %2325 = vmatpush1.bf16.msra.mxu0 %v2308
    %2326 = vmatprep.subr.bf16.mxu0 0
    %2327 = vmatpush2.bf16.msra.mxu0 0
    %2328 = vmatprep.subr.bf16.mxu0 0
    %2329 = vmatpush2.bf16.msra.mxu0 0
    %2330 = vmatprep.subr.bf16.mxu0 0
    %2331 = vmatpush2.bf16.msra.mxu0 0
    %2332 = vmatprep.subr.bf16.mxu0 0
    %2333 = vmatpush2.bf16.msra.mxu0 0
    %2334 = vmatprep.subr.bf16.mxu0 0
    %2335 = vmatpush2.bf16.msra.mxu0 0
    %2336 = vmatprep.subr.bf16.mxu0 0
    %2337 = vmatpush2.bf16.msra.mxu0 0
    %2338 = vmatprep.subr.bf16.mxu0 0
    %2339 = vmatpush2.bf16.msra.mxu0 0
    %2340 = vmatprep.subr.bf16.mxu0 0
    %2341 = vmatpush2.bf16.msra.mxu0 0
    %2342 = vmatprep.mubr.bf16.mxu0 0
    %2343 = vmatmul.mubr.bf16.gmra.mxu0 %v2305
    %v2344 = vpop.f32.mrf.mxu0
    %v2345 = vadd.f32 %v2299, %v2344
    %v2346 = vpop.f32.mrf.mxu0
    %v2347 = vpop.f32.mrf.mxu0
    %v2348 = vpop.f32.mrf.mxu0
    %2349 = vdwg.mxu0
    %v2351 = vsel %vm342, %v2239, 0
    %v2354 = vsel %vm346, %v2257, 0
    %2356 = vmatprep.subr.bf16.mxu0 0
    %2357 = vmatpush1.bf16.msra.mxu0 0
    %2358 = vmatprep.subr.bf16.mxu0 0
    %2359 = vmatpush1.bf16.msra.mxu0 0
    %2360 = vmatprep.subr.bf16.mxu0 0
    %2361 = vmatpush1.bf16.msra.mxu0 0
    %2362 = vmatprep.subr.bf16.mxu0 0
    %2363 = vmatpush1.bf16.msra.mxu0 0
    %2364 = vmatprep.subr.bf16.mxu0 0
    %2365 = vmatpush1.bf16.msra.mxu0 0
    %2366 = vmatprep.subr.bf16.mxu0 0
    %2367 = vmatpush1.bf16.msra.mxu0 0
    %2368 = vmatprep.subr.bf16.mxu0 0
    %2369 = vmatpush1.bf16.msra.mxu0 0
    %2370 = vmatprep.subr.bf16.mxu0 0
    %2371 = vmatpush1.bf16.msra.mxu0 %v2354
    %2372 = vmatprep.subr.bf16.mxu0 0
    %2373 = vmatpush2.bf16.msra.mxu0 0
    %2374 = vmatprep.subr.bf16.mxu0 0
    %2375 = vmatpush2.bf16.msra.mxu0 0
    %2376 = vmatprep.subr.bf16.mxu0 0
    %2377 = vmatpush2.bf16.msra.mxu0 0
    %2378 = vmatprep.subr.bf16.mxu0 0
    %2379 = vmatpush2.bf16.msra.mxu0 0
    %2380 = vmatprep.subr.bf16.mxu0 0
    %2381 = vmatpush2.bf16.msra.mxu0 0
    %2382 = vmatprep.subr.bf16.mxu0 0
    %2383 = vmatpush2.bf16.msra.mxu0 0
    %2384 = vmatprep.subr.bf16.mxu0 0
    %2385 = vmatpush2.bf16.msra.mxu0 0
    %2386 = vmatprep.subr.bf16.mxu0 0
    %2387 = vmatpush2.bf16.msra.mxu0 0
    %2388 = vmatprep.mubr.bf16.mxu0 0
    %2389 = vmatmul.mubr.bf16.gmra.mxu0 %v2351
    %v2390 = vpop.f32.mrf.mxu0
    %v2391 = vadd.f32 0.0, %v2390
    %v2392 = vpop.f32.mrf.mxu0
    %v2393 = vpop.f32.mrf.mxu0
    %v2394 = vpop.f32.mrf.mxu0
    %2395 = vdwg.mxu0
    %v2396 = vadd.f32 %v2345, %v2391
    %v2397 = vsel %vm1471, %v2396, 0.0
    %2398 = vadd.xlane.f32.xlu0 %v2397
    %v2399 = vpop.xlane.xlu0 %2398
    %v2400 = vmul.f32 %v2399, 0.03125
    %v2401 = vsub.f32 %v2396, %v2400
    %v2402 = vmul.f32 %v2401, %v2401
    %v2403 = vsel %vm1471, %v2402, 0.0
    %2404 = vadd.xlane.f32.xlu0 %v2403
    %v2405 = vpop.xlane.xlu0 %2404
    %v2406 = vmul.f32 %v2405, 0.03125
    %v2407 = vadd.f32 %v2406, 1e-05
    %v2408 = vrsqrt.pop %v2407
    %v2409 = vmul.f32 %v2408, %v2241
    %2411 = vset.pattern.permute.xlu0 0
    %2412 = vperm.xlu0 %2411, %v2409
    %v2413 = vpop.permute.xlu0 %2412
    %v2415 = vmul.f32 %v2401, %v2413
    %2417 = vset.pattern.permute.xlu0 0
    %2418 = vperm.xlu0 %2417, %v2243
    %v2419 = vpop.permute.xlu0 %2418
    %v2421 = vadd.f32 %v2415, %v2419
    %v2422 = vmax.f32 %v2421, 0.0
    %2424 = vrot.lane.b32.xlu0 %v2422, 16
    %v2425 = vpop.permute.xlu0 %2424
    %2427 = vrot.lane.b32.xlu0 %v2422, 32
    %v2428 = vpop.permute.xlu0 %2427
    %v2430 = vsel %vm1737, %v2422, %v2425
    %v2431 = vsel %vm1471, %v2430, %v2425
    %vm2432 = vcmask 392192
    %v2433 = vsel %vm2432, %v2431, %v2428
    %v2434 = vadd.f32 %v2433, %v1215
    %s2435 = scalar_lea.vmem %s2, 96
    %v2436 = vld [vmem:[%s2435] sm:$0xf]
    %s2437 = scalar_lea.vmem %s2, 100
    %v2438 = vld [vmem:[%s2437] sm:$0xf]
    %s2439 = scalar_lea.vmem %s2, 104
    %v2440 = vld [vmem:[%s2439] sm:$0xf]
    %s2441 = scalar_lea.vmem %s3, 72
    %v2442 = vld [vmem:[%s2441] sm:$0xff]
    %s2443 = scalar_lea.vmem %s4, 72
    %v2444 = vld [vmem:[%s2443] sm:$0xff]
    %v2445 = vpack.c.bf16 %v2434, %v2434
    %2447 = vrot.lane.b32.xlu0 %v2445, 1
    %v2448 = vpop.permute.xlu0 %2447
    %v2450 = vsel %vm68, 0, %v2448
    %v2452 = vsel %vm1037, 0, %v2450
    %2453 = vrot.lane.b32.xlu0 %v2445, 127
    %v2454 = vpop.permute.xlu0 %2453
    %v2456 = vsel %vm1042, %v2454, 0
    %v2458 = vsel %vm1048, 0, %v2456
    %v2460 = vsel %vm342, %v2438, 0
    %v2463 = vsel %vm346, %v2445, 0
    %2465 = vmatprep.subr.bf16.mxu0 0
    %2466 = vmatpush1.bf16.msra.mxu0 0
    %2467 = vmatprep.subr.bf16.mxu0 0
    %2468 = vmatpush1.bf16.msra.mxu0 0
    %2469 = vmatprep.subr.bf16.mxu0 0
    %2470 = vmatpush1.bf16.msra.mxu0 0
    %2471 = vmatprep.subr.bf16.mxu0 0
    %2472 = vmatpush1.bf16.msra.mxu0 0
    %2473 = vmatprep.subr.bf16.mxu0 0
    %2474 = vmatpush1.bf16.msra.mxu0 0
    %2475 = vmatprep.subr.bf16.mxu0 0
    %2476 = vmatpush1.bf16.msra.mxu0 0
    %2477 = vmatprep.subr.bf16.mxu0 0
    %2478 = vmatpush1.bf16.msra.mxu0 0
    %2479 = vmatprep.subr.bf16.mxu0 0
    %2480 = vmatpush1.bf16.msra.mxu0 %v2463
    %2481 = vmatprep.subr.bf16.mxu0 0
    %2482 = vmatpush2.bf16.msra.mxu0 0
    %2483 = vmatprep.subr.bf16.mxu0 0
    %2484 = vmatpush2.bf16.msra.mxu0 0
    %2485 = vmatprep.subr.bf16.mxu0 0
    %2486 = vmatpush2.bf16.msra.mxu0 0
    %2487 = vmatprep.subr.bf16.mxu0 0
    %2488 = vmatpush2.bf16.msra.mxu0 0
    %2489 = vmatprep.subr.bf16.mxu0 0
    %2490 = vmatpush2.bf16.msra.mxu0 0
    %2491 = vmatprep.subr.bf16.mxu0 0
    %2492 = vmatpush2.bf16.msra.mxu0 0
    %2493 = vmatprep.subr.bf16.mxu0 0
    %2494 = vmatpush2.bf16.msra.mxu0 0
    %2495 = vmatprep.subr.bf16.mxu0 0
    %2496 = vmatpush2.bf16.msra.mxu0 0
    %2497 = vmatprep.mubr.bf16.mxu0 0
    %2498 = vmatmul.mubr.bf16.gmra.mxu0 %v2460
    %v2499 = vpop.f32.mrf.mxu0
    %v2500 = vadd.f32 0.0, %v2499
    %v2501 = vpop.f32.mrf.mxu0
    %v2502 = vpop.f32.mrf.mxu0
    %v2503 = vpop.f32.mrf.mxu0
    %2504 = vdwg.mxu0
    %v2506 = vsel %vm342, %v2436, 0
    %v2509 = vsel %vm346, %v2452, 0
    %2511 = vmatprep.subr.bf16.mxu0 0
    %2512 = vmatpush1.bf16.msra.mxu0 0
    %2513 = vmatprep.subr.bf16.mxu0 0
    %2514 = vmatpush1.bf16.msra.mxu0 0
    %2515 = vmatprep.subr.bf16.mxu0 0
    %2516 = vmatpush1.bf16.msra.mxu0 0
    %2517 = vmatprep.subr.bf16.mxu0 0
    %2518 = vmatpush1.bf16.msra.mxu0 0
    %2519 = vmatprep.subr.bf16.mxu0 0
    %2520 = vmatpush1.bf16.msra.mxu0 0
    %2521 = vmatprep.subr.bf16.mxu0 0
    %2522 = vmatpush1.bf16.msra.mxu0 0
    %2523 = vmatprep.subr.bf16.mxu0 0
    %2524 = vmatpush1.bf16.msra.mxu0 0
    %2525 = vmatprep.subr.bf16.mxu0 0
    %2526 = vmatpush1.bf16.msra.mxu0 %v2509
    %2527 = vmatprep.subr.bf16.mxu0 0
    %2528 = vmatpush2.bf16.msra.mxu0 0
    %2529 = vmatprep.subr.bf16.mxu0 0
    %2530 = vmatpush2.bf16.msra.mxu0 0
    %2531 = vmatprep.subr.bf16.mxu0 0
    %2532 = vmatpush2.bf16.msra.mxu0 0
    %2533 = vmatprep.subr.bf16.mxu0 0
    %2534 = vmatpush2.bf16.msra.mxu0 0
    %2535 = vmatprep.subr.bf16.mxu0 0
    %2536 = vmatpush2.bf16.msra.mxu0 0
    %2537 = vmatprep.subr.bf16.mxu0 0
    %2538 = vmatpush2.bf16.msra.mxu0 0
    %2539 = vmatprep.subr.bf16.mxu0 0
    %2540 = vmatpush2.bf16.msra.mxu0 0
    %2541 = vmatprep.subr.bf16.mxu0 0
    %2542 = vmatpush2.bf16.msra.mxu0 0
    %2543 = vmatprep.mubr.bf16.mxu0 0
    %2544 = vmatmul.mubr.bf16.gmra.mxu0 %v2506
    %v2545 = vpop.f32.mrf.mxu0
    %v2546 = vadd.f32 %v2500, %v2545
    %v2547 = vpop.f32.mrf.mxu0
    %v2548 = vpop.f32.mrf.mxu0
    %v2549 = vpop.f32.mrf.mxu0
    %2550 = vdwg.mxu0
    %v2552 = vsel %vm342, %v2440, 0
    %v2555 = vsel %vm346, %v2458, 0
    %2557 = vmatprep.subr.bf16.mxu0 0
    %2558 = vmatpush1.bf16.msra.mxu0 0
    %2559 = vmatprep.subr.bf16.mxu0 0
    %2560 = vmatpush1.bf16.msra.mxu0 0
    %2561 = vmatprep.subr.bf16.mxu0 0
    %2562 = vmatpush1.bf16.msra.mxu0 0
    %2563 = vmatprep.subr.bf16.mxu0 0
    %2564 = vmatpush1.bf16.msra.mxu0 0
    %2565 = vmatprep.subr.bf16.mxu0 0
    %2566 = vmatpush1.bf16.msra.mxu0 0
    %2567 = vmatprep.subr.bf16.mxu0 0
    %2568 = vmatpush1.bf16.msra.mxu0 0
    %2569 = vmatprep.subr.bf16.mxu0 0
    %2570 = vmatpush1.bf16.msra.mxu0 0
    %2571 = vmatprep.subr.bf16.mxu0 0
    %2572 = vmatpush1.bf16.msra.mxu0 %v2555
    %2573 = vmatprep.subr.bf16.mxu0 0
    %2574 = vmatpush2.bf16.msra.mxu0 0
    %2575 = vmatprep.subr.bf16.mxu0 0
    %2576 = vmatpush2.bf16.msra.mxu0 0
    %2577 = vmatprep.subr.bf16.mxu0 0
    %2578 = vmatpush2.bf16.msra.mxu0 0
    %2579 = vmatprep.subr.bf16.mxu0 0
    %2580 = vmatpush2.bf16.msra.mxu0 0
    %2581 = vmatprep.subr.bf16.mxu0 0
    %2582 = vmatpush2.bf16.msra.mxu0 0
    %2583 = vmatprep.subr.bf16.mxu0 0
    %2584 = vmatpush2.bf16.msra.mxu0 0
    %2585 = vmatprep.subr.bf16.mxu0 0
    %2586 = vmatpush2.bf16.msra.mxu0 0
    %2587 = vmatprep.subr.bf16.mxu0 0
    %2588 = vmatpush2.bf16.msra.mxu0 0
    %2589 = vmatprep.mubr.bf16.mxu0 0
    %2590 = vmatmul.mubr.bf16.gmra.mxu0 %v2552
    %v2591 = vpop.f32.mrf.mxu0
    %v2592 = vadd.f32 0.0, %v2591
    %v2593 = vpop.f32.mrf.mxu0
    %v2594 = vpop.f32.mrf.mxu0
    %v2595 = vpop.f32.mrf.mxu0
    %2596 = vdwg.mxu0
    %v2597 = vadd.f32 %v2546, %v2592
    %v2598 = vsel %vm1189, %v2597, 0.0
    %2599 = vadd.xlane.f32.xlu0 %v2598
    %v2600 = vpop.xlane.xlu0 %2599
    %v2601 = vmul.f32 %v2600, 0.015625
    %v2602 = vsub.f32 %v2597, %v2601
    %v2603 = vmul.f32 %v2602, %v2602
    %v2604 = vsel %vm1189, %v2603, 0.0
    %2605 = vadd.xlane.f32.xlu0 %v2604
    %v2606 = vpop.xlane.xlu0 %2605
    %v2607 = vmul.f32 %v2606, 0.015625
    %v2608 = vadd.f32 %v2607, 1e-05
    %v2609 = vrsqrt.pop %v2608
    %v2610 = vmul.f32 %v2609, %v2442
    %2612 = vset.pattern.permute.xlu0 0
    %2613 = vperm.xlu0 %2612, %v2610
    %v2614 = vpop.permute.xlu0 %2613
    %v2616 = vmul.f32 %v2602, %v2614
    %2618 = vset.pattern.permute.xlu0 0
    %2619 = vperm.xlu0 %2618, %v2444
    %v2620 = vpop.permute.xlu0 %2619
    %v2622 = vadd.f32 %v2616, %v2620
    %v2623 = vmax.f32 %v2622, 0.0
    %2625 = vrot.lane.b32.xlu0 %v2623, 32
    %v2626 = vpop.permute.xlu0 %2625
    %2628 = vrot.lane.b32.xlu0 %v2623, 64
    %v2629 = vpop.permute.xlu0 %2628
    %v2631 = vsel %vm1471, %v2623, %v2626
    %v2632 = vsel %vm1189, %v2631, %v2626
    %vm2633 = vcmask 785408
    %v2634 = vsel %vm2633, %v2632, %v2629
    %v2635 = vadd.f32 %v2634, %v904
    %s2636 = scalar_lea.vmem %s2, 108
    %v2637 = vld [vmem:[%s2636] sm:$0xf]
    %s2638 = scalar_lea.vmem %s2, 112
    %v2639 = vld [vmem:[%s2638] sm:$0xf]
    %s2640 = scalar_lea.vmem %s2, 116
    %v2641 = vld [vmem:[%s2640] sm:$0xf]
    %s2642 = scalar_lea.vmem %s3, 80
    %v2643 = vld [vmem:[%s2642] sm:$0xff]
    %s2644 = scalar_lea.vmem %s4, 80
    %v2645 = vld [vmem:[%s2644] sm:$0xff]
    %v2646 = vpack.c.bf16 %v2635, %v2635
    %2648 = vrot.lane.b32.xlu0 %v2646, 1
    %v2649 = vpop.permute.xlu0 %2648
    %v2651 = vsel %vm68, 0, %v2649
    %v2653 = vsel %vm730, 0, %v2651
    %2654 = vrot.lane.b32.xlu0 %v2646, 127
    %v2655 = vpop.permute.xlu0 %2654
    %v2657 = vsel %vm100, %v2655, 0
    %v2659 = vsel %vm740, 0, %v2657
    %v2661 = vsel %vm342, %v2639, 0
    %v2664 = vsel %vm346, %v2646, 0
    %2666 = vmatprep.subr.bf16.mxu0 0
    %2667 = vmatpush1.bf16.msra.mxu0 0
    %2668 = vmatprep.subr.bf16.mxu0 0
    %2669 = vmatpush1.bf16.msra.mxu0 0
    %2670 = vmatprep.subr.bf16.mxu0 0
    %2671 = vmatpush1.bf16.msra.mxu0 0
    %2672 = vmatprep.subr.bf16.mxu0 0
    %2673 = vmatpush1.bf16.msra.mxu0 0
    %2674 = vmatprep.subr.bf16.mxu0 0
    %2675 = vmatpush1.bf16.msra.mxu0 0
    %2676 = vmatprep.subr.bf16.mxu0 0
    %2677 = vmatpush1.bf16.msra.mxu0 0
    %2678 = vmatprep.subr.bf16.mxu0 0
    %2679 = vmatpush1.bf16.msra.mxu0 0
    %2680 = vmatprep.subr.bf16.mxu0 0
    %2681 = vmatpush1.bf16.msra.mxu0 %v2664
    %2682 = vmatprep.subr.bf16.mxu0 0
    %2683 = vmatpush2.bf16.msra.mxu0 0
    %2684 = vmatprep.subr.bf16.mxu0 0
    %2685 = vmatpush2.bf16.msra.mxu0 0
    %2686 = vmatprep.subr.bf16.mxu0 0
    %2687 = vmatpush2.bf16.msra.mxu0 0
    %2688 = vmatprep.subr.bf16.mxu0 0
    %2689 = vmatpush2.bf16.msra.mxu0 0
    %2690 = vmatprep.subr.bf16.mxu0 0
    %2691 = vmatpush2.bf16.msra.mxu0 0
    %2692 = vmatprep.subr.bf16.mxu0 0
    %2693 = vmatpush2.bf16.msra.mxu0 0
    %2694 = vmatprep.subr.bf16.mxu0 0
    %2695 = vmatpush2.bf16.msra.mxu0 0
    %2696 = vmatprep.subr.bf16.mxu0 0
    %2697 = vmatpush2.bf16.msra.mxu0 0
    %2698 = vmatprep.mubr.bf16.mxu0 0
    %2699 = vmatmul.mubr.bf16.gmra.mxu0 %v2661
    %v2700 = vpop.f32.mrf.mxu0
    %v2701 = vadd.f32 0.0, %v2700
    %v2702 = vpop.f32.mrf.mxu0
    %v2703 = vpop.f32.mrf.mxu0
    %v2704 = vpop.f32.mrf.mxu0
    %2705 = vdwg.mxu0
    %v2707 = vsel %vm342, %v2637, 0
    %v2710 = vsel %vm346, %v2653, 0
    %2712 = vmatprep.subr.bf16.mxu0 0
    %2713 = vmatpush1.bf16.msra.mxu0 0
    %2714 = vmatprep.subr.bf16.mxu0 0
    %2715 = vmatpush1.bf16.msra.mxu0 0
    %2716 = vmatprep.subr.bf16.mxu0 0
    %2717 = vmatpush1.bf16.msra.mxu0 0
    %2718 = vmatprep.subr.bf16.mxu0 0
    %2719 = vmatpush1.bf16.msra.mxu0 0
    %2720 = vmatprep.subr.bf16.mxu0 0
    %2721 = vmatpush1.bf16.msra.mxu0 0
    %2722 = vmatprep.subr.bf16.mxu0 0
    %2723 = vmatpush1.bf16.msra.mxu0 0
    %2724 = vmatprep.subr.bf16.mxu0 0
    %2725 = vmatpush1.bf16.msra.mxu0 0
    %2726 = vmatprep.subr.bf16.mxu0 0
    %2727 = vmatpush1.bf16.msra.mxu0 %v2710
    %2728 = vmatprep.subr.bf16.mxu0 0
    %2729 = vmatpush2.bf16.msra.mxu0 0
    %2730 = vmatprep.subr.bf16.mxu0 0
    %2731 = vmatpush2.bf16.msra.mxu0 0
    %2732 = vmatprep.subr.bf16.mxu0 0
    %2733 = vmatpush2.bf16.msra.mxu0 0
    %2734 = vmatprep.subr.bf16.mxu0 0
    %2735 = vmatpush2.bf16.msra.mxu0 0
    %2736 = vmatprep.subr.bf16.mxu0 0
    %2737 = vmatpush2.bf16.msra.mxu0 0
    %2738 = vmatprep.subr.bf16.mxu0 0
    %2739 = vmatpush2.bf16.msra.mxu0 0
    %2740 = vmatprep.subr.bf16.mxu0 0
    %2741 = vmatpush2.bf16.msra.mxu0 0
    %2742 = vmatprep.subr.bf16.mxu0 0
    %2743 = vmatpush2.bf16.msra.mxu0 0
    %2744 = vmatprep.mubr.bf16.mxu0 0
    %2745 = vmatmul.mubr.bf16.gmra.mxu0 %v2707
    %v2746 = vpop.f32.mrf.mxu0
    %v2747 = vadd.f32 %v2701, %v2746
    %v2748 = vpop.f32.mrf.mxu0
    %v2749 = vpop.f32.mrf.mxu0
    %v2750 = vpop.f32.mrf.mxu0
    %2751 = vdwg.mxu0
    %v2753 = vsel %vm342, %v2641, 0
    %v2756 = vsel %vm346, %v2659, 0
    %2758 = vmatprep.subr.bf16.mxu0 0
    %2759 = vmatpush1.bf16.msra.mxu0 0
    %2760 = vmatprep.subr.bf16.mxu0 0
    %2761 = vmatpush1.bf16.msra.mxu0 0
    %2762 = vmatprep.subr.bf16.mxu0 0
    %2763 = vmatpush1.bf16.msra.mxu0 0
    %2764 = vmatprep.subr.bf16.mxu0 0
    %2765 = vmatpush1.bf16.msra.mxu0 0
    %2766 = vmatprep.subr.bf16.mxu0 0
    %2767 = vmatpush1.bf16.msra.mxu0 0
    %2768 = vmatprep.subr.bf16.mxu0 0
    %2769 = vmatpush1.bf16.msra.mxu0 0
    %2770 = vmatprep.subr.bf16.mxu0 0
    %2771 = vmatpush1.bf16.msra.mxu0 0
    %2772 = vmatprep.subr.bf16.mxu0 0
    %2773 = vmatpush1.bf16.msra.mxu0 %v2756
    %2774 = vmatprep.subr.bf16.mxu0 0
    %2775 = vmatpush2.bf16.msra.mxu0 0
    %2776 = vmatprep.subr.bf16.mxu0 0
    %2777 = vmatpush2.bf16.msra.mxu0 0
    %2778 = vmatprep.subr.bf16.mxu0 0
    %2779 = vmatpush2.bf16.msra.mxu0 0
    %2780 = vmatprep.subr.bf16.mxu0 0
    %2781 = vmatpush2.bf16.msra.mxu0 0
    %2782 = vmatprep.subr.bf16.mxu0 0
    %2783 = vmatpush2.bf16.msra.mxu0 0
    %2784 = vmatprep.subr.bf16.mxu0 0
    %2785 = vmatpush2.bf16.msra.mxu0 0
    %2786 = vmatprep.subr.bf16.mxu0 0
    %2787 = vmatpush2.bf16.msra.mxu0 0
    %2788 = vmatprep.subr.bf16.mxu0 0
    %2789 = vmatpush2.bf16.msra.mxu0 0
    %2790 = vmatprep.mubr.bf16.mxu0 0
    %2791 = vmatmul.mubr.bf16.gmra.mxu0 %v2753
    %v2792 = vpop.f32.mrf.mxu0
    %v2793 = vadd.f32 0.0, %v2792
    %v2794 = vpop.f32.mrf.mxu0
    %v2795 = vpop.f32.mrf.mxu0
    %v2796 = vpop.f32.mrf.mxu0
    %2797 = vdwg.mxu0
    %v2798 = vadd.f32 %v2747, %v2793
    %2799 = vadd.xlane.f32.xlu0 %v2798
    %v2800 = vpop.xlane.xlu0 %2799
    %v2801 = vmul.f32 %v2800, 0.0078125
    %v2802 = vsub.f32 %v2798, %v2801
    %v2803 = vmul.f32 %v2802, %v2802
    %2804 = vadd.xlane.f32.xlu0 %v2803
    %v2805 = vpop.xlane.xlu0 %2804
    %v2806 = vmul.f32 %v2805, 0.0078125
    %v2807 = vadd.f32 %v2806, 1e-05
    %v2808 = vrsqrt.pop %v2807
    %v2809 = vmul.f32 %v2808, %v2643
    %2811 = vset.pattern.permute.xlu0 0
    %2812 = vperm.xlu0 %2811, %v2809
    %v2813 = vpop.permute.xlu0 %2812
    %v2815 = vmul.f32 %v2802, %v2813
    %2817 = vset.pattern.permute.xlu0 0
    %2818 = vperm.xlu0 %2817, %v2645
    %v2819 = vpop.permute.xlu0 %2818
    %v2821 = vadd.f32 %v2815, %v2819
    %v2822 = vmax.f32 %v2821, 0.0
    %2824 = vrot.lane.b32.xlu0 %v2822, 64
    %v2825 = vpop.permute.xlu0 %2824
    %v2827 = vsel %vm1189, %v2822, %v2825
    %v2828 = vsel %vm1189, %v2825, %v2822
    %v2829 = vadd.f32 %v2827, %v525
    %v2830 = vadd.f32 %v2828, %v526
    %s2831 = scalar_lea.vmem %s2, 120
    %v2832 = vld [vmem:[%s2831] sm:$0xf]
    %s2833 = scalar_lea.vmem %s2, 124
    %v2834 = vld [vmem:[%s2833] sm:$0xf]
    %s2835 = scalar_lea.vmem %s2, 128
    %v2836 = vld [vmem:[%s2835] sm:$0xf]
    %s2837 = scalar_lea.vmem %s3, 88
    %v2838 = vld [vmem:[%s2837] sm:$0xff]
    %s2839 = scalar_lea.vmem %s4, 88
    %v2840 = vld [vmem:[%s2839] sm:$0xff]
    %v2841 = vpack.c.bf16 %v2829, %v2829
    %v2842 = vpack.c.bf16 %v2830, %v2830
    %2845 = vrot.lane.b32.xlu0 %v2841, 1
    %v2846 = vpop.permute.xlu0 %2845
    %2847 = vrot.lane.b32.xlu0 %v2842, 1
    %v2848 = vpop.permute.xlu0 %2847
    %v2849 = vsel %vm65, %v2846, %v2848
    %v2852 = vsel %vm68, 0, %v2846
    %v2854 = vsel %vm87, 0, %v2852
    %v2855 = vsel %vm88, 0, %v2849
    %2856 = vrot.lane.b32.xlu0 %v2841, 127
    %v2857 = vpop.permute.xlu0 %2856
    %2858 = vrot.lane.b32.xlu0 %v2842, 127
    %v2859 = vpop.permute.xlu0 %2858
    %v2860 = vsel %vm97, %v2857, %v2859
    %v2863 = vsel %vm100, %v2859, 0
    %v2865 = vsel %vm118, 0, %v2860
    %v2866 = vsel %vm119, 0, %v2863
    %v2868 = vsel %vm342, %v2834, 0
    %v2871 = vsel %vm346, %v2841, 0
    %v2874 = vsel %vm346, %v2842, 0
    %2876 = vmatprep.subr.bf16.mxu0 0
    %2877 = vmatpush1.bf16.msra.mxu0 0
    %2878 = vmatprep.subr.bf16.mxu0 0
    %2879 = vmatpush1.bf16.msra.mxu0 0
    %2880 = vmatprep.subr.bf16.mxu0 0
    %2881 = vmatpush1.bf16.msra.mxu0 0
    %2882 = vmatprep.subr.bf16.mxu0 0
    %2883 = vmatpush1.bf16.msra.mxu0 0
    %2884 = vmatprep.subr.bf16.mxu0 0
    %2885 = vmatpush1.bf16.msra.mxu0 0
    %2886 = vmatprep.subr.bf16.mxu0 0
    %2887 = vmatpush1.bf16.msra.mxu0 0
    %2888 = vmatprep.subr.bf16.mxu0 0
    %2889 = vmatpush1.bf16.msra.mxu0 0
    %2890 = vmatprep.subr.bf16.mxu0 %v2874
    %2891 = vmatpush1.bf16.msra.mxu0 %v2871
    %2892 = vmatprep.subr.bf16.mxu0 0
    %2893 = vmatpush2.bf16.msra.mxu0 0
    %2894 = vmatprep.subr.bf16.mxu0 0
    %2895 = vmatpush2.bf16.msra.mxu0 0
    %2896 = vmatprep.subr.bf16.mxu0 0
    %2897 = vmatpush2.bf16.msra.mxu0 0
    %2898 = vmatprep.subr.bf16.mxu0 0
    %2899 = vmatpush2.bf16.msra.mxu0 0
    %2900 = vmatprep.subr.bf16.mxu0 0
    %2901 = vmatpush2.bf16.msra.mxu0 0
    %2902 = vmatprep.subr.bf16.mxu0 0
    %2903 = vmatpush2.bf16.msra.mxu0 0
    %2904 = vmatprep.subr.bf16.mxu0 0
    %2905 = vmatpush2.bf16.msra.mxu0 0
    %2906 = vmatprep.subr.bf16.mxu0 0
    %2907 = vmatpush2.bf16.msra.mxu0 0
    %2908 = vmatprep.mubr.bf16.mxu0 0
    %2909 = vmatmul.mubr.bf16.gmra.mxu0 %v2868
    %v2910 = vpop.f32.mrf.mxu0
    %v2911 = vadd.f32 0.0, %v2910
    %v2912 = vpop.f32.mrf.mxu0
    %v2913 = vadd.f32 0.0, %v2912
    %v2914 = vpop.f32.mrf.mxu0
    %v2915 = vpop.f32.mrf.mxu0
    %2916 = vdwg.mxu0
    %v2918 = vsel %vm342, %v2832, 0
    %v2921 = vsel %vm346, %v2854, 0
    %v2924 = vsel %vm346, %v2855, 0
    %2926 = vmatprep.subr.bf16.mxu0 0
    %2927 = vmatpush1.bf16.msra.mxu0 0
    %2928 = vmatprep.subr.bf16.mxu0 0
    %2929 = vmatpush1.bf16.msra.mxu0 0
    %2930 = vmatprep.subr.bf16.mxu0 0
    %2931 = vmatpush1.bf16.msra.mxu0 0
    %2932 = vmatprep.subr.bf16.mxu0 0
    %2933 = vmatpush1.bf16.msra.mxu0 0
    %2934 = vmatprep.subr.bf16.mxu0 0
    %2935 = vmatpush1.bf16.msra.mxu0 0
    %2936 = vmatprep.subr.bf16.mxu0 0
    %2937 = vmatpush1.bf16.msra.mxu0 0
    %2938 = vmatprep.subr.bf16.mxu0 0
    %2939 = vmatpush1.bf16.msra.mxu0 0
    %2940 = vmatprep.subr.bf16.mxu0 %v2924
    %2941 = vmatpush1.bf16.msra.mxu0 %v2921
    %2942 = vmatprep.subr.bf16.mxu0 0
    %2943 = vmatpush2.bf16.msra.mxu0 0
    %2944 = vmatprep.subr.bf16.mxu0 0
    %2945 = vmatpush2.bf16.msra.mxu0 0
    %2946 = vmatprep.subr.bf16.mxu0 0
    %2947 = vmatpush2.bf16.msra.mxu0 0
    %2948 = vmatprep.subr.bf16.mxu0 0
    %2949 = vmatpush2.bf16.msra.mxu0 0
    %2950 = vmatprep.subr.bf16.mxu0 0
    %2951 = vmatpush2.bf16.msra.mxu0 0
    %2952 = vmatprep.subr.bf16.mxu0 0
    %2953 = vmatpush2.bf16.msra.mxu0 0
    %2954 = vmatprep.subr.bf16.mxu0 0
    %2955 = vmatpush2.bf16.msra.mxu0 0
    %2956 = vmatprep.subr.bf16.mxu0 0
    %2957 = vmatpush2.bf16.msra.mxu0 0
    %2958 = vmatprep.mubr.bf16.mxu0 0
    %2959 = vmatmul.mubr.bf16.gmra.mxu0 %v2918
    %v2960 = vpop.f32.mrf.mxu0
    %v2961 = vadd.f32 %v2911, %v2960
    %v2962 = vpop.f32.mrf.mxu0
    %v2963 = vadd.f32 %v2913, %v2962
    %v2964 = vpop.f32.mrf.mxu0
    %v2965 = vpop.f32.mrf.mxu0
    %2966 = vdwg.mxu0
    %v2968 = vsel %vm342, %v2836, 0
    %v2971 = vsel %vm346, %v2865, 0
    %v2974 = vsel %vm346, %v2866, 0
    %2976 = vmatprep.subr.bf16.mxu0 0
    %2977 = vmatpush1.bf16.msra.mxu0 0
    %2978 = vmatprep.subr.bf16.mxu0 0
    %2979 = vmatpush1.bf16.msra.mxu0 0
    %2980 = vmatprep.subr.bf16.mxu0 0
    %2981 = vmatpush1.bf16.msra.mxu0 0
    %2982 = vmatprep.subr.bf16.mxu0 0
    %2983 = vmatpush1.bf16.msra.mxu0 0
    %2984 = vmatprep.subr.bf16.mxu0 0
    %2985 = vmatpush1.bf16.msra.mxu0 0
    %2986 = vmatprep.subr.bf16.mxu0 0
    %2987 = vmatpush1.bf16.msra.mxu0 0
    %2988 = vmatprep.subr.bf16.mxu0 0
    %2989 = vmatpush1.bf16.msra.mxu0 0
    %2990 = vmatprep.subr.bf16.mxu0 %v2974
    %2991 = vmatpush1.bf16.msra.mxu0 %v2971
    %2992 = vmatprep.subr.bf16.mxu0 0
    %2993 = vmatpush2.bf16.msra.mxu0 0
    %2994 = vmatprep.subr.bf16.mxu0 0
    %2995 = vmatpush2.bf16.msra.mxu0 0
    %2996 = vmatprep.subr.bf16.mxu0 0
    %2997 = vmatpush2.bf16.msra.mxu0 0
    %2998 = vmatprep.subr.bf16.mxu0 0
    %2999 = vmatpush2.bf16.msra.mxu0 0
    %3000 = vmatprep.subr.bf16.mxu0 0
    %3001 = vmatpush2.bf16.msra.mxu0 0
    %3002 = vmatprep.subr.bf16.mxu0 0
    %3003 = vmatpush2.bf16.msra.mxu0 0
    %3004 = vmatprep.subr.bf16.mxu0 0
    %3005 = vmatpush2.bf16.msra.mxu0 0
    %3006 = vmatprep.subr.bf16.mxu0 0
    %3007 = vmatpush2.bf16.msra.mxu0 0
    %3008 = vmatprep.mubr.bf16.mxu0 0
    %3009 = vmatmul.mubr.bf16.gmra.mxu0 %v2968
    %v3010 = vpop.f32.mrf.mxu0
    %v3011 = vadd.f32 0.0, %v3010
    %v3012 = vpop.f32.mrf.mxu0
    %v3013 = vadd.f32 0.0, %v3012
    %v3014 = vpop.f32.mrf.mxu0
    %v3015 = vpop.f32.mrf.mxu0
    %3016 = vdwg.mxu0
    %v3017 = vadd.f32 %v2961, %v3011
    %v3018 = vadd.f32 %v2963, %v3013
    %v3019 = vadd.f32 %v3017, %v3018
    %3020 = vadd.xlane.f32.xlu0 %v3019
    %v3021 = vpop.xlane.xlu0 %3020
    %v3022 = vmul.f32 %v3021, 0.00390625
    %v3023 = vsub.f32 %v3017, %v3022
    %v3024 = vsub.f32 %v3018, %v3022
    %v3025 = vmul.f32 %v3023, %v3023
    %v3026 = vmul.f32 %v3024, %v3024
    %v3027 = vadd.f32 %v3025, %v3026
    %3028 = vadd.xlane.f32.xlu0 %v3027
    %v3029 = vpop.xlane.xlu0 %3028
    %v3030 = vmul.f32 %v3029, 0.00390625
    %v3031 = vadd.f32 %v3030, 1e-05
    %v3032 = vrsqrt.pop %v3031
    %v3033 = vmul.f32 %v3032, %v2838
    %3035 = vset.pattern.permute.xlu0 0
    %3036 = vperm.xlu0 %3035, %v3033
    %v3037 = vpop.permute.xlu0 %3036
    %v3039 = vmul.f32 %v3023, %v3037
    %v3040 = vmul.f32 %v3024, %v3037
    %3042 = vset.pattern.permute.xlu0 0
    %3043 = vperm.xlu0 %3042, %v2840
    %v3044 = vpop.permute.xlu0 %3043
    %v3046 = vadd.f32 %v3039, %v3044
    %v3047 = vadd.f32 %v3040, %v3044
    %v3048 = vmax.f32 %v3046, 0.0
    %v3049 = vmax.f32 %v3047, 0.0
    %3050 = vst [vmem:[#allocation2] sm:$0xff] %v3048
    %3051 = vst [vmem:[#allocation2 + $0x8] sm:$0xff] %v3049
    // Predicated region
    $region42: #{tpu_custom_call.1} parent=1 // pred_check
      _
    $region43: #{tpu_custom_call.1} parent=1 // pred_check_branch
      %3053 = sbr.rel (0) target = $region45
    $region44: #{tpu_custom_call.1} parent=1 // pred_region
      %s3055 = ssub.s32 256, 256
      %3056 = vsyncadd [#allocation3], %s3055
      %s3058 = sshll.u32 [#allocation2], 4
      %s3059 = int_to_ptr.vmem [resolvable:$true] %s3058
      %3061 = dma.vmem_to_hbm [thread:$0]  %s3059, 256, %s10, [#allocation3]
    $region45: #{tpu_custom_call.1} parent=1 // pred_fallthru
      _
    // Predicated region
    $region46: #{tpu_custom_call.1} parent=1 // pred_check
      _
    $region47: #{tpu_custom_call.1} parent=1 // pred_check_branch
      %3063 = sbr.rel (0) target = $region49
    $region48: #{tpu_custom_call.1} parent=1 // pred_region
      %3064 = dma.done [#allocation3], 256
    $region49: #{tpu_custom_call.1} parent=1 // pred_fallthru
      _
    %3065 = vsyncpa [#allocation3], 1

</llo_original>
